<compile_context>
chip_gen: v7x
topology: tpu7x:2x2x1
jax: 0.10.0
libtpu: 0.0.40
codegen_flags: <defaults>
</compile_context>

<pallas_src>
import functools

import numpy as np
import jax
import jax.numpy as jnp
from jax.experimental import pallas as pl
from jax.experimental.pallas import tpu as pltpu


# ------------------------------ Pallas kernel ------------------------------

def fused_conv_bn_act_kernel(*refs, has_res):
    """One fused 3x3x3-conv tile in transposed (lane-dense) layout.

    wT_ref    : (Cout, 27*Cin)  bf16   conv weights, all 27 taps in the K dim
    scale_ref : (Cout, 1)       f32    gamma / sqrt(var + eps)   (0 on pad channels)
    bias_ref  : (Cout, 1)       f32    beta - mean * scale       (0 on pad channels)
    slab_ref  : (27*Cin, Rt)    bf16   im2col slab tile (output rows on lanes)
    res_ref   : (Cout, Rt)      f32    optional residual tile
    o_ref     : (Cout, Rt)      f32    relu(scale * conv + bias [+ res])
    """
    if has_res:
        wT_ref, scale_ref, bias_ref, slab_ref, res_ref, o_ref = refs
    else:
        wT_ref, scale_ref, bias_ref, slab_ref, o_ref = refs
        res_ref = None
    acc = jnp.dot(wT_ref[...], slab_ref[...], preferred_element_type=jnp.float32)
    y = acc * scale_ref[...] + bias_ref[...]
    if res_ref is not None:
        y = y + res_ref[...]
    o_ref[...] = jnp.maximum(y, 0.0).astype(o_ref.dtype)


# ------------------------------ kernel wrapper ------------------------------

def _round_up(v, m):
    return -(-v // m) * m


def conv3x3x3_bn_act(act, w_t, scale, bias, *, stride, residual=None):
    """act: (Cin_p, N, D, H, W) f32;  w_t: (Cout_p, 27*Cin_p) bf16.

    Returns relu(scale * conv3x3x3(act, stride, pad=1) + bias [+ residual]) with
    shape (Cout_p, N, Do, Ho, Wo) f32.
    """
    cin_p, n, d, h, w = act.shape
    cout_p, k = w_t.shape
    do = (d - 1) // stride + 1
    ho = (h - 1) // stride + 1
    wo = (w - 1) // stride + 1
    r = n * do * ho * wo
    r_pad = _round_up(r, 128)

    # --- im2col: 27 strided shifted views stacked along the contraction axis.
    # Stride and halo handling happen here -> no discarded output rows in the kernel.
    xp = jnp.pad(act, ((0, 0), (0, 0), (1, 1), (1, 1), (1, 1)))
    cols = []
    for kd in range(3):
        for kh in range(3):
            for kw in range(3):
                sl = xp[:, :,
                        kd:kd + (do - 1) * stride + 1:stride,
                        kh:kh + (ho - 1) * stride + 1:stride,
                        kw:kw + (wo - 1) * stride + 1:stride]
                cols.append(sl.reshape(cin_p, r))
    slab = jnp.concatenate(cols, axis=0).astype(jnp.bfloat16)      # (27*Cin_p, R)
    if r_pad != r:
        slab = jnp.pad(slab, ((0, 0), (0, r_pad - r)))

    # Lane tile: biggest tile (<=512 output rows) dividing R_pad.
    r_tile = next(t for t in (512, 256, 128) if r_pad % t == 0)
    grid = (r_pad // r_tile,)

    args = [w_t, scale, bias, slab]
    in_specs = [
        pl.BlockSpec((cout_p, k), lambda i: (0, 0)),   # weights: resident across grid
        pl.BlockSpec((cout_p, 1), lambda i: (0, 0)),
        pl.BlockSpec((cout_p, 1), lambda i: (0, 0)),
        pl.BlockSpec((k, r_tile), lambda i: (0, i)),
    ]
    if residual is not None:
        res2 = residual.reshape(cout_p, r)
        if r_pad != r:
            res2 = jnp.pad(res2, ((0, 0), (0, r_pad - r)))
        args.append(res2)
        in_specs.append(pl.BlockSpec((cout_p, r_tile), lambda i: (0, i)))

    bytes_acc = (w_t.size * 2 + slab.size * 2 + 2 * cout_p * 4
                 + cout_p * r_pad * 4 * (2 if residual is not None else 1))
    out = pl.pallas_call(
        functools.partial(fused_conv_bn_act_kernel, has_res=residual is not None),
        out_shape=jax.ShapeDtypeStruct((cout_p, r_pad), jnp.float32),
        grid=grid,
        in_specs=in_specs,
        out_specs=pl.BlockSpec((cout_p, r_tile), lambda i: (0, i)),
        compiler_params=pltpu.CompilerParams(dimension_semantics=("parallel",)),
        cost_estimate=pl.CostEstimate(flops=2 * cout_p * k * r_pad,
                                      transcendentals=0,
                                      bytes_accessed=int(bytes_acc)),
    )(*args)
    return out[:, :r].reshape(cout_p, n, do, ho, wo)


# ------------------------------ model (glue) ------------------------------

def basic_block(act, p, stride):
    cin_p = act.shape[0]
    cout_p = p['w1t'].shape[0]
    # conv1 (stride s) -> bn1 -> relu
    mid = conv3x3x3_bn_act(act, p['w1t'], p['scale1'], p['bias1'], stride=stride)
    # residual: avg_pool3d(kernel=1, stride=s) == subsample, then zero-pad channels
    res = act[:, :, ::stride, ::stride, ::stride]
    if cin_p < cout_p:
        res = jnp.pad(res, ((0, cout_p - cin_p),) + ((0, 0),) * 4)
    # conv2 (stride 1) -> bn2 -> (+res) -> relu, all fused into conv2's epilogue
    return conv3x3x3_bn_act(mid, p['w2t'], p['scale2'], p['bias2'], stride=1,
                            residual=res)


def adaptive_avg_pool3d(x, out_sz):
    n, d, h, w, c = x.shape

    def se(i, insz, outsz):
        return (i * insz) // outsz, -(-((i + 1) * insz) // outsz)

    od, oh, ow = out_sz
    dplanes = []
    for i in range(od):
        d0, d1 = se(i, d, od)
        hplanes = []
        for j in range(oh):
            h0, h1 = se(j, h, oh)
            wcells = []
            for kk in range(ow):
                w0, w1 = se(kk, w, ow)
                wcells.append(jnp.mean(x[:, d0:d1, h0:h1, w0:w1, :], axis=(1, 2, 3)))
            hplanes.append(jnp.stack(wcells, axis=1))
        dplanes.append(jnp.stack(hplanes, axis=1))
    return jnp.stack(dplanes, axis=1)                               # (N, od, oh, ow, C)


def residual_past_forward(x_ncdhw, params):
    # NCDHW -> channels-major (C, N, D, H, W); zero-pad channels to padded Cin.
    x = jnp.transpose(x_ncdhw, (1, 0, 2, 3, 4))
    cin_p = params['blocks'][0]['w1t'].shape[1] // 27
    act = jnp.pad(x, ((0, cin_p - x.shape[0]),) + ((0, 0),) * 4)
    for p, s in zip(params['blocks'], params['strides']):
        act = basic_block(act, p, s)
    # back to NDHWC, drop channel padding
    feat = jnp.transpose(act, (1, 2, 3, 4, 0))[..., :params['c_final']]
    pooled = adaptive_avg_pool3d(feat, (2, 2, 2))                   # (N, 2, 2, 2, C)
    # flatten in PyTorch (C, D, H, W) order to match x.view(N, -1) on NCDHW
    flat = jnp.transpose(pooled, (0, 4, 1, 2, 3)).reshape(pooled.shape[0], -1)
    # tiny (N, 256) @ (256, 1) GEMV: left to XLA (a pallas_call costs more than it saves)
    return flat @ params['fc_w'] + params['fc_b']


# ------------------------------ parameters ------------------------------

def rup8(c):
    return max(8, ((c + 7) // 8) * 8)


def make_params(key, layers=(4, 8, 16, 32)):
    chans = [(1, layers[0]), (layers[0], layers[0]),
             (layers[0], layers[1]), (layers[1], layers[1]),
             (layers[1], layers[2]), (layers[2], layers[2]),
             (layers[2], layers[3]), (layers[3], layers[3])]
    strides = [1, 2, 1, 2, 1, 2, 1, 2]
    eps = 1e-5
    blocks, blocks_ref = [], []

    def bn_fold(k, c):
        ka, kb, kc, kd = jax.random.split(k, 4)
        gamma = 1.0 + 0.1 * jax.random.normal(ka, (c,), jnp.float32)
        beta = 0.1 * jax.random.normal(kb, (c,), jnp.float32)
        mean = 0.1 * jax.random.normal(kc, (c,), jnp.float32)
        var = 1.0 + 0.5 * jax.random.uniform(kd, (c,), jnp.float32)
        scale = gamma / jnp.sqrt(var + eps)
        return scale, beta - mean * scale

    def pack_w(w, cin, cout, cin_p, cout_p):
        wp = jnp.pad(w, ((0, 0),) * 3 + ((0, cin_p - cin), (0, cout_p - cout)))
        # (3,3,3,Cin_p,Cout_p) -> (Cout_p, 27*Cin_p); row order (kd,kh,kw,ci) matches im2col
        return wp.reshape(27 * cin_p, cout_p).T.astype(jnp.bfloat16)

    for cin, planes in chans:
        key, k1, k2, k3, k4 = jax.random.split(key, 5)
        w1 = jax.random.normal(k1, (3, 3, 3, cin, planes), jnp.float32) * np.sqrt(2.0 / (27 * cin))
        w2 = jax.random.normal(k2, (3, 3, 3, planes, planes), jnp.float32) * np.sqrt(2.0 / (27 * planes))
        s1, b1 = bn_fold(k3, planes)
        s2, b2 = bn_fold(k4, planes)
        cin_p, cout_p = rup8(cin), rup8(planes)
        pad_c = (0, cout_p - planes)
        blocks.append(dict(
            w1t=pack_w(w1, cin, planes, cin_p, cout_p),
            w2t=pack_w(w2, planes, planes, cout_p, cout_p),
            scale1=jnp.pad(s1, pad_c).reshape(cout_p, 1),
            bias1=jnp.pad(b1, pad_c).reshape(cout_p, 1),
            scale2=jnp.pad(s2, pad_c).reshape(cout_p, 1),
            bias2=jnp.pad(b2, pad_c).reshape(cout_p, 1),
        ))
        blocks_ref.append(dict(w1=w1, w2=w2, scale1=s1, bias1=b1, scale2=s2, bias2=b2,
                               cin=cin, planes=planes))

    key, kw, kb = jax.random.split(key, 3)
    feat = layers[-1] * 8
    fc_w = jax.random.normal(kw, (feat, 1), jnp.float32) / np.sqrt(feat)
    fc_b = 0.1 * jax.random.normal(kb, (1,), jnp.float32)

    params = dict(blocks=blocks, strides=strides, c_final=layers[-1], fc_w=fc_w, fc_b=fc_b)
    ref = dict(blocks=blocks_ref, strides=strides, fc_w=fc_w, fc_b=fc_b)
    return params, ref


# ------------------------------ pure-JAX reference ------------------------------

def _ref_conv(x, w, stride):
    # mirror the kernel's bf16 rounding of conv inputs/weights (f32 accumulation)
    xb = x.astype(jnp.bfloat16).astype(jnp.float32)
    wb = w.astype(jnp.bfloat16).astype(jnp.float32)
    return jax.lax.conv_general_dilated(
        xb, wb, window_strides=(stride,) * 3, padding=[(1, 1)] * 3,
        dimension_numbers=('NDHWC', 'DHWIO', 'NDHWC'))


def _ref_block(x, p, stride):
    out = _ref_conv(x, p['w1'], stride) * p['scale1'] + p['bias1']
    out = jnp.maximum(out, 0.0)
    out = _ref_conv(out, p['w2'], 1) * p['scale2'] + p['bias2']
    res = x[:, ::stride, ::stride, ::stride, :]
    res = jnp.pad(res, ((0, 0),) * 4 + ((0, p['planes'] - p['cin']),))
    return jnp.maximum(out + res, 0.0)


def _ref_forward(x_ncdhw, ref):
    x = jnp.transpose(x_ncdhw, (0, 2, 3, 4, 1))
    for p, s in zip(ref['blocks'], ref['strides']):
        x = _ref_block(x, p, s)
    x = adaptive_avg_pool3d(x, (2, 2, 2))
    x = jnp.transpose(x, (0, 4, 1, 2, 3)).reshape(x.shape[0], -1)
    return x @ ref['fc_w'] + ref['fc_b']


# ------------------------------ main ------------------------------

if __name__ == "__main__":
    key = jax.random.PRNGKey(0)
    kx, kp = jax.random.split(key)

    # PyTorch-style input: (N, C, D, H, W) single-channel 3-D volume.
    x = jax.random.normal(kx, (2, 1, 8, 8, 8), jnp.float32)
    params, ref = make_params(kp)

    fwd = jax.jit(lambda inp: residual_past_forward(inp, params))
    out = jax.block_until_ready(fwd(x))
    assert out.shape == (2, 1)

    expected = jax.block_until_ready(_ref_forward(x, ref))
    np.testing.assert_allclose(np.asarray(out), np.asarray(expected),
                               rtol=5e-3, atol=5e-3)
    print("KERNEL_OK")
</pallas_src>

<mosaic_0001>
module attributes {stable_mosaic.version = 11 : i64} {
  func.func @fused_conv_bn_act_kernel(%arg0: i32, %arg1: memref<8x216xbf16, #tpu.memory_space<vmem>>, %arg2: memref<8x1xf32, #tpu.memory_space<vmem>>, %arg3: memref<8x1xf32, #tpu.memory_space<vmem>>, %arg4: memref<216x512xbf16, #tpu.memory_space<vmem>>, %arg5: memref<8x512xf32, #tpu.memory_space<vmem>>) attributes {dimension_semantics = [#tpu.dimension_semantics<parallel>], iteration_bounds = array<i64: 2>, scalar_prefetch = 0 : i64, scratch_operands = 0 : i64, tpu.core_type = #tpu.core_type<tc>, window_params = [{pipeline_mode = #tpu.pipeline_mode<synchronous>, transform_indices = @transform_0, window_bounds = array<i64: 8, 216>}, {pipeline_mode = #tpu.pipeline_mode<synchronous>, transform_indices = @transform_1, window_bounds = array<i64: 8, 1>}, {pipeline_mode = #tpu.pipeline_mode<synchronous>, transform_indices = @transform_2, window_bounds = array<i64: 8, 1>}, {transform_indices = @transform_3, window_bounds = array<i64: 216, 512>}, {transform_indices = @transform_4, window_bounds = array<i64: 8, 512>}]} {
    %c0 = arith.constant 0 : index
    %c0_0 = arith.constant 0 : index
    %0 = vector.load %arg1[%c0, %c0_0] : memref<8x216xbf16, #tpu.memory_space<vmem>>, vector<8x216xbf16>
    %c0_1 = arith.constant 0 : index
    %c0_2 = arith.constant 0 : index
    %1 = vector.load %arg4[%c0_1, %c0_2] : memref<216x512xbf16, #tpu.memory_space<vmem>>, vector<216x512xbf16>
    %cst = arith.constant dense<0.000000e+00> : vector<8x512xf32>
    %2 = tpu.matmul %0, %1, %cst {dimension_numbers = #tpu.dot_dimension_numbers<[1], [0], [0], [1], [0, 0, 1, 1], [], []>} : vector<8x216xbf16>, vector<216x512xbf16>, vector<8x512xf32> -> vector<8x512xf32>
    %c0_3 = arith.constant 0 : index
    %c0_4 = arith.constant 0 : index
    %3 = vector.load %arg2[%c0_3, %c0_4] : memref<8x1xf32, #tpu.memory_space<vmem>>, vector<8x1xf32>
    %4 = vector.broadcast %3 : vector<8x1xf32> to vector<8x512xf32>
    %5 = arith.mulf %2, %4 : vector<8x512xf32>
    %c0_5 = arith.constant 0 : index
    %c0_6 = arith.constant 0 : index
    %6 = vector.load %arg3[%c0_5, %c0_6] : memref<8x1xf32, #tpu.memory_space<vmem>>, vector<8x1xf32>
    %7 = vector.broadcast %6 : vector<8x1xf32> to vector<8x512xf32>
    %8 = arith.addf %5, %7 : vector<8x512xf32>
    %cst_7 = arith.constant 0.000000e+00 : f32
    %9 = vector.broadcast %cst_7 : f32 to vector<8x512xf32>
    %10 = arith.maximumf %8, %9 : vector<8x512xf32>
    %c0_8 = arith.constant 0 : index
    %c0_9 = arith.constant 0 : index
    %11 = vector.load %arg5[%c0_8, %c0_9] : memref<8x512xf32, #tpu.memory_space<vmem>>, vector<8x512xf32>
    tpu.vector_store %arg5[%c0_8, %c0_9], %10 {strides = array<i32>} : memref<8x512xf32, #tpu.memory_space<vmem>>, vector<8x512xf32>,
    return
  }
  func.func @transform_0(%arg0: i32) -> (i32, i32) {
    %c0_i32 = arith.constant 0 : i32
    %c0_i32_0 = arith.constant 0 : i32
    %c0_i32_1 = arith.constant 0 : i32
    return %c0_i32, %c0_i32_0 : i32, i32
  }
  func.func @transform_1(%arg0: i32) -> (i32, i32) {
    %c0_i32 = arith.constant 0 : i32
    %c0_i32_0 = arith.constant 0 : i32
    %c0_i32_1 = arith.constant 0 : i32
    return %c0_i32, %c0_i32_0 : i32, i32
  }
  func.func @transform_2(%arg0: i32) -> (i32, i32) {
    %c0_i32 = arith.constant 0 : i32
    %c0_i32_0 = arith.constant 0 : i32
    %c0_i32_1 = arith.constant 0 : i32
    return %c0_i32, %c0_i32_0 : i32, i32
  }
  func.func @transform_3(%arg0: i32) -> (i32, i32) {
    %c0_i32 = arith.constant 0 : i32
    %c0_i32_0 = arith.constant 0 : i32
    return %c0_i32, %arg0 : i32, i32
  }
  func.func @transform_4(%arg0: i32) -> (i32, i32) {
    %c0_i32 = arith.constant 0 : i32
    %c0_i32_0 = arith.constant 0 : i32
    return %c0_i32, %arg0 : i32, i32
  }
}

module attributes {stable_mosaic.version = 11 : i64} {
  func.func @fused_conv_bn_act_kernel(%arg0: i32, %arg1: memref<8x216xbf16, #tpu.memory_space<vmem>>, %arg2: memref<8x1xf32, #tpu.memory_space<vmem>>, %arg3: memref<8x1xf32, #tpu.memory_space<vmem>>, %arg4: memref<216x512xbf16, #tpu.memory_space<vmem>>, %arg5: memref<8x512xf32, #tpu.memory_space<vmem>>, %arg6: memref<8x512xf32, #tpu.memory_space<vmem>>) attributes {dimension_semantics = [#tpu.dimension_semantics<parallel>], iteration_bounds = array<i64: 2>, scalar_prefetch = 0 : i64, scratch_operands = 0 : i64, tpu.core_type = #tpu.core_type<tc>, window_params = [{pipeline_mode = #tpu.pipeline_mode<synchronous>, transform_indices = @transform_0, window_bounds = array<i64: 8, 216>}, {pipeline_mode = #tpu.pipeline_mode<synchronous>, transform_indices = @transform_1, window_bounds = array<i64: 8, 1>}, {pipeline_mode = #tpu.pipeline_mode<synchronous>, transform_indices = @transform_2, window_bounds = array<i64: 8, 1>}, {transform_indices = @transform_3, window_bounds = array<i64: 216, 512>}, {transform_indices = @transform_4, window_bounds = array<i64: 8, 512>}, {transform_indices = @transform_5, window_bounds = array<i64: 8, 512>}]} {
    %c0 = arith.constant 0 : index
    %c0_0 = arith.constant 0 : index
    %0 = vector.load %arg1[%c0, %c0_0] : memref<8x216xbf16, #tpu.memory_space<vmem>>, vector<8x216xbf16>
    %c0_1 = arith.constant 0 : index
    %c0_2 = arith.constant 0 : index
    %1 = vector.load %arg4[%c0_1, %c0_2] : memref<216x512xbf16, #tpu.memory_space<vmem>>, vector<216x512xbf16>
    %cst = arith.constant dense<0.000000e+00> : vector<8x512xf32>
    %2 = tpu.matmul %0, %1, %cst {dimension_numbers = #tpu.dot_dimension_numbers<[1], [0], [0], [1], [0, 0, 1, 1], [], []>} : vector<8x216xbf16>, vector<216x512xbf16>, vector<8x512xf32> -> vector<8x512xf32>
    %c0_3 = arith.constant 0 : index
    %c0_4 = arith.constant 0 : index
    %3 = vector.load %arg2[%c0_3, %c0_4] : memref<8x1xf32, #tpu.memory_space<vmem>>, vector<8x1xf32>
    %4 = vector.broadcast %3 : vector<8x1xf32> to vector<8x512xf32>
    %5 = arith.mulf %2, %4 : vector<8x512xf32>
    %c0_5 = arith.constant 0 : index
    %c0_6 = arith.constant 0 : index
    %6 = vector.load %arg3[%c0_5, %c0_6] : memref<8x1xf32, #tpu.memory_space<vmem>>, vector<8x1xf32>
    %7 = vector.broadcast %6 : vector<8x1xf32> to vector<8x512xf32>
    %8 = arith.addf %5, %7 : vector<8x512xf32>
    %c0_7 = arith.constant 0 : index
    %c0_8 = arith.constant 0 : index
    %9 = vector.load %arg5[%c0_7, %c0_8] : memref<8x512xf32, #tpu.memory_space<vmem>>, vector<8x512xf32>
    %10 = arith.addf %8, %9 : vector<8x512xf32>
    %cst_9 = arith.constant 0.000000e+00 : f32
    %11 = vector.broadcast %cst_9 : f32 to vector<8x512xf32>
    %12 = arith.maximumf %10, %11 : vector<8x512xf32>
    %c0_10 = arith.constant 0 : index
    %c0_11 = arith.constant 0 : index
    %13 = vector.load %arg6[%c0_10, %c0_11] : memref<8x512xf32, #tpu.memory_space<vmem>>, vector<8x512xf32>
    tpu.vector_store %arg6[%c0_10, %c0_11], %12 {strides = array<i32>} : memref<8x512xf32, #tpu.memory_space<vmem>>, vector<8x512xf32>,
    return
  }
  func.func @transform_0(%arg0: i32) -> (i32, i32) {
    %c0_i32 = arith.constant 0 : i32
    %c0_i32_0 = arith.constant 0 : i32
    %c0_i32_1 = arith.constant 0 : i32
    return %c0_i32, %c0_i32_0 : i32, i32
  }
  func.func @transform_1(%arg0: i32) -> (i32, i32) {
    %c0_i32 = arith.constant 0 : i32
    %c0_i32_0 = arith.constant 0 : i32
    %c0_i32_1 = arith.constant 0 : i32
    return %c0_i32, %c0_i32_0 : i32, i32
  }
  func.func @transform_2(%arg0: i32) -> (i32, i32) {
    %c0_i32 = arith.constant 0 : i32
    %c0_i32_0 = arith.constant 0 : i32
    %c0_i32_1 = arith.constant 0 : i32
    return %c0_i32, %c0_i32_0 : i32, i32
  }
  func.func @transform_3(%arg0: i32) -> (i32, i32) {
    %c0_i32 = arith.constant 0 : i32
    %c0_i32_0 = arith.constant 0 : i32
    return %c0_i32, %arg0 : i32, i32
  }
  func.func @transform_4(%arg0: i32) -> (i32, i32) {
    %c0_i32 = arith.constant 0 : i32
    %c0_i32_0 = arith.constant 0 : i32
    return %c0_i32, %arg0 : i32, i32
  }
  func.func @transform_5(%arg0: i32) -> (i32, i32) {
    %c0_i32 = arith.constant 0 : i32
    %c0_i32_0 = arith.constant 0 : i32
    return %c0_i32, %arg0 : i32, i32
  }
}

module attributes {stable_mosaic.version = 11 : i64} {
  func.func @fused_conv_bn_act_kernel(%arg0: i32, %arg1: memref<8x216xbf16, #tpu.memory_space<vmem>>, %arg2: memref<8x1xf32, #tpu.memory_space<vmem>>, %arg3: memref<8x1xf32, #tpu.memory_space<vmem>>, %arg4: memref<216x128xbf16, #tpu.memory_space<vmem>>, %arg5: memref<8x128xf32, #tpu.memory_space<vmem>>) attributes {dimension_semantics = [#tpu.dimension_semantics<parallel>], iteration_bounds = array<i64: 1>, scalar_prefetch = 0 : i64, scratch_operands = 0 : i64, tpu.core_type = #tpu.core_type<tc>, window_params = [{pipeline_mode = #tpu.pipeline_mode<synchronous>, transform_indices = @transform_0, window_bounds = array<i64: 8, 216>}, {pipeline_mode = #tpu.pipeline_mode<synchronous>, transform_indices = @transform_1, window_bounds = array<i64: 8, 1>}, {pipeline_mode = #tpu.pipeline_mode<synchronous>, transform_indices = @transform_2, window_bounds = array<i64: 8, 1>}, {transform_indices = @transform_3, window_bounds = array<i64: 216, 128>}, {transform_indices = @transform_4, window_bounds = array<i64: 8, 128>}]} {
    %c0 = arith.constant 0 : index
    %c0_0 = arith.constant 0 : index
    %0 = vector.load %arg1[%c0, %c0_0] : memref<8x216xbf16, #tpu.memory_space<vmem>>, vector<8x216xbf16>
    %c0_1 = arith.constant 0 : index
    %c0_2 = arith.constant 0 : index
    %1 = vector.load %arg4[%c0_1, %c0_2] : memref<216x128xbf16, #tpu.memory_space<vmem>>, vector<216x128xbf16>
    %cst = arith.constant dense<0.000000e+00> : vector<8x128xf32>
    %2 = tpu.matmul %0, %1, %cst {dimension_numbers = #tpu.dot_dimension_numbers<[1], [0], [0], [1], [0, 0, 1, 1], [], []>} : vector<8x216xbf16>, vector<216x128xbf16>, vector<8x128xf32> -> vector<8x128xf32>
    %c0_3 = arith.constant 0 : index
    %c0_4 = arith.constant 0 : index
    %3 = vector.load %arg2[%c0_3, %c0_4] : memref<8x1xf32, #tpu.memory_space<vmem>>, vector<8x1xf32>
    %4 = vector.broadcast %3 : vector<8x1xf32> to vector<8x128xf32>
    %5 = arith.mulf %2, %4 : vector<8x128xf32>
    %c0_5 = arith.constant 0 : index
    %c0_6 = arith.constant 0 : index
    %6 = vector.load %arg3[%c0_5, %c0_6] : memref<8x1xf32, #tpu.memory_space<vmem>>, vector<8x1xf32>
    %7 = vector.broadcast %6 : vector<8x1xf32> to vector<8x128xf32>
    %8 = arith.addf %5, %7 : vector<8x128xf32>
    %cst_7 = arith.constant 0.000000e+00 : f32
    %9 = vector.broadcast %cst_7 : f32 to vector<8x128xf32>
    %10 = arith.maximumf %8, %9 : vector<8x128xf32>
    %c0_8 = arith.constant 0 : index
    %c0_9 = arith.constant 0 : index
    %11 = vector.load %arg5[%c0_8, %c0_9] : memref<8x128xf32, #tpu.memory_space<vmem>>, vector<8x128xf32>
    tpu.vector_store %arg5[%c0_8, %c0_9], %10 {strides = array<i32>} : memref<8x128xf32, #tpu.memory_space<vmem>>, vector<8x128xf32>,
    return
  }
  func.func @transform_0(%arg0: i32) -> (i32, i32) {
    %c0_i32 = arith.constant 0 : i32
    %c0_i32_0 = arith.constant 0 : i32
    %c0_i32_1 = arith.constant 0 : i32
    return %c0_i32, %c0_i32_0 : i32, i32
  }
  func.func @transform_1(%arg0: i32) -> (i32, i32) {
    %c0_i32 = arith.constant 0 : i32
    %c0_i32_0 = arith.constant 0 : i32
    %c0_i32_1 = arith.constant 0 : i32
    return %c0_i32, %c0_i32_0 : i32, i32
  }
  func.func @transform_2(%arg0: i32) -> (i32, i32) {
    %c0_i32 = arith.constant 0 : i32
    %c0_i32_0 = arith.constant 0 : i32
    %c0_i32_1 = arith.constant 0 : i32
    return %c0_i32, %c0_i32_0 : i32, i32
  }
  func.func @transform_3(%arg0: i32) -> (i32, i32) {
    %c0_i32 = arith.constant 0 : i32
    %c0_i32_0 = arith.constant 0 : i32
    return %c0_i32, %arg0 : i32, i32
  }
  func.func @transform_4(%arg0: i32) -> (i32, i32) {
    %c0_i32 = arith.constant 0 : i32
    %c0_i32_0 = arith.constant 0 : i32
    return %c0_i32, %arg0 : i32, i32
  }
}

module attributes {stable_mosaic.version = 11 : i64} {
  func.func @fused_conv_bn_act_kernel(%arg0: i32, %arg1: memref<8x216xbf16, #tpu.memory_space<vmem>>, %arg2: memref<8x1xf32, #tpu.memory_space<vmem>>, %arg3: memref<8x1xf32, #tpu.memory_space<vmem>>, %arg4: memref<216x128xbf16, #tpu.memory_space<vmem>>, %arg5: memref<8x128xf32, #tpu.memory_space<vmem>>, %arg6: memref<8x128xf32, #tpu.memory_space<vmem>>) attributes {dimension_semantics = [#tpu.dimension_semantics<parallel>], iteration_bounds = array<i64: 1>, scalar_prefetch = 0 : i64, scratch_operands = 0 : i64, tpu.core_type = #tpu.core_type<tc>, window_params = [{pipeline_mode = #tpu.pipeline_mode<synchronous>, transform_indices = @transform_0, window_bounds = array<i64: 8, 216>}, {pipeline_mode = #tpu.pipeline_mode<synchronous>, transform_indices = @transform_1, window_bounds = array<i64: 8, 1>}, {pipeline_mode = #tpu.pipeline_mode<synchronous>, transform_indices = @transform_2, window_bounds = array<i64: 8, 1>}, {transform_indices = @transform_3, window_bounds = array<i64: 216, 128>}, {transform_indices = @transform_4, window_bounds = array<i64: 8, 128>}, {transform_indices = @transform_5, window_bounds = array<i64: 8, 128>}]} {
    %c0 = arith.constant 0 : index
    %c0_0 = arith.constant 0 : index
    %0 = vector.load %arg1[%c0, %c0_0] : memref<8x216xbf16, #tpu.memory_space<vmem>>, vector<8x216xbf16>
    %c0_1 = arith.constant 0 : index
    %c0_2 = arith.constant 0 : index
    %1 = vector.load %arg4[%c0_1, %c0_2] : memref<216x128xbf16, #tpu.memory_space<vmem>>, vector<216x128xbf16>
    %cst = arith.constant dense<0.000000e+00> : vector<8x128xf32>
    %2 = tpu.matmul %0, %1, %cst {dimension_numbers = #tpu.dot_dimension_numbers<[1], [0], [0], [1], [0, 0, 1, 1], [], []>} : vector<8x216xbf16>, vector<216x128xbf16>, vector<8x128xf32> -> vector<8x128xf32>
    %c0_3 = arith.constant 0 : index
    %c0_4 = arith.constant 0 : index
    %3 = vector.load %arg2[%c0_3, %c0_4] : memref<8x1xf32, #tpu.memory_space<vmem>>, vector<8x1xf32>
    %4 = vector.broadcast %3 : vector<8x1xf32> to vector<8x128xf32>
    %5 = arith.mulf %2, %4 : vector<8x128xf32>
    %c0_5 = arith.constant 0 : index
    %c0_6 = arith.constant 0 : index
    %6 = vector.load %arg3[%c0_5, %c0_6] : memref<8x1xf32, #tpu.memory_space<vmem>>, vector<8x1xf32>
    %7 = vector.broadcast %6 : vector<8x1xf32> to vector<8x128xf32>
    %8 = arith.addf %5, %7 : vector<8x128xf32>
    %c0_7 = arith.constant 0 : index
    %c0_8 = arith.constant 0 : index
    %9 = vector.load %arg5[%c0_7, %c0_8] : memref<8x128xf32, #tpu.memory_space<vmem>>, vector<8x128xf32>
    %10 = arith.addf %8, %9 : vector<8x128xf32>
    %cst_9 = arith.constant 0.000000e+00 : f32
    %11 = vector.broadcast %cst_9 : f32 to vector<8x128xf32>
    %12 = arith.maximumf %10, %11 : vector<8x128xf32>
    %c0_10 = arith.constant 0 : index
    %c0_11 = arith.constant 0 : index
    %13 = vector.load %arg6[%c0_10, %c0_11] : memref<8x128xf32, #tpu.memory_space<vmem>>, vector<8x128xf32>
    tpu.vector_store %arg6[%c0_10, %c0_11], %12 {strides = array<i32>} : memref<8x128xf32, #tpu.memory_space<vmem>>, vector<8x128xf32>,
    return
  }
  func.func @transform_0(%arg0: i32) -> (i32, i32) {
    %c0_i32 = arith.constant 0 : i32
    %c0_i32_0 = arith.constant 0 : i32
    %c0_i32_1 = arith.constant 0 : i32
    return %c0_i32, %c0_i32_0 : i32, i32
  }
  func.func @transform_1(%arg0: i32) -> (i32, i32) {
    %c0_i32 = arith.constant 0 : i32
    %c0_i32_0 = arith.constant 0 : i32
    %c0_i32_1 = arith.constant 0 : i32
    return %c0_i32, %c0_i32_0 : i32, i32
  }
  func.func @transform_2(%arg0: i32) -> (i32, i32) {
    %c0_i32 = arith.constant 0 : i32
    %c0_i32_0 = arith.constant 0 : i32
    %c0_i32_1 = arith.constant 0 : i32
    return %c0_i32, %c0_i32_0 : i32, i32
  }
  func.func @transform_3(%arg0: i32) -> (i32, i32) {
    %c0_i32 = arith.constant 0 : i32
    %c0_i32_0 = arith.constant 0 : i32
    return %c0_i32, %arg0 : i32, i32
  }
  func.func @transform_4(%arg0: i32) -> (i32, i32) {
    %c0_i32 = arith.constant 0 : i32
    %c0_i32_0 = arith.constant 0 : i32
    return %c0_i32, %arg0 : i32, i32
  }
  func.func @transform_5(%arg0: i32) -> (i32, i32) {
    %c0_i32 = arith.constant 0 : i32
    %c0_i32_0 = arith.constant 0 : i32
    return %c0_i32, %arg0 : i32, i32
  }
}

module attributes {stable_mosaic.version = 11 : i64} {
  func.func @fused_conv_bn_act_kernel(%arg0: i32, %arg1: memref<16x216xbf16, #tpu.memory_space<vmem>>, %arg2: memref<16x1xf32, #tpu.memory_space<vmem>>, %arg3: memref<16x1xf32, #tpu.memory_space<vmem>>, %arg4: memref<216x128xbf16, #tpu.memory_space<vmem>>, %arg5: memref<16x128xf32, #tpu.memory_space<vmem>>) attributes {dimension_semantics = [#tpu.dimension_semantics<parallel>], iteration_bounds = array<i64: 1>, scalar_prefetch = 0 : i64, scratch_operands = 0 : i64, tpu.core_type = #tpu.core_type<tc>, window_params = [{pipeline_mode = #tpu.pipeline_mode<synchronous>, transform_indices = @transform_0, window_bounds = array<i64: 16, 216>}, {pipeline_mode = #tpu.pipeline_mode<synchronous>, transform_indices = @transform_1, window_bounds = array<i64: 16, 1>}, {pipeline_mode = #tpu.pipeline_mode<synchronous>, transform_indices = @transform_2, window_bounds = array<i64: 16, 1>}, {transform_indices = @transform_3, window_bounds = array<i64: 216, 128>}, {transform_indices = @transform_4, window_bounds = array<i64: 16, 128>}]} {
    %c0 = arith.constant 0 : index
    %c0_0 = arith.constant 0 : index
    %0 = vector.load %arg1[%c0, %c0_0] : memref<16x216xbf16, #tpu.memory_space<vmem>>, vector<16x216xbf16>
    %c0_1 = arith.constant 0 : index
    %c0_2 = arith.constant 0 : index
    %1 = vector.load %arg4[%c0_1, %c0_2] : memref<216x128xbf16, #tpu.memory_space<vmem>>, vector<216x128xbf16>
    %cst = arith.constant dense<0.000000e+00> : vector<16x128xf32>
    %2 = tpu.matmul %0, %1, %cst {dimension_numbers = #tpu.dot_dimension_numbers<[1], [0], [0], [1], [0, 0, 1, 1], [], []>} : vector<16x216xbf16>, vector<216x128xbf16>, vector<16x128xf32> -> vector<16x128xf32>
    %c0_3 = arith.constant 0 : index
    %c0_4 = arith.constant 0 : index
    %3 = vector.load %arg2[%c0_3, %c0_4] : memref<16x1xf32, #tpu.memory_space<vmem>>, vector<16x1xf32>
    %4 = vector.broadcast %3 : vector<16x1xf32> to vector<16x128xf32>
    %5 = arith.mulf %2, %4 : vector<16x128xf32>
    %c0_5 = arith.constant 0 : index
    %c0_6 = arith.constant 0 : index
    %6 = vector.load %arg3[%c0_5, %c0_6] : memref<16x1xf32, #tpu.memory_space<vmem>>, vector<16x1xf32>
    %7 = vector.broadcast %6 : vector<16x1xf32> to vector<16x128xf32>
    %8 = arith.addf %5, %7 : vector<16x128xf32>
    %cst_7 = arith.constant 0.000000e+00 : f32
    %9 = vector.broadcast %cst_7 : f32 to vector<16x128xf32>
    %10 = arith.maximumf %8, %9 : vector<16x128xf32>
    %c0_8 = arith.constant 0 : index
    %c0_9 = arith.constant 0 : index
    %11 = vector.load %arg5[%c0_8, %c0_9] : memref<16x128xf32, #tpu.memory_space<vmem>>, vector<16x128xf32>
    tpu.vector_store %arg5[%c0_8, %c0_9], %10 {strides = array<i32>} : memref<16x128xf32, #tpu.memory_space<vmem>>, vector<16x128xf32>,
    return
  }
  func.func @transform_0(%arg0: i32) -> (i32, i32) {
    %c0_i32 = arith.constant 0 : i32
    %c0_i32_0 = arith.constant 0 : i32
    %c0_i32_1 = arith.constant 0 : i32
    return %c0_i32, %c0_i32_0 : i32, i32
  }
  func.func @transform_1(%arg0: i32) -> (i32, i32) {
    %c0_i32 = arith.constant 0 : i32
    %c0_i32_0 = arith.constant 0 : i32
    %c0_i32_1 = arith.constant 0 : i32
    return %c0_i32, %c0_i32_0 : i32, i32
  }
  func.func @transform_2(%arg0: i32) -> (i32, i32) {
    %c0_i32 = arith.constant 0 : i32
    %c0_i32_0 = arith.constant 0 : i32
    %c0_i32_1 = arith.constant 0 : i32
    return %c0_i32, %c0_i32_0 : i32, i32
  }
  func.func @transform_3(%arg0: i32) -> (i32, i32) {
    %c0_i32 = arith.constant 0 : i32
    %c0_i32_0 = arith.constant 0 : i32
    return %c0_i32, %arg0 : i32, i32
  }
  func.func @transform_4(%arg0: i32) -> (i32, i32) {
    %c0_i32 = arith.constant 0 : i32
    %c0_i32_0 = arith.constant 0 : i32
    return %c0_i32, %arg0 : i32, i32
  }
}

module attributes {stable_mosaic.version = 11 : i64} {
  func.func @fused_conv_bn_act_kernel(%arg0: i32, %arg1: memref<16x432xbf16, #tpu.memory_space<vmem>>, %arg2: memref<16x1xf32, #tpu.memory_space<vmem>>, %arg3: memref<16x1xf32, #tpu.memory_space<vmem>>, %arg4: memref<432x128xbf16, #tpu.memory_space<vmem>>, %arg5: memref<16x128xf32, #tpu.memory_space<vmem>>, %arg6: memref<16x128xf32, #tpu.memory_space<vmem>>) attributes {dimension_semantics = [#tpu.dimension_semantics<parallel>], iteration_bounds = array<i64: 1>, scalar_prefetch = 0 : i64, scratch_operands = 0 : i64, tpu.core_type = #tpu.core_type<tc>, window_params = [{pipeline_mode = #tpu.pipeline_mode<synchronous>, transform_indices = @transform_0, window_bounds = array<i64: 16, 432>}, {pipeline_mode = #tpu.pipeline_mode<synchronous>, transform_indices = @transform_1, window_bounds = array<i64: 16, 1>}, {pipeline_mode = #tpu.pipeline_mode<synchronous>, transform_indices = @transform_2, window_bounds = array<i64: 16, 1>}, {transform_indices = @transform_3, window_bounds = array<i64: 432, 128>}, {transform_indices = @transform_4, window_bounds = array<i64: 16, 128>}, {transform_indices = @transform_5, window_bounds = array<i64: 16, 128>}]} {
    %c0 = arith.constant 0 : index
    %c0_0 = arith.constant 0 : index
    %0 = vector.load %arg1[%c0, %c0_0] : memref<16x432xbf16, #tpu.memory_space<vmem>>, vector<16x432xbf16>
    %c0_1 = arith.constant 0 : index
    %c0_2 = arith.constant 0 : index
    %1 = vector.load %arg4[%c0_1, %c0_2] : memref<432x128xbf16, #tpu.memory_space<vmem>>, vector<432x128xbf16>
    %cst = arith.constant dense<0.000000e+00> : vector<16x128xf32>
    %2 = tpu.matmul %0, %1, %cst {dimension_numbers = #tpu.dot_dimension_numbers<[1], [0], [0], [1], [0, 0, 1, 1], [], []>} : vector<16x432xbf16>, vector<432x128xbf16>, vector<16x128xf32> -> vector<16x128xf32>
    %c0_3 = arith.constant 0 : index
    %c0_4 = arith.constant 0 : index
    %3 = vector.load %arg2[%c0_3, %c0_4] : memref<16x1xf32, #tpu.memory_space<vmem>>, vector<16x1xf32>
    %4 = vector.broadcast %3 : vector<16x1xf32> to vector<16x128xf32>
    %5 = arith.mulf %2, %4 : vector<16x128xf32>
    %c0_5 = arith.constant 0 : index
    %c0_6 = arith.constant 0 : index
    %6 = vector.load %arg3[%c0_5, %c0_6] : memref<16x1xf32, #tpu.memory_space<vmem>>, vector<16x1xf32>
    %7 = vector.broadcast %6 : vector<16x1xf32> to vector<16x128xf32>
    %8 = arith.addf %5, %7 : vector<16x128xf32>
    %c0_7 = arith.constant 0 : index
    %c0_8 = arith.constant 0 : index
    %9 = vector.load %arg5[%c0_7, %c0_8] : memref<16x128xf32, #tpu.memory_space<vmem>>, vector<16x128xf32>
    %10 = arith.addf %8, %9 : vector<16x128xf32>
    %cst_9 = arith.constant 0.000000e+00 : f32
    %11 = vector.broadcast %cst_9 : f32 to vector<16x128xf32>
    %12 = arith.maximumf %10, %11 : vector<16x128xf32>
    %c0_10 = arith.constant 0 : index
    %c0_11 = arith.constant 0 : index
    %13 = vector.load %arg6[%c0_10, %c0_11] : memref<16x128xf32, #tpu.memory_space<vmem>>, vector<16x128xf32>
    tpu.vector_store %arg6[%c0_10, %c0_11], %12 {strides = array<i32>} : memref<16x128xf32, #tpu.memory_space<vmem>>, vector<16x128xf32>,
    return
  }
  func.func @transform_0(%arg0: i32) -> (i32, i32) {
    %c0_i32 = arith.constant 0 : i32
    %c0_i32_0 = arith.constant 0 : i32
    %c0_i32_1 = arith.constant 0 : i32
    return %c0_i32, %c0_i32_0 : i32, i32
  }
  func.func @transform_1(%arg0: i32) -> (i32, i32) {
    %c0_i32 = arith.constant 0 : i32
    %c0_i32_0 = arith.constant 0 : i32
    %c0_i32_1 = arith.constant 0 : i32
    return %c0_i32, %c0_i32_0 : i32, i32
  }
  func.func @transform_2(%arg0: i32) -> (i32, i32) {
    %c0_i32 = arith.constant 0 : i32
    %c0_i32_0 = arith.constant 0 : i32
    %c0_i32_1 = arith.constant 0 : i32
    return %c0_i32, %c0_i32_0 : i32, i32
  }
  func.func @transform_3(%arg0: i32) -> (i32, i32) {
    %c0_i32 = arith.constant 0 : i32
    %c0_i32_0 = arith.constant 0 : i32
    return %c0_i32, %arg0 : i32, i32
  }
  func.func @transform_4(%arg0: i32) -> (i32, i32) {
    %c0_i32 = arith.constant 0 : i32
    %c0_i32_0 = arith.constant 0 : i32
    return %c0_i32, %arg0 : i32, i32
  }
  func.func @transform_5(%arg0: i32) -> (i32, i32) {
    %c0_i32 = arith.constant 0 : i32
    %c0_i32_0 = arith.constant 0 : i32
    return %c0_i32, %arg0 : i32, i32
  }
}

module attributes {stable_mosaic.version = 11 : i64} {
  func.func @fused_conv_bn_act_kernel(%arg0: i32, %arg1: memref<16x432xbf16, #tpu.memory_space<vmem>>, %arg2: memref<16x1xf32, #tpu.memory_space<vmem>>, %arg3: memref<16x1xf32, #tpu.memory_space<vmem>>, %arg4: memref<432x128xbf16, #tpu.memory_space<vmem>>, %arg5: memref<16x128xf32, #tpu.memory_space<vmem>>) attributes {dimension_semantics = [#tpu.dimension_semantics<parallel>], iteration_bounds = array<i64: 1>, scalar_prefetch = 0 : i64, scratch_operands = 0 : i64, tpu.core_type = #tpu.core_type<tc>, window_params = [{pipeline_mode = #tpu.pipeline_mode<synchronous>, transform_indices = @transform_0, window_bounds = array<i64: 16, 432>}, {pipeline_mode = #tpu.pipeline_mode<synchronous>, transform_indices = @transform_1, window_bounds = array<i64: 16, 1>}, {pipeline_mode = #tpu.pipeline_mode<synchronous>, transform_indices = @transform_2, window_bounds = array<i64: 16, 1>}, {transform_indices = @transform_3, window_bounds = array<i64: 432, 128>}, {transform_indices = @transform_4, window_bounds = array<i64: 16, 128>}]} {
    %c0 = arith.constant 0 : index
    %c0_0 = arith.constant 0 : index
    %0 = vector.load %arg1[%c0, %c0_0] : memref<16x432xbf16, #tpu.memory_space<vmem>>, vector<16x432xbf16>
    %c0_1 = arith.constant 0 : index
    %c0_2 = arith.constant 0 : index
    %1 = vector.load %arg4[%c0_1, %c0_2] : memref<432x128xbf16, #tpu.memory_space<vmem>>, vector<432x128xbf16>
    %cst = arith.constant dense<0.000000e+00> : vector<16x128xf32>
    %2 = tpu.matmul %0, %1, %cst {dimension_numbers = #tpu.dot_dimension_numbers<[1], [0], [0], [1], [0, 0, 1, 1], [], []>} : vector<16x432xbf16>, vector<432x128xbf16>, vector<16x128xf32> -> vector<16x128xf32>
    %c0_3 = arith.constant 0 : index
    %c0_4 = arith.constant 0 : index
    %3 = vector.load %arg2[%c0_3, %c0_4] : memref<16x1xf32, #tpu.memory_space<vmem>>, vector<16x1xf32>
    %4 = vector.broadcast %3 : vector<16x1xf32> to vector<16x128xf32>
    %5 = arith.mulf %2, %4 : vector<16x128xf32>
    %c0_5 = arith.constant 0 : index
    %c0_6 = arith.constant 0 : index
    %6 = vector.load %arg3[%c0_5, %c0_6] : memref<16x1xf32, #tpu.memory_space<vmem>>, vector<16x1xf32>
    %7 = vector.broadcast %6 : vector<16x1xf32> to vector<16x128xf32>
    %8 = arith.addf %5, %7 : vector<16x128xf32>
    %cst_7 = arith.constant 0.000000e+00 : f32
    %9 = vector.broadcast %cst_7 : f32 to vector<16x128xf32>
    %10 = arith.maximumf %8, %9 : vector<16x128xf32>
    %c0_8 = arith.constant 0 : index
    %c0_9 = arith.constant 0 : index
    %11 = vector.load %arg5[%c0_8, %c0_9] : memref<16x128xf32, #tpu.memory_space<vmem>>, vector<16x128xf32>
    tpu.vector_store %arg5[%c0_8, %c0_9], %10 {strides = array<i32>} : memref<16x128xf32, #tpu.memory_space<vmem>>, vector<16x128xf32>,
    return
  }
  func.func @transform_0(%arg0: i32) -> (i32, i32) {
    %c0_i32 = arith.constant 0 : i32
    %c0_i32_0 = arith.constant 0 : i32
    %c0_i32_1 = arith.constant 0 : i32
    return %c0_i32, %c0_i32_0 : i32, i32
  }
  func.func @transform_1(%arg0: i32) -> (i32, i32) {
    %c0_i32 = arith.constant 0 : i32
    %c0_i32_0 = arith.constant 0 : i32
    %c0_i32_1 = arith.constant 0 : i32
    return %c0_i32, %c0_i32_0 : i32, i32
  }
  func.func @transform_2(%arg0: i32) -> (i32, i32) {
    %c0_i32 = arith.constant 0 : i32
    %c0_i32_0 = arith.constant 0 : i32
    %c0_i32_1 = arith.constant 0 : i32
    return %c0_i32, %c0_i32_0 : i32, i32
  }
  func.func @transform_3(%arg0: i32) -> (i32, i32) {
    %c0_i32 = arith.constant 0 : i32
    %c0_i32_0 = arith.constant 0 : i32
    return %c0_i32, %arg0 : i32, i32
  }
  func.func @transform_4(%arg0: i32) -> (i32, i32) {
    %c0_i32 = arith.constant 0 : i32
    %c0_i32_0 = arith.constant 0 : i32
    return %c0_i32, %arg0 : i32, i32
  }
}

module attributes {stable_mosaic.version = 11 : i64} {
  func.func @fused_conv_bn_act_kernel(%arg0: i32, %arg1: memref<32x432xbf16, #tpu.memory_space<vmem>>, %arg2: memref<32x1xf32, #tpu.memory_space<vmem>>, %arg3: memref<32x1xf32, #tpu.memory_space<vmem>>, %arg4: memref<432x128xbf16, #tpu.memory_space<vmem>>, %arg5: memref<32x128xf32, #tpu.memory_space<vmem>>) attributes {dimension_semantics = [#tpu.dimension_semantics<parallel>], iteration_bounds = array<i64: 1>, scalar_prefetch = 0 : i64, scratch_operands = 0 : i64, tpu.core_type = #tpu.core_type<tc>, window_params = [{pipeline_mode = #tpu.pipeline_mode<synchronous>, transform_indices = @transform_0, window_bounds = array<i64: 32, 432>}, {pipeline_mode = #tpu.pipeline_mode<synchronous>, transform_indices = @transform_1, window_bounds = array<i64: 32, 1>}, {pipeline_mode = #tpu.pipeline_mode<synchronous>, transform_indices = @transform_2, window_bounds = array<i64: 32, 1>}, {transform_indices = @transform_3, window_bounds = array<i64: 432, 128>}, {transform_indices = @transform_4, window_bounds = array<i64: 32, 128>}]} {
    %c0 = arith.constant 0 : index
    %c0_0 = arith.constant 0 : index
    %0 = vector.load %arg1[%c0, %c0_0] : memref<32x432xbf16, #tpu.memory_space<vmem>>, vector<32x432xbf16>
    %c0_1 = arith.constant 0 : index
    %c0_2 = arith.constant 0 : index
    %1 = vector.load %arg4[%c0_1, %c0_2] : memref<432x128xbf16, #tpu.memory_space<vmem>>, vector<432x128xbf16>
    %cst = arith.constant dense<0.000000e+00> : vector<32x128xf32>
    %2 = tpu.matmul %0, %1, %cst {dimension_numbers = #tpu.dot_dimension_numbers<[1], [0], [0], [1], [0, 0, 1, 1], [], []>} : vector<32x432xbf16>, vector<432x128xbf16>, vector<32x128xf32> -> vector<32x128xf32>
    %c0_3 = arith.constant 0 : index
    %c0_4 = arith.constant 0 : index
    %3 = vector.load %arg2[%c0_3, %c0_4] : memref<32x1xf32, #tpu.memory_space<vmem>>, vector<32x1xf32>
    %4 = vector.broadcast %3 : vector<32x1xf32> to vector<32x128xf32>
    %5 = arith.mulf %2, %4 : vector<32x128xf32>
    %c0_5 = arith.constant 0 : index
    %c0_6 = arith.constant 0 : index
    %6 = vector.load %arg3[%c0_5, %c0_6] : memref<32x1xf32, #tpu.memory_space<vmem>>, vector<32x1xf32>
    %7 = vector.broadcast %6 : vector<32x1xf32> to vector<32x128xf32>
    %8 = arith.addf %5, %7 : vector<32x128xf32>
    %cst_7 = arith.constant 0.000000e+00 : f32
    %9 = vector.broadcast %cst_7 : f32 to vector<32x128xf32>
    %10 = arith.maximumf %8, %9 : vector<32x128xf32>
    %c0_8 = arith.constant 0 : index
    %c0_9 = arith.constant 0 : index
    %11 = vector.load %arg5[%c0_8, %c0_9] : memref<32x128xf32, #tpu.memory_space<vmem>>, vector<32x128xf32>
    tpu.vector_store %arg5[%c0_8, %c0_9], %10 {strides = array<i32>} : memref<32x128xf32, #tpu.memory_space<vmem>>, vector<32x128xf32>,
    return
  }
  func.func @transform_0(%arg0: i32) -> (i32, i32) {
    %c0_i32 = arith.constant 0 : i32
    %c0_i32_0 = arith.constant 0 : i32
    %c0_i32_1 = arith.constant 0 : i32
    return %c0_i32, %c0_i32_0 : i32, i32
  }
  func.func @transform_1(%arg0: i32) -> (i32, i32) {
    %c0_i32 = arith.constant 0 : i32
    %c0_i32_0 = arith.constant 0 : i32
    %c0_i32_1 = arith.constant 0 : i32
    return %c0_i32, %c0_i32_0 : i32, i32
  }
  func.func @transform_2(%arg0: i32) -> (i32, i32) {
    %c0_i32 = arith.constant 0 : i32
    %c0_i32_0 = arith.constant 0 : i32
    %c0_i32_1 = arith.constant 0 : i32
    return %c0_i32, %c0_i32_0 : i32, i32
  }
  func.func @transform_3(%arg0: i32) -> (i32, i32) {
    %c0_i32 = arith.constant 0 : i32
    %c0_i32_0 = arith.constant 0 : i32
    return %c0_i32, %arg0 : i32, i32
  }
  func.func @transform_4(%arg0: i32) -> (i32, i32) {
    %c0_i32 = arith.constant 0 : i32
    %c0_i32_0 = arith.constant 0 : i32
    return %c0_i32, %arg0 : i32, i32
  }
}

module attributes {stable_mosaic.version = 11 : i64} {
  func.func @fused_conv_bn_act_kernel(%arg0: i32, %arg1: memref<32x864xbf16, #tpu.memory_space<vmem>>, %arg2: memref<32x1xf32, #tpu.memory_space<vmem>>, %arg3: memref<32x1xf32, #tpu.memory_space<vmem>>, %arg4: memref<864x128xbf16, #tpu.memory_space<vmem>>, %arg5: memref<32x128xf32, #tpu.memory_space<vmem>>, %arg6: memref<32x128xf32, #tpu.memory_space<vmem>>) attributes {dimension_semantics = [#tpu.dimension_semantics<parallel>], iteration_bounds = array<i64: 1>, scalar_prefetch = 0 : i64, scratch_operands = 0 : i64, tpu.core_type = #tpu.core_type<tc>, window_params = [{pipeline_mode = #tpu.pipeline_mode<synchronous>, transform_indices = @transform_0, window_bounds = array<i64: 32, 864>}, {pipeline_mode = #tpu.pipeline_mode<synchronous>, transform_indices = @transform_1, window_bounds = array<i64: 32, 1>}, {pipeline_mode = #tpu.pipeline_mode<synchronous>, transform_indices = @transform_2, window_bounds = array<i64: 32, 1>}, {transform_indices = @transform_3, window_bounds = array<i64: 864, 128>}, {transform_indices = @transform_4, window_bounds = array<i64: 32, 128>}, {transform_indices = @transform_5, window_bounds = array<i64: 32, 128>}]} {
    %c0 = arith.constant 0 : index
    %c0_0 = arith.constant 0 : index
    %0 = vector.load %arg1[%c0, %c0_0] : memref<32x864xbf16, #tpu.memory_space<vmem>>, vector<32x864xbf16>
    %c0_1 = arith.constant 0 : index
    %c0_2 = arith.constant 0 : index
    %1 = vector.load %arg4[%c0_1, %c0_2] : memref<864x128xbf16, #tpu.memory_space<vmem>>, vector<864x128xbf16>
    %cst = arith.constant dense<0.000000e+00> : vector<32x128xf32>
    %2 = tpu.matmul %0, %1, %cst {dimension_numbers = #tpu.dot_dimension_numbers<[1], [0], [0], [1], [0, 0, 1, 1], [], []>} : vector<32x864xbf16>, vector<864x128xbf16>, vector<32x128xf32> -> vector<32x128xf32>
    %c0_3 = arith.constant 0 : index
    %c0_4 = arith.constant 0 : index
    %3 = vector.load %arg2[%c0_3, %c0_4] : memref<32x1xf32, #tpu.memory_space<vmem>>, vector<32x1xf32>
    %4 = vector.broadcast %3 : vector<32x1xf32> to vector<32x128xf32>
    %5 = arith.mulf %2, %4 : vector<32x128xf32>
    %c0_5 = arith.constant 0 : index
    %c0_6 = arith.constant 0 : index
    %6 = vector.load %arg3[%c0_5, %c0_6] : memref<32x1xf32, #tpu.memory_space<vmem>>, vector<32x1xf32>
    %7 = vector.broadcast %6 : vector<32x1xf32> to vector<32x128xf32>
    %8 = arith.addf %5, %7 : vector<32x128xf32>
    %c0_7 = arith.constant 0 : index
    %c0_8 = arith.constant 0 : index
    %9 = vector.load %arg5[%c0_7, %c0_8] : memref<32x128xf32, #tpu.memory_space<vmem>>, vector<32x128xf32>
    %10 = arith.addf %8, %9 : vector<32x128xf32>
    %cst_9 = arith.constant 0.000000e+00 : f32
    %11 = vector.broadcast %cst_9 : f32 to vector<32x128xf32>
    %12 = arith.maximumf %10, %11 : vector<32x128xf32>
    %c0_10 = arith.constant 0 : index
    %c0_11 = arith.constant 0 : index
    %13 = vector.load %arg6[%c0_10, %c0_11] : memref<32x128xf32, #tpu.memory_space<vmem>>, vector<32x128xf32>
    tpu.vector_store %arg6[%c0_10, %c0_11], %12 {strides = array<i32>} : memref<32x128xf32, #tpu.memory_space<vmem>>, vector<32x128xf32>,
    return
  }
  func.func @transform_0(%arg0: i32) -> (i32, i32) {
    %c0_i32 = arith.constant 0 : i32
    %c0_i32_0 = arith.constant 0 : i32
    %c0_i32_1 = arith.constant 0 : i32
    return %c0_i32, %c0_i32_0 : i32, i32
  }
  func.func @transform_1(%arg0: i32) -> (i32, i32) {
    %c0_i32 = arith.constant 0 : i32
    %c0_i32_0 = arith.constant 0 : i32
    %c0_i32_1 = arith.constant 0 : i32
    return %c0_i32, %c0_i32_0 : i32, i32
  }
  func.func @transform_2(%arg0: i32) -> (i32, i32) {
    %c0_i32 = arith.constant 0 : i32
    %c0_i32_0 = arith.constant 0 : i32
    %c0_i32_1 = arith.constant 0 : i32
    return %c0_i32, %c0_i32_0 : i32, i32
  }
  func.func @transform_3(%arg0: i32) -> (i32, i32) {
    %c0_i32 = arith.constant 0 : i32
    %c0_i32_0 = arith.constant 0 : i32
    return %c0_i32, %arg0 : i32, i32
  }
  func.func @transform_4(%arg0: i32) -> (i32, i32) {
    %c0_i32 = arith.constant 0 : i32
    %c0_i32_0 = arith.constant 0 : i32
    return %c0_i32, %arg0 : i32, i32
  }
  func.func @transform_5(%arg0: i32) -> (i32, i32) {
    %c0_i32 = arith.constant 0 : i32
    %c0_i32_0 = arith.constant 0 : i32
    return %c0_i32, %arg0 : i32, i32
  }
}

module attributes {stable_mosaic.version = 11 : i64} {
  func.func @fused_conv_bn_act_kernel(%arg0: i32, %arg1: memref<32x864xbf16, #tpu.memory_space<vmem>>, %arg2: memref<32x1xf32, #tpu.memory_space<vmem>>, %arg3: memref<32x1xf32, #tpu.memory_space<vmem>>, %arg4: memref<864x128xbf16, #tpu.memory_space<vmem>>, %arg5: memref<32x128xf32, #tpu.memory_space<vmem>>) attributes {dimension_semantics = [#tpu.dimension_semantics<parallel>], iteration_bounds = array<i64: 1>, scalar_prefetch = 0 : i64, scratch_operands = 0 : i64, tpu.core_type = #tpu.core_type<tc>, window_params = [{pipeline_mode = #tpu.pipeline_mode<synchronous>, transform_indices = @transform_0, window_bounds = array<i64: 32, 864>}, {pipeline_mode = #tpu.pipeline_mode<synchronous>, transform_indices = @transform_1, window_bounds = array<i64: 32, 1>}, {pipeline_mode = #tpu.pipeline_mode<synchronous>, transform_indices = @transform_2, window_bounds = array<i64: 32, 1>}, {transform_indices = @transform_3, window_bounds = array<i64: 864, 128>}, {transform_indices = @transform_4, window_bounds = array<i64: 32, 128>}]} {
    %c0 = arith.constant 0 : index
    %c0_0 = arith.constant 0 : index
    %0 = vector.load %arg1[%c0, %c0_0] : memref<32x864xbf16, #tpu.memory_space<vmem>>, vector<32x864xbf16>
    %c0_1 = arith.constant 0 : index
    %c0_2 = arith.constant 0 : index
    %1 = vector.load %arg4[%c0_1, %c0_2] : memref<864x128xbf16, #tpu.memory_space<vmem>>, vector<864x128xbf16>
    %cst = arith.constant dense<0.000000e+00> : vector<32x128xf32>
    %2 = tpu.matmul %0, %1, %cst {dimension_numbers = #tpu.dot_dimension_numbers<[1], [0], [0], [1], [0, 0, 1, 1], [], []>} : vector<32x864xbf16>, vector<864x128xbf16>, vector<32x128xf32> -> vector<32x128xf32>
    %c0_3 = arith.constant 0 : index
    %c0_4 = arith.constant 0 : index
    %3 = vector.load %arg2[%c0_3, %c0_4] : memref<32x1xf32, #tpu.memory_space<vmem>>, vector<32x1xf32>
    %4 = vector.broadcast %3 : vector<32x1xf32> to vector<32x128xf32>
    %5 = arith.mulf %2, %4 : vector<32x128xf32>
    %c0_5 = arith.constant 0 : index
    %c0_6 = arith.constant 0 : index
    %6 = vector.load %arg3[%c0_5, %c0_6] : memref<32x1xf32, #tpu.memory_space<vmem>>, vector<32x1xf32>
    %7 = vector.broadcast %6 : vector<32x1xf32> to vector<32x128xf32>
    %8 = arith.addf %5, %7 : vector<32x128xf32>
    %cst_7 = arith.constant 0.000000e+00 : f32
    %9 = vector.broadcast %cst_7 : f32 to vector<32x128xf32>
    %10 = arith.maximumf %8, %9 : vector<32x128xf32>
    %c0_8 = arith.constant 0 : index
    %c0_9 = arith.constant 0 : index
    %11 = vector.load %arg5[%c0_8, %c0_9] : memref<32x128xf32, #tpu.memory_space<vmem>>, vector<32x128xf32>
    tpu.vector_store %arg5[%c0_8, %c0_9], %10 {strides = array<i32>} : memref<32x128xf32, #tpu.memory_space<vmem>>, vector<32x128xf32>,
    return
  }
  func.func @transform_0(%arg0: i32) -> (i32, i32) {
    %c0_i32 = arith.constant 0 : i32
    %c0_i32_0 = arith.constant 0 : i32
    %c0_i32_1 = arith.constant 0 : i32
    return %c0_i32, %c0_i32_0 : i32, i32
  }
  func.func @transform_1(%arg0: i32) -> (i32, i32) {
    %c0_i32 = arith.constant 0 : i32
    %c0_i32_0 = arith.constant 0 : i32
    %c0_i32_1 = arith.constant 0 : i32
    return %c0_i32, %c0_i32_0 : i32, i32
  }
  func.func @transform_2(%arg0: i32) -> (i32, i32) {
    %c0_i32 = arith.constant 0 : i32
    %c0_i32_0 = arith.constant 0 : i32
    %c0_i32_1 = arith.constant 0 : i32
    return %c0_i32, %c0_i32_0 : i32, i32
  }
  func.func @transform_3(%arg0: i32) -> (i32, i32) {
    %c0_i32 = arith.constant 0 : i32
    %c0_i32_0 = arith.constant 0 : i32
    return %c0_i32, %arg0 : i32, i32
  }
  func.func @transform_4(%arg0: i32) -> (i32, i32) {
    %c0_i32 = arith.constant 0 : i32
    %c0_i32_0 = arith.constant 0 : i32
    return %c0_i32, %arg0 : i32, i32
  }
}

</mosaic_0001>

<llo_original>
// kernel: _lambda_.16
$region0: #{_lambda_.16}
  #allocation0 [shape = 'u32[]', space=smem, size = 0x4, offset = 0x4, fixed_abs, tag = 'smem constant byte address 0x4 - core index']
  #allocation1 [shape = 'u32[144,128]{1,0:T(1,128)}', space=vmem, size = 0x12000, scoped, tag = 'internal scratch']
  %s0 = inlined_call_operand.vmem [shape: bf16[8,216], index: 0, kind: input, shape index: {}]
  %s1 = inlined_call_operand.vmem [shape: f32[8,1], index: 1, kind: input, shape index: {}]
  %s2 = inlined_call_operand.vmem [shape: f32[8,1], index: 2, kind: input, shape index: {}]
  %s3 = inlined_call_operand.vmem [shape: bf16[216,1024], index: 3, kind: input, shape index: {}]
  %s4 = inlined_call_operand.vmem [shape: f32[8,1024], index: 4, kind: output, shape index: {}]
  %s5 = sld [smem:[#allocation0]]
  $region72: #{_lambda_.16} parent=0
    _
  %s7 = ssub.s32 1, %s5
  %s8 = scalar_select 0, %s7, %s5
  $region1: #{_lambda_.16} parent=0
    #allocation2 [shape = 'u8[442368]{0}', space=vmem, size = 0x6c000, scoped, tag = 'input window, operand 3']
    loop: start=0, step=1, limit=4
    $region2: #{_lambda_.16} parent=1 // loop_pre_header
      _
    $region3: #{_lambda_.16} parent=1 // loop_header
      %s10 = sphi 0, %s14
      %p11 = scmp.ge.s32.totalorder %s10, 4
      %s18 = sphi 0, %s18
      %s20 = sphi 0, %s18
      %s21 = sphi 0, %s20
      %s35 = sphi 0, %s21
      %s39 = sphi 0, %s39
      %s41 = sphi 0, %s39
      %s42 = sphi 0, %s41
      %s56 = sphi 0, %s42
      %s60 = sphi 0, %s60
      %s62 = sphi 0, %s60
      %s63 = sphi 0, %s62
      %s77 = sphi 0, %s63
      %s83 = sphi 0, %s85
      %s86 = sphi 0, %s83
      %s87 = sphi 0, %s86
      %s103 = sphi 0, %s87
      %s109 = sphi 0, %s111
      %s112 = sphi 0, %s109
      %s113 = sphi 0, %s112
      %s129 = sphi 0, %s113
    $region4: #{_lambda_.16} parent=1 // loop_header_branch
      %13 = sbr.rel (%p11) target = $region8
    $region5: #{_lambda_.16} parent=1 // loop_body
      %s15 = ssub.s32 %s10, 1
      %s16 = ssub.s32 %s10, 2
      %s17 = sadd.s32 %s10, 1
      %s19 = sadd.s32 %s18, 1
      %p22 = scmp.eq.s32.totalorder %s10, 1
      %p23 = scmp.ne.s32.totalorder %s18, %s20
      %p24 = scmp.eq.s32.totalorder %s10, 0
      %p25 = por %p23, %p24
      %p26 = scmp.ne.s32.totalorder %s18, %s20
      %p27 = scmp.eq.s32.totalorder %s15, 1
      %p28 = por %p26, %p27
      %p29 = scmp.ne.s32.totalorder %s20, %s21
      %p30 = scmp.eq.s32.totalorder %s15, 0
      %p31 = por %p29, %p30
      %p32 = scmp.ne.s32.totalorder %s20, %s21
      %p33 = scmp.eq.s32.totalorder %s16, 1
      %p34 = por %p32, %p33
      %p36 = scmp.ne.s32.totalorder %s21, %s35
      %p37 = scmp.eq.s32.totalorder %s16, 0
      %p38 = por %p36, %p37
      %s40 = sadd.s32 %s39, 1
      %p43 = scmp.eq.s32.totalorder %s10, 1
      %p44 = scmp.ne.s32.totalorder %s39, %s41
      %p45 = scmp.eq.s32.totalorder %s10, 0
      %p46 = por %p44, %p45
      %p47 = scmp.ne.s32.totalorder %s39, %s41
      %p48 = scmp.eq.s32.totalorder %s15, 1
      %p49 = por %p47, %p48
      %p50 = scmp.ne.s32.totalorder %s41, %s42
      %p51 = scmp.eq.s32.totalorder %s15, 0
      %p52 = por %p50, %p51
      %p53 = scmp.ne.s32.totalorder %s41, %s42
      %p54 = scmp.eq.s32.totalorder %s16, 1
      %p55 = por %p53, %p54
      %p57 = scmp.ne.s32.totalorder %s42, %s56
      %p58 = scmp.eq.s32.totalorder %s16, 0
      %p59 = por %p57, %p58
      %s61 = sadd.s32 %s60, 1
      %p64 = scmp.eq.s32.totalorder %s10, 1
      %p65 = scmp.ne.s32.totalorder %s60, %s62
      %p66 = scmp.eq.s32.totalorder %s10, 0
      %p67 = por %p65, %p66
      %p68 = scmp.ne.s32.totalorder %s60, %s62
      %p69 = scmp.eq.s32.totalorder %s15, 1
      %p70 = por %p68, %p69
      %p71 = scmp.ne.s32.totalorder %s62, %s63
      %p72 = scmp.eq.s32.totalorder %s15, 0
      %p73 = por %p71, %p72
      %p74 = scmp.ne.s32.totalorder %s62, %s63
      %p75 = scmp.eq.s32.totalorder %s16, 1
      %p76 = por %p74, %p75
      %p78 = scmp.ne.s32.totalorder %s63, %s77
      %p79 = scmp.eq.s32.totalorder %s16, 0
      %p80 = por %p78, %p79
      %s81 = ssub.s32 %s10, %s17
      %p82 = scmp.eq.s32.totalorder %s81, 0
      %s84 = sadd.s32 %s83, 1
      %s85 = scalar_select %p82, %s83, %s84
      %p88 = pneg %p82
      %p89 = scmp.eq.s32.totalorder %s10, 1
      %p90 = por %p88, %p89
      %p91 = scmp.ne.s32.totalorder %s83, %s86
      %p92 = scmp.eq.s32.totalorder %s10, 0
      %p93 = por %p91, %p92
      %p94 = scmp.ne.s32.totalorder %s83, %s86
      %p95 = scmp.eq.s32.totalorder %s15, 1
      %p96 = por %p94, %p95
      %p97 = scmp.ne.s32.totalorder %s86, %s87
      %p98 = scmp.eq.s32.totalorder %s15, 0
      %p99 = por %p97, %p98
      %p100 = scmp.ne.s32.totalorder %s86, %s87
      %p101 = scmp.eq.s32.totalorder %s16, 1
      %p102 = por %p100, %p101
      %p104 = scmp.ne.s32.totalorder %s87, %s103
      %p105 = scmp.eq.s32.totalorder %s16, 0
      %p106 = por %p104, %p105
      %s107 = ssub.s32 %s10, %s17
      %p108 = scmp.eq.s32.totalorder %s107, 0
      %s110 = sadd.s32 %s109, 1
      %s111 = scalar_select %p108, %s109, %s110
      %p114 = pneg %p108
      %p115 = scmp.eq.s32.totalorder %s10, 1
      %p116 = por %p114, %p115
      %p117 = scmp.ne.s32.totalorder %s109, %s112
      %p118 = scmp.eq.s32.totalorder %s10, 0
      %p119 = por %p117, %p118
      %p120 = scmp.ne.s32.totalorder %s109, %s112
      %p121 = scmp.eq.s32.totalorder %s15, 1
      %p122 = por %p120, %p121
      %p123 = scmp.ne.s32.totalorder %s112, %s113
      %p124 = scmp.eq.s32.totalorder %s15, 0
      %p125 = por %p123, %p124
      %p126 = scmp.ne.s32.totalorder %s112, %s113
      %p127 = scmp.eq.s32.totalorder %s16, 1
      %p128 = por %p126, %p127
      %p130 = scmp.ne.s32.totalorder %s113, %s129
      %p131 = scmp.eq.s32.totalorder %s16, 0
      %p132 = por %p130, %p131
      %p133 = scmp.le.s32.totalorder 1, %s10
      %p134 = scmp.lt.s32.totalorder %s10, 3
      %p135 = pnand %p133, %p134
      %p136 = pneg %p135
      // Predicated region
      $region9: #{_lambda_.16} parent=5 // pred_check
        _
      $region10: #{_lambda_.16} parent=5 // pred_check_branch
        %138 = sbr.rel (%p135) target = $region12
      $region11: #{_lambda_.16} parent=5 // pred_region
        %s139 = ssub.s32 %s10, 1
        // Predicated region
        $region13: #{_lambda_.16} parent=11 // pred_check
          %p140 = pneg %p31
        $region14: #{_lambda_.16} parent=11 // pred_check_branch
          %142 = sbr.rel (%p140) target = $region16
        $region15: #{_lambda_.16} parent=11 // pred_region
          _
        $region16: #{_lambda_.16} parent=11 // pred_fallthru
          _
        // Predicated region
        $region17: #{_lambda_.16} parent=11 // pred_check
          %p143 = pneg %p52
        $region18: #{_lambda_.16} parent=11 // pred_check_branch
          %145 = sbr.rel (%p143) target = $region20
        $region19: #{_lambda_.16} parent=11 // pred_region
          _
        $region20: #{_lambda_.16} parent=11 // pred_fallthru
          _
        // Predicated region
        $region21: #{_lambda_.16} parent=11 // pred_check
          %p146 = pneg %p73
        $region22: #{_lambda_.16} parent=11 // pred_check_branch
          %148 = sbr.rel (%p146) target = $region24
        $region23: #{_lambda_.16} parent=11 // pred_region
          _
        $region24: #{_lambda_.16} parent=11 // pred_fallthru
          _
      $region12: #{_lambda_.16} parent=5 // pred_fallthru
        _
      %p149 = scmp.lt.s32.totalorder %s10, 2
      // Predicated region
      $region25: #{_lambda_.16} parent=5 // pred_check
        %p150 = pneg %p149
      $region26: #{_lambda_.16} parent=5 // pred_check_branch
        %152 = sbr.rel (%p150) target = $region28
      $region27: #{_lambda_.16} parent=5 // pred_region
        // Predicated region
        $region29: #{_lambda_.16} parent=27 // pred_check
          %p153 = pneg %p93
        $region30: #{_lambda_.16} parent=27 // pred_check_branch
          %155 = sbr.rel (%p153) target = $region32
        $region31: #{_lambda_.16} parent=27 // pred_region
          %s156 = sand.u32 %s83, 1
          %s157 = sand.u32 %s83, 1
          %s158 = smul.addr %s157, 432
          %s159 = scalar_lea.vmem [#allocation2], %s158
          %s160 = smul.u32 4, %s10
          %s161 = smul.addr %s160, 4
          %s162 = scalar_lea.vmem %s3, %s161
          // Predicated region
          $region33: #{_lambda_.16} parent=31 // pred_check
            _
          $region34: #{_lambda_.16} parent=31 // pred_check_branch
            %164 = sbr.rel (0) target = $region36
          $region35: #{_lambda_.16} parent=31 // pred_region
            // Predicated region
            $region37: #{_lambda_.16} parent=35 // pred_check
              _
            $region38: #{_lambda_.16} parent=35 // pred_check_branch
              %166 = sbr.rel (0) target = $region40
            $region39: #{_lambda_.16} parent=35 // pred_region
              loop: start=0, step=1, limit=1
              $region41: #{_lambda_.16} parent=39 // loop_pre_header
                _
              $region42: #{_lambda_.16} parent=39 // loop_header
                %s168 = sphi 0, %s172
                %p169 = scmp.ge.s32.totalorder %s168, 1
                %s173 = sphi %s162, %s162
                %s174 = sphi %s159, %s159
              $region43: #{_lambda_.16} parent=39 // loop_header_branch
                %171 = sbr.rel (%p169) target = $region47
              $region44: #{_lambda_.16} parent=39 // loop_body
                %v175 = vld [vmem:[%s173] sm:$0xff]
                %176 = vst [vmem:[%s174] sm:$0xff] %v175
                %v177 = vld [vmem:[%s173 + $0x8] sm:$0xff]
                %178 = vst [vmem:[%s174 + $0x8] sm:$0xff] %v177
                %v179 = vld [vmem:[%s173 + $0x20] sm:$0xff]
                %180 = vst [vmem:[%s174 + $0x10] sm:$0xff] %v179
                %v181 = vld [vmem:[%s173 + $0x28] sm:$0xff]
                %182 = vst [vmem:[%s174 + $0x18] sm:$0xff] %v181
                %v183 = vld [vmem:[%s173 + $0x40] sm:$0xff]
                %184 = vst [vmem:[%s174 + $0x20] sm:$0xff] %v183
                %v185 = vld [vmem:[%s173 + $0x48] sm:$0xff]
                %186 = vst [vmem:[%s174 + $0x28] sm:$0xff] %v185
                %v187 = vld [vmem:[%s173 + $0x60] sm:$0xff]
                %188 = vst [vmem:[%s174 + $0x30] sm:$0xff] %v187
                %v189 = vld [vmem:[%s173 + $0x68] sm:$0xff]
                %190 = vst [vmem:[%s174 + $0x38] sm:$0xff] %v189
                %v191 = vld [vmem:[%s173 + $0x80] sm:$0xff]
                %192 = vst [vmem:[%s174 + $0x40] sm:$0xff] %v191
                %v193 = vld [vmem:[%s173 + $0x88] sm:$0xff]
                %194 = vst [vmem:[%s174 + $0x48] sm:$0xff] %v193
                %v195 = vld [vmem:[%s173 + $0xa0] sm:$0xff]
                %196 = vst [vmem:[%s174 + $0x50] sm:$0xff] %v195
                %v197 = vld [vmem:[%s173 + $0xa8] sm:$0xff]
                %198 = vst [vmem:[%s174 + $0x58] sm:$0xff] %v197
                %v199 = vld [vmem:[%s173 + $0xc0] sm:$0xff]
                %200 = vst [vmem:[%s174 + $0x60] sm:$0xff] %v199
                %v201 = vld [vmem:[%s173 + $0xc8] sm:$0xff]
                %202 = vst [vmem:[%s174 + $0x68] sm:$0xff] %v201
                %v203 = vld [vmem:[%s173 + $0xe0] sm:$0xff]
                %204 = vst [vmem:[%s174 + $0x70] sm:$0xff] %v203
                %v205 = vld [vmem:[%s173 + $0xe8] sm:$0xff]
                %206 = vst [vmem:[%s174 + $0x78] sm:$0xff] %v205
                %v207 = vld [vmem:[%s173 + $0x100] sm:$0xff]
                %208 = vst [vmem:[%s174 + $0x80] sm:$0xff] %v207
                %v209 = vld [vmem:[%s173 + $0x108] sm:$0xff]
                %210 = vst [vmem:[%s174 + $0x88] sm:$0xff] %v209
                %v211 = vld [vmem:[%s173 + $0x120] sm:$0xff]
                %212 = vst [vmem:[%s174 + $0x90] sm:$0xff] %v211
                %v213 = vld [vmem:[%s173 + $0x128] sm:$0xff]
                %214 = vst [vmem:[%s174 + $0x98] sm:$0xff] %v213
                %v215 = vld [vmem:[%s173 + $0x140] sm:$0xff]
                %216 = vst [vmem:[%s174 + $0xa0] sm:$0xff] %v215
                %v217 = vld [vmem:[%s173 + $0x148] sm:$0xff]
                %218 = vst [vmem:[%s174 + $0xa8] sm:$0xff] %v217
                %v219 = vld [vmem:[%s173 + $0x160] sm:$0xff]
                %220 = vst [vmem:[%s174 + $0xb0] sm:$0xff] %v219
                %v221 = vld [vmem:[%s173 + $0x168] sm:$0xff]
                %222 = vst [vmem:[%s174 + $0xb8] sm:$0xff] %v221
                %v223 = vld [vmem:[%s173 + $0x180] sm:$0xff]
                %224 = vst [vmem:[%s174 + $0xc0] sm:$0xff] %v223
                %v225 = vld [vmem:[%s173 + $0x188] sm:$0xff]
                %226 = vst [vmem:[%s174 + $0xc8] sm:$0xff] %v225
                %v227 = vld [vmem:[%s173 + $0x1a0] sm:$0xff]
                %228 = vst [vmem:[%s174 + $0xd0] sm:$0xff] %v227
                %v229 = vld [vmem:[%s173 + $0x1a8] sm:$0xff]
                %230 = vst [vmem:[%s174 + $0xd8] sm:$0xff] %v229
                %v231 = vld [vmem:[%s173 + $0x1c0] sm:$0xff]
                %232 = vst [vmem:[%s174 + $0xe0] sm:$0xff] %v231
                %v233 = vld [vmem:[%s173 + $0x1c8] sm:$0xff]
                %234 = vst [vmem:[%s174 + $0xe8] sm:$0xff] %v233
                %v235 = vld [vmem:[%s173 + $0x1e0] sm:$0xff]
                %236 = vst [vmem:[%s174 + $0xf0] sm:$0xff] %v235
                %v237 = vld [vmem:[%s173 + $0x1e8] sm:$0xff]
                %238 = vst [vmem:[%s174 + $0xf8] sm:$0xff] %v237
                %v239 = vld [vmem:[%s173 + $0x200] sm:$0xff]
                %240 = vst [vmem:[%s174 + $0x100] sm:$0xff] %v239
                %v241 = vld [vmem:[%s173 + $0x208] sm:$0xff]
                %242 = vst [vmem:[%s174 + $0x108] sm:$0xff] %v241
                %v243 = vld [vmem:[%s173 + $0x220] sm:$0xff]
                %244 = vst [vmem:[%s174 + $0x110] sm:$0xff] %v243
                %v245 = vld [vmem:[%s173 + $0x228] sm:$0xff]
                %246 = vst [vmem:[%s174 + $0x118] sm:$0xff] %v245
                %v247 = vld [vmem:[%s173 + $0x240] sm:$0xff]
                %248 = vst [vmem:[%s174 + $0x120] sm:$0xff] %v247
                %v249 = vld [vmem:[%s173 + $0x248] sm:$0xff]
                %250 = vst [vmem:[%s174 + $0x128] sm:$0xff] %v249
                %v251 = vld [vmem:[%s173 + $0x260] sm:$0xff]
                %252 = vst [vmem:[%s174 + $0x130] sm:$0xff] %v251
                %v253 = vld [vmem:[%s173 + $0x268] sm:$0xff]
                %254 = vst [vmem:[%s174 + $0x138] sm:$0xff] %v253
                %v255 = vld [vmem:[%s173 + $0x280] sm:$0xff]
                %256 = vst [vmem:[%s174 + $0x140] sm:$0xff] %v255
                %v257 = vld [vmem:[%s173 + $0x288] sm:$0xff]
                %258 = vst [vmem:[%s174 + $0x148] sm:$0xff] %v257
                %v259 = vld [vmem:[%s173 + $0x2a0] sm:$0xff]
                %260 = vst [vmem:[%s174 + $0x150] sm:$0xff] %v259
                %v261 = vld [vmem:[%s173 + $0x2a8] sm:$0xff]
                %262 = vst [vmem:[%s174 + $0x158] sm:$0xff] %v261
                %v263 = vld [vmem:[%s173 + $0x2c0] sm:$0xff]
                %264 = vst [vmem:[%s174 + $0x160] sm:$0xff] %v263
                %v265 = vld [vmem:[%s173 + $0x2c8] sm:$0xff]
                %266 = vst [vmem:[%s174 + $0x168] sm:$0xff] %v265
                %v267 = vld [vmem:[%s173 + $0x2e0] sm:$0xff]
                %268 = vst [vmem:[%s174 + $0x170] sm:$0xff] %v267
                %v269 = vld [vmem:[%s173 + $0x2e8] sm:$0xff]
                %270 = vst [vmem:[%s174 + $0x178] sm:$0xff] %v269
                %v271 = vld [vmem:[%s173 + $0x300] sm:$0xff]
                %272 = vst [vmem:[%s174 + $0x180] sm:$0xff] %v271
                %v273 = vld [vmem:[%s173 + $0x308] sm:$0xff]
                %274 = vst [vmem:[%s174 + $0x188] sm:$0xff] %v273
                %v275 = vld [vmem:[%s173 + $0x320] sm:$0xff]
                %276 = vst [vmem:[%s174 + $0x190] sm:$0xff] %v275
                %v277 = vld [vmem:[%s173 + $0x328] sm:$0xff]
                %278 = vst [vmem:[%s174 + $0x198] sm:$0xff] %v277
                %v279 = vld [vmem:[%s173 + $0x340] sm:$0xff]
                %280 = vst [vmem:[%s174 + $0x1a0] sm:$0xff] %v279
                %v281 = vld [vmem:[%s173 + $0x348] sm:$0xff]
                %282 = vst [vmem:[%s174 + $0x1a8] sm:$0xff] %v281
              $region45: #{_lambda_.16} parent=39 // loop_footer
                %s172 = sadd.s32 1, %s168
              $region46: #{_lambda_.16} parent=39 // loop_footer_branch
                %167 = sbr.rel target = $region42
              $region47: #{_lambda_.16} parent=39 // loop_exit
                _
            $region40: #{_lambda_.16} parent=35 // pred_fallthru
              _
            // Predicated region
            $region48: #{_lambda_.16} parent=35 // pred_check
              _
            $region49: #{_lambda_.16} parent=35 // pred_check_branch
              %284 = sbr.rel target = $region51
            $region50: #{_lambda_.16} parent=35 // pred_region
              _
            $region51: #{_lambda_.16} parent=35 // pred_fallthru
              _
          $region36: #{_lambda_.16} parent=31 // pred_fallthru
            _
          %285 = vnop
        $region32: #{_lambda_.16} parent=27 // pred_fallthru
          _
      $region28: #{_lambda_.16} parent=5 // pred_fallthru
        _
      %p286 = scmp.le.s32.totalorder 1, %s10
      %p287 = scmp.lt.s32.totalorder %s10, 3
      %p288 = pnand %p286, %p287
      %p289 = pneg %p288
      // Predicated region
      $region52: #{_lambda_.16} parent=5 // pred_check
        _
      $region53: #{_lambda_.16} parent=5 // pred_check_branch
        %291 = sbr.rel (%p288) target = $region55
      $region54: #{_lambda_.16} parent=5 // pred_region
        %s292 = ssub.s32 %s10, 1
        %s293 = sand.u32 %s86, 1
        %s294 = sand.u32 %s86, 1
        %s295 = smul.addr %s294, 432
        %s296 = scalar_lea.vmem [#allocation2], %s295
        // Predicated region
        $region56: #{_lambda_.16} parent=54 // pred_check
          %p297 = pneg %p99
        $region57: #{_lambda_.16} parent=54 // pred_check_branch
          %299 = sbr.rel (%p297) target = $region59
        $region58: #{_lambda_.16} parent=54 // pred_region
          _
        $region59: #{_lambda_.16} parent=54 // pred_fallthru
          _
        %p300 = pneg %p31
        %p301 = pneg %p28
        %p302 = pneg %p52
        %p303 = pneg %p49
        %p304 = pneg %p73
        %p305 = pneg %p70
        %s306 = sand.u32 %s86, 1
        %s307 = sand.u32 %s86, 1
        %s308 = smul.addr %s307, 432
        %s309 = scalar_lea.vmem [#allocation2], %s308
        %p310 = pneg %p99
        %p311 = pneg %p96
        %p312 = pneg %p125
        %p313 = pneg %p122
        %s314 = smul.u32 4, %s15
        %p315 = scmp.lt.s32.totalorder %s314, 7
        %s316 = scalar_select %p315, %s314, 7
        %s317 = smul.addr %s316, 8
        %s318 = scalar_lea.vmem %s4, %s317
        %s319 = smul.u32 4, %s15
        %s320 = smul.u32 4, %s15
        %p321 = scmp.lt.s32.totalorder %s320, 7
        %s322 = scalar_select %p321, %s320, 7
        %s323 = smul.addr %s322, 8
        %s324 = scalar_lea.vmem %s4, %s323
        %s325 = smul.u32 4, %s15
        %v327 = vld [vmem:[%s0] sm:$0xff]
        %v328 = vld [vmem:[%s296] sm:$0xff]
        %v329 = vld [vmem:[%s296 + $0x8] sm:$0xff]
        %v330 = vld [vmem:[%s296 + $0x10] sm:$0xff]
        %v331 = vld [vmem:[%s296 + $0x18] sm:$0xff]
        %v332 = vld [vmem:[%s296 + $0x20] sm:$0xff]
        %v333 = vld [vmem:[%s296 + $0x28] sm:$0xff]
        %v334 = vld [vmem:[%s296 + $0x30] sm:$0xff]
        %v335 = vld [vmem:[%s296 + $0x38] sm:$0xff]
        %v336 = vld [vmem:[%s296 + $0x40] sm:$0xff]
        %v337 = vld [vmem:[%s296 + $0x48] sm:$0xff]
        %v338 = vld [vmem:[%s296 + $0x50] sm:$0xff]
        %v339 = vld [vmem:[%s296 + $0x58] sm:$0xff]
        %v340 = vld [vmem:[%s296 + $0x60] sm:$0xff]
        %v341 = vld [vmem:[%s296 + $0x68] sm:$0xff]
        %v342 = vld [vmem:[%s296 + $0x70] sm:$0xff]
        %v343 = vld [vmem:[%s296 + $0x78] sm:$0xff]
        %v344 = vld [vmem:[%s296 + $0x80] sm:$0xff]
        %v345 = vld [vmem:[%s296 + $0x88] sm:$0xff]
        %v346 = vld [vmem:[%s296 + $0x90] sm:$0xff]
        %v347 = vld [vmem:[%s296 + $0x98] sm:$0xff]
        %v348 = vld [vmem:[%s296 + $0xa0] sm:$0xff]
        %v349 = vld [vmem:[%s296 + $0xa8] sm:$0xff]
        %v350 = vld [vmem:[%s296 + $0xb0] sm:$0xff]
        %v351 = vld [vmem:[%s296 + $0xb8] sm:$0xff]
        %v352 = vld [vmem:[%s296 + $0xc0] sm:$0xff]
        %v353 = vld [vmem:[%s296 + $0xc8] sm:$0xff]
        %v354 = vld [vmem:[%s296 + $0xd0] sm:$0xff]
        %v355 = vld [vmem:[%s296 + $0xd8] sm:$0xff]
        %v356 = vld [vmem:[%s296 + $0xe0] sm:$0xff]
        %v357 = vld [vmem:[%s296 + $0xe8] sm:$0xff]
        %v358 = vld [vmem:[%s296 + $0xf0] sm:$0xff]
        %v359 = vld [vmem:[%s296 + $0xf8] sm:$0xff]
        %v360 = vld [vmem:[%s296 + $0x100] sm:$0xff]
        %v361 = vld [vmem:[%s296 + $0x108] sm:$0xff]
        %v362 = vld [vmem:[%s296 + $0x110] sm:$0xff]
        %v363 = vld [vmem:[%s296 + $0x118] sm:$0xff]
        %v364 = vld [vmem:[%s296 + $0x120] sm:$0xff]
        %v365 = vld [vmem:[%s296 + $0x128] sm:$0xff]
        %v366 = vld [vmem:[%s296 + $0x130] sm:$0xff]
        %v367 = vld [vmem:[%s296 + $0x138] sm:$0xff]
        %v368 = vld [vmem:[%s296 + $0x140] sm:$0xff]
        %v369 = vld [vmem:[%s296 + $0x148] sm:$0xff]
        %v370 = vld [vmem:[%s296 + $0x150] sm:$0xff]
        %v371 = vld [vmem:[%s296 + $0x158] sm:$0xff]
        %v372 = vld [vmem:[%s296 + $0x160] sm:$0xff]
        %v373 = vld [vmem:[%s296 + $0x168] sm:$0xff]
        %v374 = vld [vmem:[%s296 + $0x170] sm:$0xff]
        %v375 = vld [vmem:[%s296 + $0x178] sm:$0xff]
        %v376 = vld [vmem:[%s296 + $0x180] sm:$0xff]
        %v377 = vld [vmem:[%s296 + $0x188] sm:$0xff]
        %v378 = vld [vmem:[%s296 + $0x190] sm:$0xff]
        %v379 = vld [vmem:[%s296 + $0x198] sm:$0xff]
        %v380 = vld [vmem:[%s296 + $0x1a0] sm:$0xff]
        %v381 = vld [vmem:[%s296 + $0x1a8] sm:$0xff]
        %v383 = vunpack.c.l.b16 %v327
        %v384 = vunpack.c.h.b16 %v327
        %v385 = vpack.c.b16 %v383, %v383
        %v386 = vpack.c.b16 %v384, %v384
        %v442 = vunpack.c.l.b16 %v328
        %v443 = vunpack.c.h.b16 %v328
        %v444 = vunpack.c.l.b16 %v329
        %v445 = vunpack.c.h.b16 %v329
        %v446 = vunpack.c.l.b16 %v330
        %v447 = vunpack.c.h.b16 %v330
        %v448 = vunpack.c.l.b16 %v331
        %v449 = vunpack.c.h.b16 %v331
        %v450 = vunpack.c.l.b16 %v332
        %v451 = vunpack.c.h.b16 %v332
        %v452 = vunpack.c.l.b16 %v333
        %v453 = vunpack.c.h.b16 %v333
        %v454 = vunpack.c.l.b16 %v334
        %v455 = vunpack.c.h.b16 %v334
        %v456 = vunpack.c.l.b16 %v335
        %v457 = vunpack.c.h.b16 %v335
        %v458 = vunpack.c.l.b16 %v336
        %v459 = vunpack.c.h.b16 %v336
        %v460 = vunpack.c.l.b16 %v337
        %v461 = vunpack.c.h.b16 %v337
        %v462 = vunpack.c.l.b16 %v338
        %v463 = vunpack.c.h.b16 %v338
        %v464 = vunpack.c.l.b16 %v339
        %v465 = vunpack.c.h.b16 %v339
        %v466 = vunpack.c.l.b16 %v340
        %v467 = vunpack.c.h.b16 %v340
        %v468 = vunpack.c.l.b16 %v341
        %v469 = vunpack.c.h.b16 %v341
        %v470 = vunpack.c.l.b16 %v342
        %v471 = vunpack.c.h.b16 %v342
        %v472 = vunpack.c.l.b16 %v343
        %v473 = vunpack.c.h.b16 %v343
        %v474 = vunpack.c.l.b16 %v344
        %v475 = vunpack.c.h.b16 %v344
        %v476 = vunpack.c.l.b16 %v345
        %v477 = vunpack.c.h.b16 %v345
        %v478 = vunpack.c.l.b16 %v346
        %v479 = vunpack.c.h.b16 %v346
        %v480 = vunpack.c.l.b16 %v347
        %v481 = vunpack.c.h.b16 %v347
        %v482 = vunpack.c.l.b16 %v348
        %v483 = vunpack.c.h.b16 %v348
        %v484 = vunpack.c.l.b16 %v349
        %v485 = vunpack.c.h.b16 %v349
        %v486 = vunpack.c.l.b16 %v350
        %v487 = vunpack.c.h.b16 %v350
        %v488 = vunpack.c.l.b16 %v351
        %v489 = vunpack.c.h.b16 %v351
        %v490 = vunpack.c.l.b16 %v352
        %v491 = vunpack.c.h.b16 %v352
        %v492 = vunpack.c.l.b16 %v353
        %v493 = vunpack.c.h.b16 %v353
        %v494 = vunpack.c.l.b16 %v354
        %v495 = vunpack.c.h.b16 %v354
        %v496 = vunpack.c.l.b16 %v355
        %v497 = vunpack.c.h.b16 %v355
        %v498 = vunpack.c.l.b16 %v356
        %v499 = vunpack.c.h.b16 %v356
        %v500 = vunpack.c.l.b16 %v357
        %v501 = vunpack.c.h.b16 %v357
        %v502 = vunpack.c.l.b16 %v358
        %v503 = vunpack.c.h.b16 %v358
        %v504 = vunpack.c.l.b16 %v359
        %v505 = vunpack.c.h.b16 %v359
        %v506 = vunpack.c.l.b16 %v360
        %v507 = vunpack.c.h.b16 %v360
        %v508 = vunpack.c.l.b16 %v361
        %v509 = vunpack.c.h.b16 %v361
        %v510 = vunpack.c.l.b16 %v362
        %v511 = vunpack.c.h.b16 %v362
        %v512 = vunpack.c.l.b16 %v363
        %v513 = vunpack.c.h.b16 %v363
        %v514 = vunpack.c.l.b16 %v364
        %v515 = vunpack.c.h.b16 %v364
        %v516 = vunpack.c.l.b16 %v365
        %v517 = vunpack.c.h.b16 %v365
        %v518 = vunpack.c.l.b16 %v366
        %v519 = vunpack.c.h.b16 %v366
        %v520 = vunpack.c.l.b16 %v367
        %v521 = vunpack.c.h.b16 %v367
        %v522 = vunpack.c.l.b16 %v368
        %v523 = vunpack.c.h.b16 %v368
        %v524 = vunpack.c.l.b16 %v369
        %v525 = vunpack.c.h.b16 %v369
        %v526 = vunpack.c.l.b16 %v370
        %v527 = vunpack.c.h.b16 %v370
        %v528 = vunpack.c.l.b16 %v371
        %v529 = vunpack.c.h.b16 %v371
        %v530 = vunpack.c.l.b16 %v372
        %v531 = vunpack.c.h.b16 %v372
        %v532 = vunpack.c.l.b16 %v373
        %v533 = vunpack.c.h.b16 %v373
        %v534 = vunpack.c.l.b16 %v374
        %v535 = vunpack.c.h.b16 %v374
        %v536 = vunpack.c.l.b16 %v375
        %v537 = vunpack.c.h.b16 %v375
        %v538 = vunpack.c.l.b16 %v376
        %v539 = vunpack.c.h.b16 %v376
        %v540 = vunpack.c.l.b16 %v377
        %v541 = vunpack.c.h.b16 %v377
        %v542 = vunpack.c.l.b16 %v378
        %v543 = vunpack.c.h.b16 %v378
        %v544 = vunpack.c.l.b16 %v379
        %v545 = vunpack.c.h.b16 %v379
        %v546 = vunpack.c.l.b16 %v380
        %v547 = vunpack.c.h.b16 %v380
        %v548 = vunpack.c.l.b16 %v381
        %v549 = vunpack.c.h.b16 %v381
        %v550 = vpack.c.b16 %v446, %v442
        %v551 = vpack.c.b16 %v447, %v443
        %v552 = vpack.c.b16 %v448, %v444
        %v553 = vpack.c.b16 %v449, %v445
        %v554 = vpack.c.b16 %v454, %v450
        %v555 = vpack.c.b16 %v455, %v451
        %v556 = vpack.c.b16 %v456, %v452
        %v557 = vpack.c.b16 %v457, %v453
        %v558 = vpack.c.b16 %v462, %v458
        %v559 = vpack.c.b16 %v463, %v459
        %v560 = vpack.c.b16 %v464, %v460
        %v561 = vpack.c.b16 %v465, %v461
        %v562 = vpack.c.b16 %v470, %v466
        %v563 = vpack.c.b16 %v471, %v467
        %v564 = vpack.c.b16 %v472, %v468
        %v565 = vpack.c.b16 %v473, %v469
        %v566 = vpack.c.b16 %v478, %v474
        %v567 = vpack.c.b16 %v479, %v475
        %v568 = vpack.c.b16 %v480, %v476
        %v569 = vpack.c.b16 %v481, %v477
        %v570 = vpack.c.b16 %v486, %v482
        %v571 = vpack.c.b16 %v487, %v483
        %v572 = vpack.c.b16 %v488, %v484
        %v573 = vpack.c.b16 %v489, %v485
        %v574 = vpack.c.b16 %v494, %v490
        %v575 = vpack.c.b16 %v495, %v491
        %v576 = vpack.c.b16 %v496, %v492
        %v577 = vpack.c.b16 %v497, %v493
        %v578 = vpack.c.b16 %v502, %v498
        %v579 = vpack.c.b16 %v503, %v499
        %v580 = vpack.c.b16 %v504, %v500
        %v581 = vpack.c.b16 %v505, %v501
        %v582 = vpack.c.b16 %v510, %v506
        %v583 = vpack.c.b16 %v511, %v507
        %v584 = vpack.c.b16 %v512, %v508
        %v585 = vpack.c.b16 %v513, %v509
        %v586 = vpack.c.b16 %v518, %v514
        %v587 = vpack.c.b16 %v519, %v515
        %v588 = vpack.c.b16 %v520, %v516
        %v589 = vpack.c.b16 %v521, %v517
        %v590 = vpack.c.b16 %v526, %v522
        %v591 = vpack.c.b16 %v527, %v523
        %v592 = vpack.c.b16 %v528, %v524
        %v593 = vpack.c.b16 %v529, %v525
        %v594 = vpack.c.b16 %v534, %v530
        %v595 = vpack.c.b16 %v535, %v531
        %v596 = vpack.c.b16 %v536, %v532
        %v597 = vpack.c.b16 %v537, %v533
        %v598 = vpack.c.b16 %v542, %v538
        %v599 = vpack.c.b16 %v543, %v539
        %v600 = vpack.c.b16 %v544, %v540
        %v601 = vpack.c.b16 %v545, %v541
        %v602 = vpack.c.b16 %v546, %v546
        %v603 = vpack.c.b16 %v547, %v547
        %v604 = vpack.c.b16 %v548, %v548
        %v605 = vpack.c.b16 %v549, %v549
        %vm658 = vcmask 719872
        %v660 = vsel %vm658, %v386, 0
        %vm662 = vcmask 1043456
        %v664 = vsel %vm662, %v602, 0
        %v667 = vsel %vm662, %v603, 0
        %v670 = vsel %vm662, %v604, 0
        %v673 = vsel %vm662, %v605, 0
        %675 = vmatprep.subr.bf16.mxu0 %v551
        %676 = vmatpush1.bf16.msra.mxu0 %v550
        %677 = vmatprep.subr.bf16.mxu0 %v555
        %678 = vmatpush1.bf16.msra.mxu0 %v554
        %679 = vmatprep.subr.bf16.mxu0 %v559
        %680 = vmatpush1.bf16.msra.mxu0 %v558
        %681 = vmatprep.subr.bf16.mxu0 %v563
        %682 = vmatpush1.bf16.msra.mxu0 %v562
        %683 = vmatprep.subr.bf16.mxu0 %v567
        %684 = vmatpush1.bf16.msra.mxu0 %v566
        %685 = vmatprep.subr.bf16.mxu0 %v571
        %686 = vmatpush1.bf16.msra.mxu0 %v570
        %687 = vmatprep.subr.bf16.mxu0 %v575
        %688 = vmatpush1.bf16.msra.mxu0 %v574
        %689 = vmatprep.subr.bf16.mxu0 %v579
        %690 = vmatpush1.bf16.msra.mxu0 %v578
        %691 = vmatprep.subr.bf16.mxu0 %v583
        %692 = vmatpush1.bf16.msra.mxu0 %v582
        %693 = vmatprep.subr.bf16.mxu0 %v587
        %694 = vmatpush1.bf16.msra.mxu0 %v586
        %695 = vmatprep.subr.bf16.mxu0 %v591
        %696 = vmatpush1.bf16.msra.mxu0 %v590
        %697 = vmatprep.subr.bf16.mxu0 %v595
        %698 = vmatpush1.bf16.msra.mxu0 %v594
        %699 = vmatprep.subr.bf16.mxu0 %v599
        %700 = vmatpush1.bf16.msra.mxu0 %v598
        %701 = vmatprep.subr.bf16.mxu0 %v667
        %702 = vmatpush1.bf16.msra.mxu0 %v664
        %703 = vmatprep.subr.bf16.mxu0 0
        %704 = vmatpush1.bf16.msra.mxu0 0
        %705 = vmatprep.subr.bf16.mxu0 0
        %706 = vmatpush1.bf16.msra.mxu0 0
        %707 = vmatprep.mubr.bf16.mxu0 %v660
        %708 = vmatmul.mubr.bf16.gmra.mrb[0].mxu0 %v385
        %v709 = vpop.f32.mrb[0].mxu0
        %v710 = vadd.f32 0.0, %v709
        %v711 = vpop.f32.mrb[0].mxu0
        %v712 = vadd.f32 0.0, %v711
        %v713 = vpop.f32.mrb[0].mxu0
        %v714 = vpop.f32.mrb[0].mxu0
        %715 = vdwg.mxu0
        %716 = vmatprep.subr.bf16.mxu0 %v553
        %717 = vmatpush1.bf16.msra.mxu0 %v552
        %718 = vmatprep.subr.bf16.mxu0 %v557
        %719 = vmatpush1.bf16.msra.mxu0 %v556
        %720 = vmatprep.subr.bf16.mxu0 %v561
        %721 = vmatpush1.bf16.msra.mxu0 %v560
        %722 = vmatprep.subr.bf16.mxu0 %v565
        %723 = vmatpush1.bf16.msra.mxu0 %v564
        %724 = vmatprep.subr.bf16.mxu0 %v569
        %725 = vmatpush1.bf16.msra.mxu0 %v568
        %726 = vmatprep.subr.bf16.mxu0 %v573
        %727 = vmatpush1.bf16.msra.mxu0 %v572
        %728 = vmatprep.subr.bf16.mxu0 %v577
        %729 = vmatpush1.bf16.msra.mxu0 %v576
        %730 = vmatprep.subr.bf16.mxu0 %v581
        %731 = vmatpush1.bf16.msra.mxu0 %v580
        %732 = vmatprep.subr.bf16.mxu0 %v585
        %733 = vmatpush1.bf16.msra.mxu0 %v584
        %734 = vmatprep.subr.bf16.mxu0 %v589
        %735 = vmatpush1.bf16.msra.mxu0 %v588
        %736 = vmatprep.subr.bf16.mxu0 %v593
        %737 = vmatpush1.bf16.msra.mxu0 %v592
        %738 = vmatprep.subr.bf16.mxu0 %v597
        %739 = vmatpush1.bf16.msra.mxu0 %v596
        %740 = vmatprep.subr.bf16.mxu0 %v601
        %741 = vmatpush1.bf16.msra.mxu0 %v600
        %742 = vmatprep.subr.bf16.mxu0 %v673
        %743 = vmatpush1.bf16.msra.mxu0 %v670
        %744 = vmatprep.subr.bf16.mxu0 0
        %745 = vmatpush1.bf16.msra.mxu0 0
        %746 = vmatprep.subr.bf16.mxu0 0
        %747 = vmatpush1.bf16.msra.mxu0 0
        %748 = vmatprep.mubr.bf16.mxu0 %v660
        %749 = vmatmul.mubr.bf16.gmra.mrb[0].mxu0 %v385
        %v750 = vpop.f32.mrb[0].mxu0
        %v751 = vadd.f32 0.0, %v750
        %v752 = vpop.f32.mrb[0].mxu0
        %v753 = vadd.f32 0.0, %v752
        %v754 = vpop.f32.mrb[0].mxu0
        %v755 = vpop.f32.mrb[0].mxu0
        %756 = vdwg.mxu0
        %v757 = vld [vmem:[%s1] sm:$0xff]
        %759 = vset.pattern.permute.xlu0 0
        %760 = vperm.xlu0 %759, %v757
        %v761 = vpop.permute.xlu0 %760
        %v763 = vmul.f32 %v710, %v761
        %v764 = vmul.f32 %v712, %v761
        %v765 = vmul.f32 %v751, %v761
        %v766 = vmul.f32 %v753, %v761
        %v767 = vld [vmem:[%s2] sm:$0xff]
        %769 = vset.pattern.permute.xlu0 0
        %770 = vperm.xlu0 %769, %v767
        %v771 = vpop.permute.xlu0 %770
        %v773 = vadd.f32 %v763, %v771
        %v774 = vadd.f32 %v764, %v771
        %v775 = vadd.f32 %v765, %v771
        %v776 = vadd.f32 %v766, %v771
        %v777 = vmax.f32 %v773, 0.0
        %v778 = vmax.f32 %v774, 0.0
        %v779 = vmax.f32 %v775, 0.0
        %v780 = vmax.f32 %v776, 0.0
        %781 = vst [vmem:[%s324] sm:$0xff] %v777
        %782 = vst [vmem:[%s324 + $0x8] sm:$0xff] %v778
        %783 = vst [vmem:[%s324 + $0x10] sm:$0xff] %v779
        %784 = vst [vmem:[%s324 + $0x18] sm:$0xff] %v780
        %s785 = smul.u32 4, %s15
        %p786 = scmp.lt.s32.totalorder %s785, 7
        %s787 = scalar_select %p786, %s785, 7
        %s788 = smul.addr %s787, 8
        %s789 = scalar_lea.vmem %s4, %s788
        // Predicated region
        $region60: #{_lambda_.16} parent=54 // pred_check
          %p790 = pneg %p122
        $region61: #{_lambda_.16} parent=54 // pred_check_branch
          %792 = sbr.rel (%p790) target = $region63
        $region62: #{_lambda_.16} parent=54 // pred_region
          %s793 = smul.u32 4, %s15
        $region63: #{_lambda_.16} parent=54 // pred_fallthru
          _
      $region55: #{_lambda_.16} parent=5 // pred_fallthru
        _
      %p794 = scmp.le.s32.totalorder 2, %s10
      // Predicated region
      $region64: #{_lambda_.16} parent=5 // pred_check
        %p795 = pneg %p794
      $region65: #{_lambda_.16} parent=5 // pred_check_branch
        %797 = sbr.rel (%p795) target = $region67
      $region66: #{_lambda_.16} parent=5 // pred_region
        %s798 = ssub.s32 %s10, 2
        // Predicated region
        $region68: #{_lambda_.16} parent=66 // pred_check
          %p799 = pneg %p128
        $region69: #{_lambda_.16} parent=66 // pred_check_branch
          %801 = sbr.rel (%p799) target = $region71
        $region70: #{_lambda_.16} parent=66 // pred_region
          %s802 = smul.u32 4, %s16
          %p803 = scmp.lt.s32.totalorder %s802, 7
          %s804 = scalar_select %p803, %s802, 7
          %s805 = smul.addr %s804, 8
          %s806 = scalar_lea.vmem %s4, %s805
        $region71: #{_lambda_.16} parent=66 // pred_fallthru
          _
      $region67: #{_lambda_.16} parent=5 // pred_fallthru
        _
    $region6: #{_lambda_.16} parent=1 // loop_footer
      %s14 = sadd.s32 1, %s10
    $region7: #{_lambda_.16} parent=1 // loop_footer_branch
      %9 = sbr.rel target = $region3
    $region8: #{_lambda_.16} parent=1 // loop_exit
      _

// kernel: _lambda_.17
$region0: #{_lambda_.17}
  #allocation0 [shape = 'u32[]', space=smem, size = 0x4, offset = 0x4, fixed_abs, tag = 'smem constant byte address 0x4 - core index']
  #allocation1 [shape = 'u32[144,128]{1,0:T(1,128)}', space=vmem, size = 0x12000, scoped, tag = 'internal scratch']
  %s0 = inlined_call_operand.vmem [shape: bf16[8,216], index: 0, kind: input, shape index: {}]
  %s1 = inlined_call_operand.vmem [shape: f32[8,1], index: 1, kind: input, shape index: {}]
  %s2 = inlined_call_operand.vmem [shape: f32[8,1], index: 2, kind: input, shape index: {}]
  %s3 = inlined_call_operand.vmem [shape: bf16[216,1024], index: 3, kind: input, shape index: {}]
  %s4 = inlined_call_operand.vmem [shape: f32[8,1024], index: 4, kind: input, shape index: {}]
  %s5 = inlined_call_operand.vmem [shape: f32[8,1024], index: 5, kind: output, shape index: {}]
  %s6 = sld [smem:[#allocation0]]
  $region76: #{_lambda_.17} parent=0
    _
  %s8 = ssub.s32 1, %s6
  %s9 = scalar_select 0, %s8, %s6
  $region1: #{_lambda_.17} parent=0
    #allocation2 [shape = 'u8[442368]{0}', space=vmem, size = 0x6c000, scoped, tag = 'input window, operand 3']
    loop: start=0, step=1, limit=4
    $region2: #{_lambda_.17} parent=1 // loop_pre_header
      _
    $region3: #{_lambda_.17} parent=1 // loop_header
      %s11 = sphi 0, %s15
      %p12 = scmp.ge.s32.totalorder %s11, 4
      %s19 = sphi 0, %s19
      %s21 = sphi 0, %s19
      %s22 = sphi 0, %s21
      %s36 = sphi 0, %s22
      %s40 = sphi 0, %s40
      %s42 = sphi 0, %s40
      %s43 = sphi 0, %s42
      %s57 = sphi 0, %s43
      %s61 = sphi 0, %s61
      %s63 = sphi 0, %s61
      %s64 = sphi 0, %s63
      %s78 = sphi 0, %s64
      %s84 = sphi 0, %s86
      %s87 = sphi 0, %s84
      %s88 = sphi 0, %s87
      %s104 = sphi 0, %s88
      %s110 = sphi 0, %s112
      %s113 = sphi 0, %s110
      %s114 = sphi 0, %s113
      %s130 = sphi 0, %s114
      %s136 = sphi 0, %s138
      %s139 = sphi 0, %s136
      %s140 = sphi 0, %s139
      %s156 = sphi 0, %s140
    $region4: #{_lambda_.17} parent=1 // loop_header_branch
      %14 = sbr.rel (%p12) target = $region8
    $region5: #{_lambda_.17} parent=1 // loop_body
      %s16 = ssub.s32 %s11, 1
      %s17 = ssub.s32 %s11, 2
      %s18 = sadd.s32 %s11, 1
      %s20 = sadd.s32 %s19, 1
      %p23 = scmp.eq.s32.totalorder %s11, 1
      %p24 = scmp.ne.s32.totalorder %s19, %s21
      %p25 = scmp.eq.s32.totalorder %s11, 0
      %p26 = por %p24, %p25
      %p27 = scmp.ne.s32.totalorder %s19, %s21
      %p28 = scmp.eq.s32.totalorder %s16, 1
      %p29 = por %p27, %p28
      %p30 = scmp.ne.s32.totalorder %s21, %s22
      %p31 = scmp.eq.s32.totalorder %s16, 0
      %p32 = por %p30, %p31
      %p33 = scmp.ne.s32.totalorder %s21, %s22
      %p34 = scmp.eq.s32.totalorder %s17, 1
      %p35 = por %p33, %p34
      %p37 = scmp.ne.s32.totalorder %s22, %s36
      %p38 = scmp.eq.s32.totalorder %s17, 0
      %p39 = por %p37, %p38
      %s41 = sadd.s32 %s40, 1
      %p44 = scmp.eq.s32.totalorder %s11, 1
      %p45 = scmp.ne.s32.totalorder %s40, %s42
      %p46 = scmp.eq.s32.totalorder %s11, 0
      %p47 = por %p45, %p46
      %p48 = scmp.ne.s32.totalorder %s40, %s42
      %p49 = scmp.eq.s32.totalorder %s16, 1
      %p50 = por %p48, %p49
      %p51 = scmp.ne.s32.totalorder %s42, %s43
      %p52 = scmp.eq.s32.totalorder %s16, 0
      %p53 = por %p51, %p52
      %p54 = scmp.ne.s32.totalorder %s42, %s43
      %p55 = scmp.eq.s32.totalorder %s17, 1
      %p56 = por %p54, %p55
      %p58 = scmp.ne.s32.totalorder %s43, %s57
      %p59 = scmp.eq.s32.totalorder %s17, 0
      %p60 = por %p58, %p59
      %s62 = sadd.s32 %s61, 1
      %p65 = scmp.eq.s32.totalorder %s11, 1
      %p66 = scmp.ne.s32.totalorder %s61, %s63
      %p67 = scmp.eq.s32.totalorder %s11, 0
      %p68 = por %p66, %p67
      %p69 = scmp.ne.s32.totalorder %s61, %s63
      %p70 = scmp.eq.s32.totalorder %s16, 1
      %p71 = por %p69, %p70
      %p72 = scmp.ne.s32.totalorder %s63, %s64
      %p73 = scmp.eq.s32.totalorder %s16, 0
      %p74 = por %p72, %p73
      %p75 = scmp.ne.s32.totalorder %s63, %s64
      %p76 = scmp.eq.s32.totalorder %s17, 1
      %p77 = por %p75, %p76
      %p79 = scmp.ne.s32.totalorder %s64, %s78
      %p80 = scmp.eq.s32.totalorder %s17, 0
      %p81 = por %p79, %p80
      %s82 = ssub.s32 %s11, %s18
      %p83 = scmp.eq.s32.totalorder %s82, 0
      %s85 = sadd.s32 %s84, 1
      %s86 = scalar_select %p83, %s84, %s85
      %p89 = pneg %p83
      %p90 = scmp.eq.s32.totalorder %s11, 1
      %p91 = por %p89, %p90
      %p92 = scmp.ne.s32.totalorder %s84, %s87
      %p93 = scmp.eq.s32.totalorder %s11, 0
      %p94 = por %p92, %p93
      %p95 = scmp.ne.s32.totalorder %s84, %s87
      %p96 = scmp.eq.s32.totalorder %s16, 1
      %p97 = por %p95, %p96
      %p98 = scmp.ne.s32.totalorder %s87, %s88
      %p99 = scmp.eq.s32.totalorder %s16, 0
      %p100 = por %p98, %p99
      %p101 = scmp.ne.s32.totalorder %s87, %s88
      %p102 = scmp.eq.s32.totalorder %s17, 1
      %p103 = por %p101, %p102
      %p105 = scmp.ne.s32.totalorder %s88, %s104
      %p106 = scmp.eq.s32.totalorder %s17, 0
      %p107 = por %p105, %p106
      %s108 = ssub.s32 %s11, %s18
      %p109 = scmp.eq.s32.totalorder %s108, 0
      %s111 = sadd.s32 %s110, 1
      %s112 = scalar_select %p109, %s110, %s111
      %p115 = pneg %p109
      %p116 = scmp.eq.s32.totalorder %s11, 1
      %p117 = por %p115, %p116
      %p118 = scmp.ne.s32.totalorder %s110, %s113
      %p119 = scmp.eq.s32.totalorder %s11, 0
      %p120 = por %p118, %p119
      %p121 = scmp.ne.s32.totalorder %s110, %s113
      %p122 = scmp.eq.s32.totalorder %s16, 1
      %p123 = por %p121, %p122
      %p124 = scmp.ne.s32.totalorder %s113, %s114
      %p125 = scmp.eq.s32.totalorder %s16, 0
      %p126 = por %p124, %p125
      %p127 = scmp.ne.s32.totalorder %s113, %s114
      %p128 = scmp.eq.s32.totalorder %s17, 1
      %p129 = por %p127, %p128
      %p131 = scmp.ne.s32.totalorder %s114, %s130
      %p132 = scmp.eq.s32.totalorder %s17, 0
      %p133 = por %p131, %p132
      %s134 = ssub.s32 %s11, %s18
      %p135 = scmp.eq.s32.totalorder %s134, 0
      %s137 = sadd.s32 %s136, 1
      %s138 = scalar_select %p135, %s136, %s137
      %p141 = pneg %p135
      %p142 = scmp.eq.s32.totalorder %s11, 1
      %p143 = por %p141, %p142
      %p144 = scmp.ne.s32.totalorder %s136, %s139
      %p145 = scmp.eq.s32.totalorder %s11, 0
      %p146 = por %p144, %p145
      %p147 = scmp.ne.s32.totalorder %s136, %s139
      %p148 = scmp.eq.s32.totalorder %s16, 1
      %p149 = por %p147, %p148
      %p150 = scmp.ne.s32.totalorder %s139, %s140
      %p151 = scmp.eq.s32.totalorder %s16, 0
      %p152 = por %p150, %p151
      %p153 = scmp.ne.s32.totalorder %s139, %s140
      %p154 = scmp.eq.s32.totalorder %s17, 1
      %p155 = por %p153, %p154
      %p157 = scmp.ne.s32.totalorder %s140, %s156
      %p158 = scmp.eq.s32.totalorder %s17, 0
      %p159 = por %p157, %p158
      %p160 = scmp.le.s32.totalorder 1, %s11
      %p161 = scmp.lt.s32.totalorder %s11, 3
      %p162 = pnand %p160, %p161
      %p163 = pneg %p162
      // Predicated region
      $region9: #{_lambda_.17} parent=5 // pred_check
        _
      $region10: #{_lambda_.17} parent=5 // pred_check_branch
        %165 = sbr.rel (%p162) target = $region12
      $region11: #{_lambda_.17} parent=5 // pred_region
        %s166 = ssub.s32 %s11, 1
        // Predicated region
        $region13: #{_lambda_.17} parent=11 // pred_check
          %p167 = pneg %p32
        $region14: #{_lambda_.17} parent=11 // pred_check_branch
          %169 = sbr.rel (%p167) target = $region16
        $region15: #{_lambda_.17} parent=11 // pred_region
          _
        $region16: #{_lambda_.17} parent=11 // pred_fallthru
          _
        // Predicated region
        $region17: #{_lambda_.17} parent=11 // pred_check
          %p170 = pneg %p53
        $region18: #{_lambda_.17} parent=11 // pred_check_branch
          %172 = sbr.rel (%p170) target = $region20
        $region19: #{_lambda_.17} parent=11 // pred_region
          _
        $region20: #{_lambda_.17} parent=11 // pred_fallthru
          _
        // Predicated region
        $region21: #{_lambda_.17} parent=11 // pred_check
          %p173 = pneg %p74
        $region22: #{_lambda_.17} parent=11 // pred_check_branch
          %175 = sbr.rel (%p173) target = $region24
        $region23: #{_lambda_.17} parent=11 // pred_region
          _
        $region24: #{_lambda_.17} parent=11 // pred_fallthru
          _
      $region12: #{_lambda_.17} parent=5 // pred_fallthru
        _
      %p176 = scmp.lt.s32.totalorder %s11, 2
      // Predicated region
      $region25: #{_lambda_.17} parent=5 // pred_check
        %p177 = pneg %p176
      $region26: #{_lambda_.17} parent=5 // pred_check_branch
        %179 = sbr.rel (%p177) target = $region28
      $region27: #{_lambda_.17} parent=5 // pred_region
        // Predicated region
        $region29: #{_lambda_.17} parent=27 // pred_check
          %p180 = pneg %p94
        $region30: #{_lambda_.17} parent=27 // pred_check_branch
          %182 = sbr.rel (%p180) target = $region32
        $region31: #{_lambda_.17} parent=27 // pred_region
          %s183 = sand.u32 %s84, 1
          %s184 = sand.u32 %s84, 1
          %s185 = smul.addr %s184, 432
          %s186 = scalar_lea.vmem [#allocation2], %s185
          %s187 = smul.u32 4, %s11
          %s188 = smul.addr %s187, 4
          %s189 = scalar_lea.vmem %s3, %s188
          // Predicated region
          $region33: #{_lambda_.17} parent=31 // pred_check
            _
          $region34: #{_lambda_.17} parent=31 // pred_check_branch
            %191 = sbr.rel (0) target = $region36
          $region35: #{_lambda_.17} parent=31 // pred_region
            // Predicated region
            $region37: #{_lambda_.17} parent=35 // pred_check
              _
            $region38: #{_lambda_.17} parent=35 // pred_check_branch
              %193 = sbr.rel (0) target = $region40
            $region39: #{_lambda_.17} parent=35 // pred_region
              loop: start=0, step=1, limit=1
              $region41: #{_lambda_.17} parent=39 // loop_pre_header
                _
              $region42: #{_lambda_.17} parent=39 // loop_header
                %s195 = sphi 0, %s199
                %p196 = scmp.ge.s32.totalorder %s195, 1
                %s200 = sphi %s189, %s189
                %s201 = sphi %s186, %s186
              $region43: #{_lambda_.17} parent=39 // loop_header_branch
                %198 = sbr.rel (%p196) target = $region47
              $region44: #{_lambda_.17} parent=39 // loop_body
                %v202 = vld [vmem:[%s200] sm:$0xff]
                %203 = vst [vmem:[%s201] sm:$0xff] %v202
                %v204 = vld [vmem:[%s200 + $0x8] sm:$0xff]
                %205 = vst [vmem:[%s201 + $0x8] sm:$0xff] %v204
                %v206 = vld [vmem:[%s200 + $0x20] sm:$0xff]
                %207 = vst [vmem:[%s201 + $0x10] sm:$0xff] %v206
                %v208 = vld [vmem:[%s200 + $0x28] sm:$0xff]
                %209 = vst [vmem:[%s201 + $0x18] sm:$0xff] %v208
                %v210 = vld [vmem:[%s200 + $0x40] sm:$0xff]
                %211 = vst [vmem:[%s201 + $0x20] sm:$0xff] %v210
                %v212 = vld [vmem:[%s200 + $0x48] sm:$0xff]
                %213 = vst [vmem:[%s201 + $0x28] sm:$0xff] %v212
                %v214 = vld [vmem:[%s200 + $0x60] sm:$0xff]
                %215 = vst [vmem:[%s201 + $0x30] sm:$0xff] %v214
                %v216 = vld [vmem:[%s200 + $0x68] sm:$0xff]
                %217 = vst [vmem:[%s201 + $0x38] sm:$0xff] %v216
                %v218 = vld [vmem:[%s200 + $0x80] sm:$0xff]
                %219 = vst [vmem:[%s201 + $0x40] sm:$0xff] %v218
                %v220 = vld [vmem:[%s200 + $0x88] sm:$0xff]
                %221 = vst [vmem:[%s201 + $0x48] sm:$0xff] %v220
                %v222 = vld [vmem:[%s200 + $0xa0] sm:$0xff]
                %223 = vst [vmem:[%s201 + $0x50] sm:$0xff] %v222
                %v224 = vld [vmem:[%s200 + $0xa8] sm:$0xff]
                %225 = vst [vmem:[%s201 + $0x58] sm:$0xff] %v224
                %v226 = vld [vmem:[%s200 + $0xc0] sm:$0xff]
                %227 = vst [vmem:[%s201 + $0x60] sm:$0xff] %v226
                %v228 = vld [vmem:[%s200 + $0xc8] sm:$0xff]
                %229 = vst [vmem:[%s201 + $0x68] sm:$0xff] %v228
                %v230 = vld [vmem:[%s200 + $0xe0] sm:$0xff]
                %231 = vst [vmem:[%s201 + $0x70] sm:$0xff] %v230
                %v232 = vld [vmem:[%s200 + $0xe8] sm:$0xff]
                %233 = vst [vmem:[%s201 + $0x78] sm:$0xff] %v232
                %v234 = vld [vmem:[%s200 + $0x100] sm:$0xff]
                %235 = vst [vmem:[%s201 + $0x80] sm:$0xff] %v234
                %v236 = vld [vmem:[%s200 + $0x108] sm:$0xff]
                %237 = vst [vmem:[%s201 + $0x88] sm:$0xff] %v236
                %v238 = vld [vmem:[%s200 + $0x120] sm:$0xff]
                %239 = vst [vmem:[%s201 + $0x90] sm:$0xff] %v238
                %v240 = vld [vmem:[%s200 + $0x128] sm:$0xff]
                %241 = vst [vmem:[%s201 + $0x98] sm:$0xff] %v240
                %v242 = vld [vmem:[%s200 + $0x140] sm:$0xff]
                %243 = vst [vmem:[%s201 + $0xa0] sm:$0xff] %v242
                %v244 = vld [vmem:[%s200 + $0x148] sm:$0xff]
                %245 = vst [vmem:[%s201 + $0xa8] sm:$0xff] %v244
                %v246 = vld [vmem:[%s200 + $0x160] sm:$0xff]
                %247 = vst [vmem:[%s201 + $0xb0] sm:$0xff] %v246
                %v248 = vld [vmem:[%s200 + $0x168] sm:$0xff]
                %249 = vst [vmem:[%s201 + $0xb8] sm:$0xff] %v248
                %v250 = vld [vmem:[%s200 + $0x180] sm:$0xff]
                %251 = vst [vmem:[%s201 + $0xc0] sm:$0xff] %v250
                %v252 = vld [vmem:[%s200 + $0x188] sm:$0xff]
                %253 = vst [vmem:[%s201 + $0xc8] sm:$0xff] %v252
                %v254 = vld [vmem:[%s200 + $0x1a0] sm:$0xff]
                %255 = vst [vmem:[%s201 + $0xd0] sm:$0xff] %v254
                %v256 = vld [vmem:[%s200 + $0x1a8] sm:$0xff]
                %257 = vst [vmem:[%s201 + $0xd8] sm:$0xff] %v256
                %v258 = vld [vmem:[%s200 + $0x1c0] sm:$0xff]
                %259 = vst [vmem:[%s201 + $0xe0] sm:$0xff] %v258
                %v260 = vld [vmem:[%s200 + $0x1c8] sm:$0xff]
                %261 = vst [vmem:[%s201 + $0xe8] sm:$0xff] %v260
                %v262 = vld [vmem:[%s200 + $0x1e0] sm:$0xff]
                %263 = vst [vmem:[%s201 + $0xf0] sm:$0xff] %v262
                %v264 = vld [vmem:[%s200 + $0x1e8] sm:$0xff]
                %265 = vst [vmem:[%s201 + $0xf8] sm:$0xff] %v264
                %v266 = vld [vmem:[%s200 + $0x200] sm:$0xff]
                %267 = vst [vmem:[%s201 + $0x100] sm:$0xff] %v266
                %v268 = vld [vmem:[%s200 + $0x208] sm:$0xff]
                %269 = vst [vmem:[%s201 + $0x108] sm:$0xff] %v268
                %v270 = vld [vmem:[%s200 + $0x220] sm:$0xff]
                %271 = vst [vmem:[%s201 + $0x110] sm:$0xff] %v270
                %v272 = vld [vmem:[%s200 + $0x228] sm:$0xff]
                %273 = vst [vmem:[%s201 + $0x118] sm:$0xff] %v272
                %v274 = vld [vmem:[%s200 + $0x240] sm:$0xff]
                %275 = vst [vmem:[%s201 + $0x120] sm:$0xff] %v274
                %v276 = vld [vmem:[%s200 + $0x248] sm:$0xff]
                %277 = vst [vmem:[%s201 + $0x128] sm:$0xff] %v276
                %v278 = vld [vmem:[%s200 + $0x260] sm:$0xff]
                %279 = vst [vmem:[%s201 + $0x130] sm:$0xff] %v278
                %v280 = vld [vmem:[%s200 + $0x268] sm:$0xff]
                %281 = vst [vmem:[%s201 + $0x138] sm:$0xff] %v280
                %v282 = vld [vmem:[%s200 + $0x280] sm:$0xff]
                %283 = vst [vmem:[%s201 + $0x140] sm:$0xff] %v282
                %v284 = vld [vmem:[%s200 + $0x288] sm:$0xff]
                %285 = vst [vmem:[%s201 + $0x148] sm:$0xff] %v284
                %v286 = vld [vmem:[%s200 + $0x2a0] sm:$0xff]
                %287 = vst [vmem:[%s201 + $0x150] sm:$0xff] %v286
                %v288 = vld [vmem:[%s200 + $0x2a8] sm:$0xff]
                %289 = vst [vmem:[%s201 + $0x158] sm:$0xff] %v288
                %v290 = vld [vmem:[%s200 + $0x2c0] sm:$0xff]
                %291 = vst [vmem:[%s201 + $0x160] sm:$0xff] %v290
                %v292 = vld [vmem:[%s200 + $0x2c8] sm:$0xff]
                %293 = vst [vmem:[%s201 + $0x168] sm:$0xff] %v292
                %v294 = vld [vmem:[%s200 + $0x2e0] sm:$0xff]
                %295 = vst [vmem:[%s201 + $0x170] sm:$0xff] %v294
                %v296 = vld [vmem:[%s200 + $0x2e8] sm:$0xff]
                %297 = vst [vmem:[%s201 + $0x178] sm:$0xff] %v296
                %v298 = vld [vmem:[%s200 + $0x300] sm:$0xff]
                %299 = vst [vmem:[%s201 + $0x180] sm:$0xff] %v298
                %v300 = vld [vmem:[%s200 + $0x308] sm:$0xff]
                %301 = vst [vmem:[%s201 + $0x188] sm:$0xff] %v300
                %v302 = vld [vmem:[%s200 + $0x320] sm:$0xff]
                %303 = vst [vmem:[%s201 + $0x190] sm:$0xff] %v302
                %v304 = vld [vmem:[%s200 + $0x328] sm:$0xff]
                %305 = vst [vmem:[%s201 + $0x198] sm:$0xff] %v304
                %v306 = vld [vmem:[%s200 + $0x340] sm:$0xff]
                %307 = vst [vmem:[%s201 + $0x1a0] sm:$0xff] %v306
                %v308 = vld [vmem:[%s200 + $0x348] sm:$0xff]
                %309 = vst [vmem:[%s201 + $0x1a8] sm:$0xff] %v308
              $region45: #{_lambda_.17} parent=39 // loop_footer
                %s199 = sadd.s32 1, %s195
              $region46: #{_lambda_.17} parent=39 // loop_footer_branch
                %194 = sbr.rel target = $region42
              $region47: #{_lambda_.17} parent=39 // loop_exit
                _
            $region40: #{_lambda_.17} parent=35 // pred_fallthru
              _
            // Predicated region
            $region48: #{_lambda_.17} parent=35 // pred_check
              _
            $region49: #{_lambda_.17} parent=35 // pred_check_branch
              %311 = sbr.rel target = $region51
            $region50: #{_lambda_.17} parent=35 // pred_region
              _
            $region51: #{_lambda_.17} parent=35 // pred_fallthru
              _
          $region36: #{_lambda_.17} parent=31 // pred_fallthru
            _
          %312 = vnop
        $region32: #{_lambda_.17} parent=27 // pred_fallthru
          _
        // Predicated region
        $region52: #{_lambda_.17} parent=27 // pred_check
          %p313 = pneg %p120
        $region53: #{_lambda_.17} parent=27 // pred_check_branch
          %315 = sbr.rel (%p313) target = $region55
        $region54: #{_lambda_.17} parent=27 // pred_region
          %s316 = smul.u32 4, %s11
          %p317 = scmp.lt.s32.totalorder %s316, 7
          %s318 = scalar_select %p317, %s316, 7
          %s319 = smul.addr %s318, 8
          %s320 = scalar_lea.vmem %s4, %s319
          %s321 = smul.u32 4, %s11
        $region55: #{_lambda_.17} parent=27 // pred_fallthru
          _
      $region28: #{_lambda_.17} parent=5 // pred_fallthru
        _
      %p322 = scmp.le.s32.totalorder 1, %s11
      %p323 = scmp.lt.s32.totalorder %s11, 3
      %p324 = pnand %p322, %p323
      %p325 = pneg %p324
      // Predicated region
      $region56: #{_lambda_.17} parent=5 // pred_check
        _
      $region57: #{_lambda_.17} parent=5 // pred_check_branch
        %327 = sbr.rel (%p324) target = $region59
      $region58: #{_lambda_.17} parent=5 // pred_region
        %s328 = ssub.s32 %s11, 1
        %s329 = sand.u32 %s87, 1
        %s330 = sand.u32 %s87, 1
        %s331 = smul.addr %s330, 432
        %s332 = scalar_lea.vmem [#allocation2], %s331
        // Predicated region
        $region60: #{_lambda_.17} parent=58 // pred_check
          %p333 = pneg %p100
        $region61: #{_lambda_.17} parent=58 // pred_check_branch
          %335 = sbr.rel (%p333) target = $region63
        $region62: #{_lambda_.17} parent=58 // pred_region
          _
        $region63: #{_lambda_.17} parent=58 // pred_fallthru
          _
        %p336 = pneg %p32
        %p337 = pneg %p29
        %p338 = pneg %p53
        %p339 = pneg %p50
        %p340 = pneg %p74
        %p341 = pneg %p71
        %s342 = sand.u32 %s87, 1
        %s343 = sand.u32 %s87, 1
        %s344 = smul.addr %s343, 432
        %s345 = scalar_lea.vmem [#allocation2], %s344
        %p346 = pneg %p100
        %p347 = pneg %p97
        %s348 = smul.u32 4, %s16
        %p349 = scmp.lt.s32.totalorder %s348, 7
        %s350 = scalar_select %p349, %s348, 7
        %s351 = smul.addr %s350, 8
        %s352 = scalar_lea.vmem %s4, %s351
        %p353 = pneg %p126
        %p354 = pneg %p123
        %p355 = pneg %p152
        %p356 = pneg %p149
        %s357 = smul.u32 4, %s16
        %p358 = scmp.lt.s32.totalorder %s357, 7
        %s359 = scalar_select %p358, %s357, 7
        %s360 = smul.addr %s359, 8
        %s361 = scalar_lea.vmem %s5, %s360
        %s362 = smul.u32 4, %s16
        %s363 = smul.u32 4, %s16
        %p364 = scmp.lt.s32.totalorder %s363, 7
        %s365 = scalar_select %p364, %s363, 7
        %s366 = smul.addr %s365, 8
        %s367 = scalar_lea.vmem %s4, %s366
        %s368 = smul.u32 4, %s16
        %s369 = smul.u32 4, %s16
        %p370 = scmp.lt.s32.totalorder %s369, 7
        %s371 = scalar_select %p370, %s369, 7
        %s372 = smul.addr %s371, 8
        %s373 = scalar_lea.vmem %s5, %s372
        %s374 = smul.u32 4, %s16
        %v376 = vld [vmem:[%s0] sm:$0xff]
        %v377 = vld [vmem:[%s332] sm:$0xff]
        %v378 = vld [vmem:[%s332 + $0x8] sm:$0xff]
        %v379 = vld [vmem:[%s332 + $0x10] sm:$0xff]
        %v380 = vld [vmem:[%s332 + $0x18] sm:$0xff]
        %v381 = vld [vmem:[%s332 + $0x20] sm:$0xff]
        %v382 = vld [vmem:[%s332 + $0x28] sm:$0xff]
        %v383 = vld [vmem:[%s332 + $0x30] sm:$0xff]
        %v384 = vld [vmem:[%s332 + $0x38] sm:$0xff]
        %v385 = vld [vmem:[%s332 + $0x40] sm:$0xff]
        %v386 = vld [vmem:[%s332 + $0x48] sm:$0xff]
        %v387 = vld [vmem:[%s332 + $0x50] sm:$0xff]
        %v388 = vld [vmem:[%s332 + $0x58] sm:$0xff]
        %v389 = vld [vmem:[%s332 + $0x60] sm:$0xff]
        %v390 = vld [vmem:[%s332 + $0x68] sm:$0xff]
        %v391 = vld [vmem:[%s332 + $0x70] sm:$0xff]
        %v392 = vld [vmem:[%s332 + $0x78] sm:$0xff]
        %v393 = vld [vmem:[%s332 + $0x80] sm:$0xff]
        %v394 = vld [vmem:[%s332 + $0x88] sm:$0xff]
        %v395 = vld [vmem:[%s332 + $0x90] sm:$0xff]
        %v396 = vld [vmem:[%s332 + $0x98] sm:$0xff]
        %v397 = vld [vmem:[%s332 + $0xa0] sm:$0xff]
        %v398 = vld [vmem:[%s332 + $0xa8] sm:$0xff]
        %v399 = vld [vmem:[%s332 + $0xb0] sm:$0xff]
        %v400 = vld [vmem:[%s332 + $0xb8] sm:$0xff]
        %v401 = vld [vmem:[%s332 + $0xc0] sm:$0xff]
        %v402 = vld [vmem:[%s332 + $0xc8] sm:$0xff]
        %v403 = vld [vmem:[%s332 + $0xd0] sm:$0xff]
        %v404 = vld [vmem:[%s332 + $0xd8] sm:$0xff]
        %v405 = vld [vmem:[%s332 + $0xe0] sm:$0xff]
        %v406 = vld [vmem:[%s332 + $0xe8] sm:$0xff]
        %v407 = vld [vmem:[%s332 + $0xf0] sm:$0xff]
        %v408 = vld [vmem:[%s332 + $0xf8] sm:$0xff]
        %v409 = vld [vmem:[%s332 + $0x100] sm:$0xff]
        %v410 = vld [vmem:[%s332 + $0x108] sm:$0xff]
        %v411 = vld [vmem:[%s332 + $0x110] sm:$0xff]
        %v412 = vld [vmem:[%s332 + $0x118] sm:$0xff]
        %v413 = vld [vmem:[%s332 + $0x120] sm:$0xff]
        %v414 = vld [vmem:[%s332 + $0x128] sm:$0xff]
        %v415 = vld [vmem:[%s332 + $0x130] sm:$0xff]
        %v416 = vld [vmem:[%s332 + $0x138] sm:$0xff]
        %v417 = vld [vmem:[%s332 + $0x140] sm:$0xff]
        %v418 = vld [vmem:[%s332 + $0x148] sm:$0xff]
        %v419 = vld [vmem:[%s332 + $0x150] sm:$0xff]
        %v420 = vld [vmem:[%s332 + $0x158] sm:$0xff]
        %v421 = vld [vmem:[%s332 + $0x160] sm:$0xff]
        %v422 = vld [vmem:[%s332 + $0x168] sm:$0xff]
        %v423 = vld [vmem:[%s332 + $0x170] sm:$0xff]
        %v424 = vld [vmem:[%s332 + $0x178] sm:$0xff]
        %v425 = vld [vmem:[%s332 + $0x180] sm:$0xff]
        %v426 = vld [vmem:[%s332 + $0x188] sm:$0xff]
        %v427 = vld [vmem:[%s332 + $0x190] sm:$0xff]
        %v428 = vld [vmem:[%s332 + $0x198] sm:$0xff]
        %v429 = vld [vmem:[%s332 + $0x1a0] sm:$0xff]
        %v430 = vld [vmem:[%s332 + $0x1a8] sm:$0xff]
        %v432 = vunpack.c.l.b16 %v376
        %v433 = vunpack.c.h.b16 %v376
        %v434 = vpack.c.b16 %v432, %v432
        %v435 = vpack.c.b16 %v433, %v433
        %v491 = vunpack.c.l.b16 %v377
        %v492 = vunpack.c.h.b16 %v377
        %v493 = vunpack.c.l.b16 %v378
        %v494 = vunpack.c.h.b16 %v378
        %v495 = vunpack.c.l.b16 %v379
        %v496 = vunpack.c.h.b16 %v379
        %v497 = vunpack.c.l.b16 %v380
        %v498 = vunpack.c.h.b16 %v380
        %v499 = vunpack.c.l.b16 %v381
        %v500 = vunpack.c.h.b16 %v381
        %v501 = vunpack.c.l.b16 %v382
        %v502 = vunpack.c.h.b16 %v382
        %v503 = vunpack.c.l.b16 %v383
        %v504 = vunpack.c.h.b16 %v383
        %v505 = vunpack.c.l.b16 %v384
        %v506 = vunpack.c.h.b16 %v384
        %v507 = vunpack.c.l.b16 %v385
        %v508 = vunpack.c.h.b16 %v385
        %v509 = vunpack.c.l.b16 %v386
        %v510 = vunpack.c.h.b16 %v386
        %v511 = vunpack.c.l.b16 %v387
        %v512 = vunpack.c.h.b16 %v387
        %v513 = vunpack.c.l.b16 %v388
        %v514 = vunpack.c.h.b16 %v388
        %v515 = vunpack.c.l.b16 %v389
        %v516 = vunpack.c.h.b16 %v389
        %v517 = vunpack.c.l.b16 %v390
        %v518 = vunpack.c.h.b16 %v390
        %v519 = vunpack.c.l.b16 %v391
        %v520 = vunpack.c.h.b16 %v391
        %v521 = vunpack.c.l.b16 %v392
        %v522 = vunpack.c.h.b16 %v392
        %v523 = vunpack.c.l.b16 %v393
        %v524 = vunpack.c.h.b16 %v393
        %v525 = vunpack.c.l.b16 %v394
        %v526 = vunpack.c.h.b16 %v394
        %v527 = vunpack.c.l.b16 %v395
        %v528 = vunpack.c.h.b16 %v395
        %v529 = vunpack.c.l.b16 %v396
        %v530 = vunpack.c.h.b16 %v396
        %v531 = vunpack.c.l.b16 %v397
        %v532 = vunpack.c.h.b16 %v397
        %v533 = vunpack.c.l.b16 %v398
        %v534 = vunpack.c.h.b16 %v398
        %v535 = vunpack.c.l.b16 %v399
        %v536 = vunpack.c.h.b16 %v399
        %v537 = vunpack.c.l.b16 %v400
        %v538 = vunpack.c.h.b16 %v400
        %v539 = vunpack.c.l.b16 %v401
        %v540 = vunpack.c.h.b16 %v401
        %v541 = vunpack.c.l.b16 %v402
        %v542 = vunpack.c.h.b16 %v402
        %v543 = vunpack.c.l.b16 %v403
        %v544 = vunpack.c.h.b16 %v403
        %v545 = vunpack.c.l.b16 %v404
        %v546 = vunpack.c.h.b16 %v404
        %v547 = vunpack.c.l.b16 %v405
        %v548 = vunpack.c.h.b16 %v405
        %v549 = vunpack.c.l.b16 %v406
        %v550 = vunpack.c.h.b16 %v406
        %v551 = vunpack.c.l.b16 %v407
        %v552 = vunpack.c.h.b16 %v407
        %v553 = vunpack.c.l.b16 %v408
        %v554 = vunpack.c.h.b16 %v408
        %v555 = vunpack.c.l.b16 %v409
        %v556 = vunpack.c.h.b16 %v409
        %v557 = vunpack.c.l.b16 %v410
        %v558 = vunpack.c.h.b16 %v410
        %v559 = vunpack.c.l.b16 %v411
        %v560 = vunpack.c.h.b16 %v411
        %v561 = vunpack.c.l.b16 %v412
        %v562 = vunpack.c.h.b16 %v412
        %v563 = vunpack.c.l.b16 %v413
        %v564 = vunpack.c.h.b16 %v413
        %v565 = vunpack.c.l.b16 %v414
        %v566 = vunpack.c.h.b16 %v414
        %v567 = vunpack.c.l.b16 %v415
        %v568 = vunpack.c.h.b16 %v415
        %v569 = vunpack.c.l.b16 %v416
        %v570 = vunpack.c.h.b16 %v416
        %v571 = vunpack.c.l.b16 %v417
        %v572 = vunpack.c.h.b16 %v417
        %v573 = vunpack.c.l.b16 %v418
        %v574 = vunpack.c.h.b16 %v418
        %v575 = vunpack.c.l.b16 %v419
        %v576 = vunpack.c.h.b16 %v419
        %v577 = vunpack.c.l.b16 %v420
        %v578 = vunpack.c.h.b16 %v420
        %v579 = vunpack.c.l.b16 %v421
        %v580 = vunpack.c.h.b16 %v421
        %v581 = vunpack.c.l.b16 %v422
        %v582 = vunpack.c.h.b16 %v422
        %v583 = vunpack.c.l.b16 %v423
        %v584 = vunpack.c.h.b16 %v423
        %v585 = vunpack.c.l.b16 %v424
        %v586 = vunpack.c.h.b16 %v424
        %v587 = vunpack.c.l.b16 %v425
        %v588 = vunpack.c.h.b16 %v425
        %v589 = vunpack.c.l.b16 %v426
        %v590 = vunpack.c.h.b16 %v426
        %v591 = vunpack.c.l.b16 %v427
        %v592 = vunpack.c.h.b16 %v427
        %v593 = vunpack.c.l.b16 %v428
        %v594 = vunpack.c.h.b16 %v428
        %v595 = vunpack.c.l.b16 %v429
        %v596 = vunpack.c.h.b16 %v429
        %v597 = vunpack.c.l.b16 %v430
        %v598 = vunpack.c.h.b16 %v430
        %v599 = vpack.c.b16 %v495, %v491
        %v600 = vpack.c.b16 %v496, %v492
        %v601 = vpack.c.b16 %v497, %v493
        %v602 = vpack.c.b16 %v498, %v494
        %v603 = vpack.c.b16 %v503, %v499
        %v604 = vpack.c.b16 %v504, %v500
        %v605 = vpack.c.b16 %v505, %v501
        %v606 = vpack.c.b16 %v506, %v502
        %v607 = vpack.c.b16 %v511, %v507
        %v608 = vpack.c.b16 %v512, %v508
        %v609 = vpack.c.b16 %v513, %v509
        %v610 = vpack.c.b16 %v514, %v510
        %v611 = vpack.c.b16 %v519, %v515
        %v612 = vpack.c.b16 %v520, %v516
        %v613 = vpack.c.b16 %v521, %v517
        %v614 = vpack.c.b16 %v522, %v518
        %v615 = vpack.c.b16 %v527, %v523
        %v616 = vpack.c.b16 %v528, %v524
        %v617 = vpack.c.b16 %v529, %v525
        %v618 = vpack.c.b16 %v530, %v526
        %v619 = vpack.c.b16 %v535, %v531
        %v620 = vpack.c.b16 %v536, %v532
        %v621 = vpack.c.b16 %v537, %v533
        %v622 = vpack.c.b16 %v538, %v534
        %v623 = vpack.c.b16 %v543, %v539
        %v624 = vpack.c.b16 %v544, %v540
        %v625 = vpack.c.b16 %v545, %v541
        %v626 = vpack.c.b16 %v546, %v542
        %v627 = vpack.c.b16 %v551, %v547
        %v628 = vpack.c.b16 %v552, %v548
        %v629 = vpack.c.b16 %v553, %v549
        %v630 = vpack.c.b16 %v554, %v550
        %v631 = vpack.c.b16 %v559, %v555
        %v632 = vpack.c.b16 %v560, %v556
        %v633 = vpack.c.b16 %v561, %v557
        %v634 = vpack.c.b16 %v562, %v558
        %v635 = vpack.c.b16 %v567, %v563
        %v636 = vpack.c.b16 %v568, %v564
        %v637 = vpack.c.b16 %v569, %v565
        %v638 = vpack.c.b16 %v570, %v566
        %v639 = vpack.c.b16 %v575, %v571
        %v640 = vpack.c.b16 %v576, %v572
        %v641 = vpack.c.b16 %v577, %v573
        %v642 = vpack.c.b16 %v578, %v574
        %v643 = vpack.c.b16 %v583, %v579
        %v644 = vpack.c.b16 %v584, %v580
        %v645 = vpack.c.b16 %v585, %v581
        %v646 = vpack.c.b16 %v586, %v582
        %v647 = vpack.c.b16 %v591, %v587
        %v648 = vpack.c.b16 %v592, %v588
        %v649 = vpack.c.b16 %v593, %v589
        %v650 = vpack.c.b16 %v594, %v590
        %v651 = vpack.c.b16 %v595, %v595
        %v652 = vpack.c.b16 %v596, %v596
        %v653 = vpack.c.b16 %v597, %v597
        %v654 = vpack.c.b16 %v598, %v598
        %vm707 = vcmask 719872
        %v709 = vsel %vm707, %v435, 0
        %vm711 = vcmask 1043456
        %v713 = vsel %vm711, %v651, 0
        %v716 = vsel %vm711, %v652, 0
        %v719 = vsel %vm711, %v653, 0
        %v722 = vsel %vm711, %v654, 0
        %724 = vmatprep.subr.bf16.mxu0 %v600
        %725 = vmatpush1.bf16.msra.mxu0 %v599
        %726 = vmatprep.subr.bf16.mxu0 %v604
        %727 = vmatpush1.bf16.msra.mxu0 %v603
        %728 = vmatprep.subr.bf16.mxu0 %v608
        %729 = vmatpush1.bf16.msra.mxu0 %v607
        %730 = vmatprep.subr.bf16.mxu0 %v612
        %731 = vmatpush1.bf16.msra.mxu0 %v611
        %732 = vmatprep.subr.bf16.mxu0 %v616
        %733 = vmatpush1.bf16.msra.mxu0 %v615
        %734 = vmatprep.subr.bf16.mxu0 %v620
        %735 = vmatpush1.bf16.msra.mxu0 %v619
        %736 = vmatprep.subr.bf16.mxu0 %v624
        %737 = vmatpush1.bf16.msra.mxu0 %v623
        %738 = vmatprep.subr.bf16.mxu0 %v628
        %739 = vmatpush1.bf16.msra.mxu0 %v627
        %740 = vmatprep.subr.bf16.mxu0 %v632
        %741 = vmatpush1.bf16.msra.mxu0 %v631
        %742 = vmatprep.subr.bf16.mxu0 %v636
        %743 = vmatpush1.bf16.msra.mxu0 %v635
        %744 = vmatprep.subr.bf16.mxu0 %v640
        %745 = vmatpush1.bf16.msra.mxu0 %v639
        %746 = vmatprep.subr.bf16.mxu0 %v644
        %747 = vmatpush1.bf16.msra.mxu0 %v643
        %748 = vmatprep.subr.bf16.mxu0 %v648
        %749 = vmatpush1.bf16.msra.mxu0 %v647
        %750 = vmatprep.subr.bf16.mxu0 %v716
        %751 = vmatpush1.bf16.msra.mxu0 %v713
        %752 = vmatprep.subr.bf16.mxu0 0
        %753 = vmatpush1.bf16.msra.mxu0 0
        %754 = vmatprep.subr.bf16.mxu0 0
        %755 = vmatpush1.bf16.msra.mxu0 0
        %756 = vmatprep.mubr.bf16.mxu0 %v709
        %757 = vmatmul.mubr.bf16.gmra.mrb[0].mxu0 %v434
        %v758 = vpop.f32.mrb[0].mxu0
        %v759 = vadd.f32 0.0, %v758
        %v760 = vpop.f32.mrb[0].mxu0
        %v761 = vadd.f32 0.0, %v760
        %v762 = vpop.f32.mrb[0].mxu0
        %v763 = vpop.f32.mrb[0].mxu0
        %764 = vdwg.mxu0
        %765 = vmatprep.subr.bf16.mxu0 %v602
        %766 = vmatpush1.bf16.msra.mxu0 %v601
        %767 = vmatprep.subr.bf16.mxu0 %v606
        %768 = vmatpush1.bf16.msra.mxu0 %v605
        %769 = vmatprep.subr.bf16.mxu0 %v610
        %770 = vmatpush1.bf16.msra.mxu0 %v609
        %771 = vmatprep.subr.bf16.mxu0 %v614
        %772 = vmatpush1.bf16.msra.mxu0 %v613
        %773 = vmatprep.subr.bf16.mxu0 %v618
        %774 = vmatpush1.bf16.msra.mxu0 %v617
        %775 = vmatprep.subr.bf16.mxu0 %v622
        %776 = vmatpush1.bf16.msra.mxu0 %v621
        %777 = vmatprep.subr.bf16.mxu0 %v626
        %778 = vmatpush1.bf16.msra.mxu0 %v625
        %779 = vmatprep.subr.bf16.mxu0 %v630
        %780 = vmatpush1.bf16.msra.mxu0 %v629
        %781 = vmatprep.subr.bf16.mxu0 %v634
        %782 = vmatpush1.bf16.msra.mxu0 %v633
        %783 = vmatprep.subr.bf16.mxu0 %v638
        %784 = vmatpush1.bf16.msra.mxu0 %v637
        %785 = vmatprep.subr.bf16.mxu0 %v642
        %786 = vmatpush1.bf16.msra.mxu0 %v641
        %787 = vmatprep.subr.bf16.mxu0 %v646
        %788 = vmatpush1.bf16.msra.mxu0 %v645
        %789 = vmatprep.subr.bf16.mxu0 %v650
        %790 = vmatpush1.bf16.msra.mxu0 %v649
        %791 = vmatprep.subr.bf16.mxu0 %v722
        %792 = vmatpush1.bf16.msra.mxu0 %v719
        %793 = vmatprep.subr.bf16.mxu0 0
        %794 = vmatpush1.bf16.msra.mxu0 0
        %795 = vmatprep.subr.bf16.mxu0 0
        %796 = vmatpush1.bf16.msra.mxu0 0
        %797 = vmatprep.mubr.bf16.mxu0 %v709
        %798 = vmatmul.mubr.bf16.gmra.mrb[0].mxu0 %v434
        %v799 = vpop.f32.mrb[0].mxu0
        %v800 = vadd.f32 0.0, %v799
        %v801 = vpop.f32.mrb[0].mxu0
        %v802 = vadd.f32 0.0, %v801
        %v803 = vpop.f32.mrb[0].mxu0
        %v804 = vpop.f32.mrb[0].mxu0
        %805 = vdwg.mxu0
        %v806 = vld [vmem:[%s1] sm:$0xff]
        %808 = vset.pattern.permute.xlu0 0
        %809 = vperm.xlu0 %808, %v806
        %v810 = vpop.permute.xlu0 %809
        %v812 = vmul.f32 %v759, %v810
        %v813 = vmul.f32 %v761, %v810
        %v814 = vmul.f32 %v800, %v810
        %v815 = vmul.f32 %v802, %v810
        %v816 = vld [vmem:[%s2] sm:$0xff]
        %818 = vset.pattern.permute.xlu0 0
        %819 = vperm.xlu0 %818, %v816
        %v820 = vpop.permute.xlu0 %819
        %v822 = vadd.f32 %v812, %v820
        %v823 = vadd.f32 %v813, %v820
        %v824 = vadd.f32 %v814, %v820
        %v825 = vadd.f32 %v815, %v820
        %v826 = vld [vmem:[%s367] sm:$0xff]
        %v827 = vld [vmem:[%s367 + $0x8] sm:$0xff]
        %v828 = vld [vmem:[%s367 + $0x10] sm:$0xff]
        %v829 = vld [vmem:[%s367 + $0x18] sm:$0xff]
        %v830 = vadd.f32 %v822, %v826
        %v831 = vadd.f32 %v823, %v827
        %v832 = vadd.f32 %v824, %v828
        %v833 = vadd.f32 %v825, %v829
        %v834 = vmax.f32 %v830, 0.0
        %v835 = vmax.f32 %v831, 0.0
        %v836 = vmax.f32 %v832, 0.0
        %v837 = vmax.f32 %v833, 0.0
        %838 = vst [vmem:[%s373] sm:$0xff] %v834
        %839 = vst [vmem:[%s373 + $0x8] sm:$0xff] %v835
        %840 = vst [vmem:[%s373 + $0x10] sm:$0xff] %v836
        %841 = vst [vmem:[%s373 + $0x18] sm:$0xff] %v837
        %s842 = smul.u32 4, %s16
        %p843 = scmp.lt.s32.totalorder %s842, 7
        %s844 = scalar_select %p843, %s842, 7
        %s845 = smul.addr %s844, 8
        %s846 = scalar_lea.vmem %s5, %s845
        // Predicated region
        $region64: #{_lambda_.17} parent=58 // pred_check
          %p847 = pneg %p149
        $region65: #{_lambda_.17} parent=58 // pred_check_branch
          %849 = sbr.rel (%p847) target = $region67
        $region66: #{_lambda_.17} parent=58 // pred_region
          %s850 = smul.u32 4, %s16
        $region67: #{_lambda_.17} parent=58 // pred_fallthru
          _
      $region59: #{_lambda_.17} parent=5 // pred_fallthru
        _
      %p851 = scmp.le.s32.totalorder 2, %s11
      // Predicated region
      $region68: #{_lambda_.17} parent=5 // pred_check
        %p852 = pneg %p851
      $region69: #{_lambda_.17} parent=5 // pred_check_branch
        %854 = sbr.rel (%p852) target = $region71
      $region70: #{_lambda_.17} parent=5 // pred_region
        %s855 = ssub.s32 %s11, 2
        // Predicated region
        $region72: #{_lambda_.17} parent=70 // pred_check
          %p856 = pneg %p155
        $region73: #{_lambda_.17} parent=70 // pred_check_branch
          %858 = sbr.rel (%p856) target = $region75
        $region74: #{_lambda_.17} parent=70 // pred_region
          %s859 = smul.u32 4, %s17
          %p860 = scmp.lt.s32.totalorder %s859, 7
          %s861 = scalar_select %p860, %s859, 7
          %s862 = smul.addr %s861, 8
          %s863 = scalar_lea.vmem %s5, %s862
        $region75: #{_lambda_.17} parent=70 // pred_fallthru
          _
      $region71: #{_lambda_.17} parent=5 // pred_fallthru
        _
    $region6: #{_lambda_.17} parent=1 // loop_footer
      %s15 = sadd.s32 1, %s11
    $region7: #{_lambda_.17} parent=1 // loop_footer_branch
      %10 = sbr.rel target = $region3
    $region8: #{_lambda_.17} parent=1 // loop_exit
      _

// kernel: _lambda_.18
$region0: #{_lambda_.18}
  #allocation0 [shape = 'u32[]', space=smem, size = 0x4, offset = 0x4, fixed_abs, tag = 'smem constant byte address 0x4 - core index']
  #allocation1 [shape = 'u32[144,128]{1,0:T(1,128)}', space=vmem, size = 0x12000, scoped, tag = 'internal scratch']
  %s0 = inlined_call_operand.vmem [shape: bf16[8,216], index: 0, kind: input, shape index: {}]
  %s1 = inlined_call_operand.vmem [shape: f32[8,1], index: 1, kind: input, shape index: {}]
  %s2 = inlined_call_operand.vmem [shape: f32[8,1], index: 2, kind: input, shape index: {}]
  %s3 = inlined_call_operand.vmem [shape: bf16[216,128], index: 3, kind: input, shape index: {}]
  %s4 = inlined_call_operand.vmem [shape: f32[8,128], index: 4, kind: output, shape index: {}]
  %s5 = sld [smem:[#allocation0]]
  $region26: #{_lambda_.18} parent=0
    _
  %s7 = ssub.s32 1, %s5
  %s8 = scalar_select 0, %s7, %s5
  // Predicated region
  $region2: #{_lambda_.18} parent=0 // pred_check
    _
  $region3: #{_lambda_.18} parent=0 // pred_check_branch
    %10 = sbr.rel (0) target = $region5
  $region4: #{_lambda_.18} parent=0 // pred_region
    _
  $region5: #{_lambda_.18} parent=0 // pred_fallthru
    _
  // Predicated region
  $region6: #{_lambda_.18} parent=0 // pred_check
    _
  $region7: #{_lambda_.18} parent=0 // pred_check_branch
    %12 = sbr.rel (0) target = $region9
  $region8: #{_lambda_.18} parent=0 // pred_region
    _
  $region9: #{_lambda_.18} parent=0 // pred_fallthru
    _
  // Predicated region
  $region10: #{_lambda_.18} parent=0 // pred_check
    _
  $region11: #{_lambda_.18} parent=0 // pred_check_branch
    %14 = sbr.rel (0) target = $region13
  $region12: #{_lambda_.18} parent=0 // pred_region
    _
  $region13: #{_lambda_.18} parent=0 // pred_fallthru
    _
  // Predicated region
  $region14: #{_lambda_.18} parent=0 // pred_check
    _
  $region15: #{_lambda_.18} parent=0 // pred_check_branch
    %16 = sbr.rel (0) target = $region17
  $region16: #{_lambda_.18} parent=0 // pred_region
    _
  $region17: #{_lambda_.18} parent=0 // pred_fallthru
    _
  %v18 = vld [vmem:[%s0] sm:$0xff]
  %v19 = vld [vmem:[%s3] sm:$0xf]
  %v20 = vld [vmem:[%s3 + $0x4] sm:$0xf]
  %v21 = vld [vmem:[%s3 + $0x8] sm:$0xf]
  %v22 = vld [vmem:[%s3 + $0xc] sm:$0xf]
  %v23 = vld [vmem:[%s3 + $0x10] sm:$0xf]
  %v24 = vld [vmem:[%s3 + $0x14] sm:$0xf]
  %v25 = vld [vmem:[%s3 + $0x18] sm:$0xf]
  %v26 = vld [vmem:[%s3 + $0x1c] sm:$0xf]
  %v27 = vld [vmem:[%s3 + $0x20] sm:$0xf]
  %v28 = vld [vmem:[%s3 + $0x24] sm:$0xf]
  %v29 = vld [vmem:[%s3 + $0x28] sm:$0xf]
  %v30 = vld [vmem:[%s3 + $0x2c] sm:$0xf]
  %v31 = vld [vmem:[%s3 + $0x30] sm:$0xf]
  %v32 = vld [vmem:[%s3 + $0x34] sm:$0xf]
  %v33 = vld [vmem:[%s3 + $0x38] sm:$0xf]
  %v34 = vld [vmem:[%s3 + $0x3c] sm:$0xf]
  %v35 = vld [vmem:[%s3 + $0x40] sm:$0xf]
  %v36 = vld [vmem:[%s3 + $0x44] sm:$0xf]
  %v37 = vld [vmem:[%s3 + $0x48] sm:$0xf]
  %v38 = vld [vmem:[%s3 + $0x4c] sm:$0xf]
  %v39 = vld [vmem:[%s3 + $0x50] sm:$0xf]
  %v40 = vld [vmem:[%s3 + $0x54] sm:$0xf]
  %v41 = vld [vmem:[%s3 + $0x58] sm:$0xf]
  %v42 = vld [vmem:[%s3 + $0x5c] sm:$0xf]
  %v43 = vld [vmem:[%s3 + $0x60] sm:$0xf]
  %v44 = vld [vmem:[%s3 + $0x64] sm:$0xf]
  %v45 = vld [vmem:[%s3 + $0x68] sm:$0xf]
  %v47 = vunpack.c.l.b16 %v18
  %v48 = vunpack.c.h.b16 %v18
  %v49 = vpack.c.b16 %v47, %v47
  %v50 = vpack.c.b16 %v48, %v48
  %v79 = vunpack.c.l.b16 %v19
  %v80 = vunpack.c.l.b16 %v20
  %v81 = vunpack.c.l.b16 %v21
  %v82 = vunpack.c.l.b16 %v22
  %v83 = vunpack.c.l.b16 %v23
  %v84 = vunpack.c.l.b16 %v24
  %v85 = vunpack.c.l.b16 %v25
  %v86 = vunpack.c.l.b16 %v26
  %v87 = vunpack.c.l.b16 %v27
  %v88 = vunpack.c.l.b16 %v28
  %v89 = vunpack.c.l.b16 %v29
  %v90 = vunpack.c.l.b16 %v30
  %v91 = vunpack.c.l.b16 %v31
  %v92 = vunpack.c.l.b16 %v32
  %v93 = vunpack.c.l.b16 %v33
  %v94 = vunpack.c.l.b16 %v34
  %v95 = vunpack.c.l.b16 %v35
  %v96 = vunpack.c.l.b16 %v36
  %v97 = vunpack.c.l.b16 %v37
  %v98 = vunpack.c.l.b16 %v38
  %v99 = vunpack.c.l.b16 %v39
  %v100 = vunpack.c.l.b16 %v40
  %v101 = vunpack.c.l.b16 %v41
  %v102 = vunpack.c.l.b16 %v42
  %v103 = vunpack.c.l.b16 %v43
  %v104 = vunpack.c.l.b16 %v44
  %v105 = vunpack.c.l.b16 %v45
  %v106 = vpack.c.b16 %v80, %v79
  %v107 = vpack.c.b16 %v82, %v81
  %v108 = vpack.c.b16 %v84, %v83
  %v109 = vpack.c.b16 %v86, %v85
  %v110 = vpack.c.b16 %v88, %v87
  %v111 = vpack.c.b16 %v90, %v89
  %v112 = vpack.c.b16 %v92, %v91
  %v113 = vpack.c.b16 %v94, %v93
  %v114 = vpack.c.b16 %v96, %v95
  %v115 = vpack.c.b16 %v98, %v97
  %v116 = vpack.c.b16 %v100, %v99
  %v117 = vpack.c.b16 %v102, %v101
  %v118 = vpack.c.b16 %v104, %v103
  %v119 = vpack.c.b16 %v105, %v105
  %vm133 = vcmask 719872
  %v135 = vsel %vm133, %v50, 0
  %vm137 = vcmask 1043456
  %v139 = vsel %vm137, %v119, 0
  %141 = vmatprep.subr.bf16.mxu0 0
  %142 = vmatpush1.bf16.msra.mxu0 %v106
  %143 = vmatprep.subr.bf16.mxu0 0
  %144 = vmatpush1.bf16.msra.mxu0 %v107
  %145 = vmatprep.subr.bf16.mxu0 0
  %146 = vmatpush1.bf16.msra.mxu0 %v108
  %147 = vmatprep.subr.bf16.mxu0 0
  %148 = vmatpush1.bf16.msra.mxu0 %v109
  %149 = vmatprep.subr.bf16.mxu0 0
  %150 = vmatpush1.bf16.msra.mxu0 %v110
  %151 = vmatprep.subr.bf16.mxu0 0
  %152 = vmatpush1.bf16.msra.mxu0 %v111
  %153 = vmatprep.subr.bf16.mxu0 0
  %154 = vmatpush1.bf16.msra.mxu0 %v112
  %155 = vmatprep.subr.bf16.mxu0 0
  %156 = vmatpush1.bf16.msra.mxu0 %v113
  %157 = vmatprep.subr.bf16.mxu0 0
  %158 = vmatpush1.bf16.msra.mxu0 %v114
  %159 = vmatprep.subr.bf16.mxu0 0
  %160 = vmatpush1.bf16.msra.mxu0 %v115
  %161 = vmatprep.subr.bf16.mxu0 0
  %162 = vmatpush1.bf16.msra.mxu0 %v116
  %163 = vmatprep.subr.bf16.mxu0 0
  %164 = vmatpush1.bf16.msra.mxu0 %v117
  %165 = vmatprep.subr.bf16.mxu0 0
  %166 = vmatpush1.bf16.msra.mxu0 %v118
  %167 = vmatprep.subr.bf16.mxu0 0
  %168 = vmatpush1.bf16.msra.mxu0 %v139
  %169 = vmatprep.subr.bf16.mxu0 0
  %170 = vmatpush1.bf16.msra.mxu0 0
  %171 = vmatprep.subr.bf16.mxu0 0
  %172 = vmatpush1.bf16.msra.mxu0 0
  %173 = vmatprep.mubr.bf16.mxu0 %v135
  %174 = vmatmul.mubr.bf16.gmra.mrb[0].mxu0 %v49
  %v175 = vpop.f32.mrb[0].mxu0
  %v176 = vadd.f32 0.0, %v175
  %v177 = vpop.f32.mrb[0].mxu0
  %v178 = vpop.f32.mrb[0].mxu0
  %v179 = vpop.f32.mrb[0].mxu0
  %180 = vdwg.mxu0
  %v181 = vld [vmem:[%s1] sm:$0xff]
  %183 = vset.pattern.permute.xlu0 0
  %184 = vperm.xlu0 %183, %v181
  %v185 = vpop.permute.xlu0 %184
  %v187 = vmul.f32 %v176, %v185
  %v188 = vld [vmem:[%s2] sm:$0xff]
  %190 = vset.pattern.permute.xlu0 0
  %191 = vperm.xlu0 %190, %v188
  %v192 = vpop.permute.xlu0 %191
  %v194 = vadd.f32 %v187, %v192
  %v195 = vmax.f32 %v194, 0.0
  %196 = vst [vmem:[%s4] sm:$0xff] %v195
  // Predicated region
  $region18: #{_lambda_.18} parent=0 // pred_check
    _
  $region19: #{_lambda_.18} parent=0 // pred_check_branch
    %198 = sbr.rel (0) target = $region21
  $region20: #{_lambda_.18} parent=0 // pred_region
    _
  $region21: #{_lambda_.18} parent=0 // pred_fallthru
    _
  // Predicated region
  $region22: #{_lambda_.18} parent=0 // pred_check
    _
  $region23: #{_lambda_.18} parent=0 // pred_check_branch
    %200 = sbr.rel (0) target = $region25
  $region24: #{_lambda_.18} parent=0 // pred_region
    _
  $region25: #{_lambda_.18} parent=0 // pred_fallthru
    _

// kernel: _lambda_.19
$region0: #{_lambda_.19}
  #allocation0 [shape = 'u32[]', space=smem, size = 0x4, offset = 0x4, fixed_abs, tag = 'smem constant byte address 0x4 - core index']
  #allocation1 [shape = 'u32[144,128]{1,0:T(1,128)}', space=vmem, size = 0x12000, scoped, tag = 'internal scratch']
  %s0 = inlined_call_operand.vmem [shape: bf16[8,216], index: 0, kind: input, shape index: {}]
  %s1 = inlined_call_operand.vmem [shape: f32[8,1], index: 1, kind: input, shape index: {}]
  %s2 = inlined_call_operand.vmem [shape: f32[8,1], index: 2, kind: input, shape index: {}]
  %s3 = inlined_call_operand.vmem [shape: bf16[216,128], index: 3, kind: input, shape index: {}]
  %s4 = inlined_call_operand.vmem [shape: f32[8,128], index: 4, kind: input, shape index: {}]
  %s5 = inlined_call_operand.vmem [shape: f32[8,128], index: 5, kind: output, shape index: {}]
  %s6 = sld [smem:[#allocation0]]
  $region30: #{_lambda_.19} parent=0
    _
  %s8 = ssub.s32 1, %s6
  %s9 = scalar_select 0, %s8, %s6
  // Predicated region
  $region2: #{_lambda_.19} parent=0 // pred_check
    _
  $region3: #{_lambda_.19} parent=0 // pred_check_branch
    %11 = sbr.rel (0) target = $region5
  $region4: #{_lambda_.19} parent=0 // pred_region
    _
  $region5: #{_lambda_.19} parent=0 // pred_fallthru
    _
  // Predicated region
  $region6: #{_lambda_.19} parent=0 // pred_check
    _
  $region7: #{_lambda_.19} parent=0 // pred_check_branch
    %13 = sbr.rel (0) target = $region9
  $region8: #{_lambda_.19} parent=0 // pred_region
    _
  $region9: #{_lambda_.19} parent=0 // pred_fallthru
    _
  // Predicated region
  $region10: #{_lambda_.19} parent=0 // pred_check
    _
  $region11: #{_lambda_.19} parent=0 // pred_check_branch
    %15 = sbr.rel (0) target = $region13
  $region12: #{_lambda_.19} parent=0 // pred_region
    _
  $region13: #{_lambda_.19} parent=0 // pred_fallthru
    _
  // Predicated region
  $region14: #{_lambda_.19} parent=0 // pred_check
    _
  $region15: #{_lambda_.19} parent=0 // pred_check_branch
    %17 = sbr.rel (0) target = $region17
  $region16: #{_lambda_.19} parent=0 // pred_region
    _
  $region17: #{_lambda_.19} parent=0 // pred_fallthru
    _
  // Predicated region
  $region18: #{_lambda_.19} parent=0 // pred_check
    _
  $region19: #{_lambda_.19} parent=0 // pred_check_branch
    %19 = sbr.rel (0) target = $region21
  $region20: #{_lambda_.19} parent=0 // pred_region
    _
  $region21: #{_lambda_.19} parent=0 // pred_fallthru
    _
  %v21 = vld [vmem:[%s0] sm:$0xff]
  %v22 = vld [vmem:[%s3] sm:$0xf]
  %v23 = vld [vmem:[%s3 + $0x4] sm:$0xf]
  %v24 = vld [vmem:[%s3 + $0x8] sm:$0xf]
  %v25 = vld [vmem:[%s3 + $0xc] sm:$0xf]
  %v26 = vld [vmem:[%s3 + $0x10] sm:$0xf]
  %v27 = vld [vmem:[%s3 + $0x14] sm:$0xf]
  %v28 = vld [vmem:[%s3 + $0x18] sm:$0xf]
  %v29 = vld [vmem:[%s3 + $0x1c] sm:$0xf]
  %v30 = vld [vmem:[%s3 + $0x20] sm:$0xf]
  %v31 = vld [vmem:[%s3 + $0x24] sm:$0xf]
  %v32 = vld [vmem:[%s3 + $0x28] sm:$0xf]
  %v33 = vld [vmem:[%s3 + $0x2c] sm:$0xf]
  %v34 = vld [vmem:[%s3 + $0x30] sm:$0xf]
  %v35 = vld [vmem:[%s3 + $0x34] sm:$0xf]
  %v36 = vld [vmem:[%s3 + $0x38] sm:$0xf]
  %v37 = vld [vmem:[%s3 + $0x3c] sm:$0xf]
  %v38 = vld [vmem:[%s3 + $0x40] sm:$0xf]
  %v39 = vld [vmem:[%s3 + $0x44] sm:$0xf]
  %v40 = vld [vmem:[%s3 + $0x48] sm:$0xf]
  %v41 = vld [vmem:[%s3 + $0x4c] sm:$0xf]
  %v42 = vld [vmem:[%s3 + $0x50] sm:$0xf]
  %v43 = vld [vmem:[%s3 + $0x54] sm:$0xf]
  %v44 = vld [vmem:[%s3 + $0x58] sm:$0xf]
  %v45 = vld [vmem:[%s3 + $0x5c] sm:$0xf]
  %v46 = vld [vmem:[%s3 + $0x60] sm:$0xf]
  %v47 = vld [vmem:[%s3 + $0x64] sm:$0xf]
  %v48 = vld [vmem:[%s3 + $0x68] sm:$0xf]
  %v50 = vunpack.c.l.b16 %v21
  %v51 = vunpack.c.h.b16 %v21
  %v52 = vpack.c.b16 %v50, %v50
  %v53 = vpack.c.b16 %v51, %v51
  %v82 = vunpack.c.l.b16 %v22
  %v83 = vunpack.c.l.b16 %v23
  %v84 = vunpack.c.l.b16 %v24
  %v85 = vunpack.c.l.b16 %v25
  %v86 = vunpack.c.l.b16 %v26
  %v87 = vunpack.c.l.b16 %v27
  %v88 = vunpack.c.l.b16 %v28
  %v89 = vunpack.c.l.b16 %v29
  %v90 = vunpack.c.l.b16 %v30
  %v91 = vunpack.c.l.b16 %v31
  %v92 = vunpack.c.l.b16 %v32
  %v93 = vunpack.c.l.b16 %v33
  %v94 = vunpack.c.l.b16 %v34
  %v95 = vunpack.c.l.b16 %v35
  %v96 = vunpack.c.l.b16 %v36
  %v97 = vunpack.c.l.b16 %v37
  %v98 = vunpack.c.l.b16 %v38
  %v99 = vunpack.c.l.b16 %v39
  %v100 = vunpack.c.l.b16 %v40
  %v101 = vunpack.c.l.b16 %v41
  %v102 = vunpack.c.l.b16 %v42
  %v103 = vunpack.c.l.b16 %v43
  %v104 = vunpack.c.l.b16 %v44
  %v105 = vunpack.c.l.b16 %v45
  %v106 = vunpack.c.l.b16 %v46
  %v107 = vunpack.c.l.b16 %v47
  %v108 = vunpack.c.l.b16 %v48
  %v109 = vpack.c.b16 %v83, %v82
  %v110 = vpack.c.b16 %v85, %v84
  %v111 = vpack.c.b16 %v87, %v86
  %v112 = vpack.c.b16 %v89, %v88
  %v113 = vpack.c.b16 %v91, %v90
  %v114 = vpack.c.b16 %v93, %v92
  %v115 = vpack.c.b16 %v95, %v94
  %v116 = vpack.c.b16 %v97, %v96
  %v117 = vpack.c.b16 %v99, %v98
  %v118 = vpack.c.b16 %v101, %v100
  %v119 = vpack.c.b16 %v103, %v102
  %v120 = vpack.c.b16 %v105, %v104
  %v121 = vpack.c.b16 %v107, %v106
  %v122 = vpack.c.b16 %v108, %v108
  %vm136 = vcmask 719872
  %v138 = vsel %vm136, %v53, 0
  %vm140 = vcmask 1043456
  %v142 = vsel %vm140, %v122, 0
  %144 = vmatprep.subr.bf16.mxu0 0
  %145 = vmatpush1.bf16.msra.mxu0 %v109
  %146 = vmatprep.subr.bf16.mxu0 0
  %147 = vmatpush1.bf16.msra.mxu0 %v110
  %148 = vmatprep.subr.bf16.mxu0 0
  %149 = vmatpush1.bf16.msra.mxu0 %v111
  %150 = vmatprep.subr.bf16.mxu0 0
  %151 = vmatpush1.bf16.msra.mxu0 %v112
  %152 = vmatprep.subr.bf16.mxu0 0
  %153 = vmatpush1.bf16.msra.mxu0 %v113
  %154 = vmatprep.subr.bf16.mxu0 0
  %155 = vmatpush1.bf16.msra.mxu0 %v114
  %156 = vmatprep.subr.bf16.mxu0 0
  %157 = vmatpush1.bf16.msra.mxu0 %v115
  %158 = vmatprep.subr.bf16.mxu0 0
  %159 = vmatpush1.bf16.msra.mxu0 %v116
  %160 = vmatprep.subr.bf16.mxu0 0
  %161 = vmatpush1.bf16.msra.mxu0 %v117
  %162 = vmatprep.subr.bf16.mxu0 0
  %163 = vmatpush1.bf16.msra.mxu0 %v118
  %164 = vmatprep.subr.bf16.mxu0 0
  %165 = vmatpush1.bf16.msra.mxu0 %v119
  %166 = vmatprep.subr.bf16.mxu0 0
  %167 = vmatpush1.bf16.msra.mxu0 %v120
  %168 = vmatprep.subr.bf16.mxu0 0
  %169 = vmatpush1.bf16.msra.mxu0 %v121
  %170 = vmatprep.subr.bf16.mxu0 0
  %171 = vmatpush1.bf16.msra.mxu0 %v142
  %172 = vmatprep.subr.bf16.mxu0 0
  %173 = vmatpush1.bf16.msra.mxu0 0
  %174 = vmatprep.subr.bf16.mxu0 0
  %175 = vmatpush1.bf16.msra.mxu0 0
  %176 = vmatprep.mubr.bf16.mxu0 %v138
  %177 = vmatmul.mubr.bf16.gmra.mrb[0].mxu0 %v52
  %v178 = vpop.f32.mrb[0].mxu0
  %v179 = vadd.f32 0.0, %v178
  %v180 = vpop.f32.mrb[0].mxu0
  %v181 = vpop.f32.mrb[0].mxu0
  %v182 = vpop.f32.mrb[0].mxu0
  %183 = vdwg.mxu0
  %v184 = vld [vmem:[%s1] sm:$0xff]
  %186 = vset.pattern.permute.xlu0 0
  %187 = vperm.xlu0 %186, %v184
  %v188 = vpop.permute.xlu0 %187
  %v190 = vmul.f32 %v179, %v188
  %v191 = vld [vmem:[%s2] sm:$0xff]
  %193 = vset.pattern.permute.xlu0 0
  %194 = vperm.xlu0 %193, %v191
  %v195 = vpop.permute.xlu0 %194
  %v197 = vadd.f32 %v190, %v195
  %v198 = vld [vmem:[%s4] sm:$0xff]
  %v199 = vadd.f32 %v197, %v198
  %v200 = vmax.f32 %v199, 0.0
  %201 = vst [vmem:[%s5] sm:$0xff] %v200
  // Predicated region
  $region22: #{_lambda_.19} parent=0 // pred_check
    _
  $region23: #{_lambda_.19} parent=0 // pred_check_branch
    %203 = sbr.rel (0) target = $region25
  $region24: #{_lambda_.19} parent=0 // pred_region
    _
  $region25: #{_lambda_.19} parent=0 // pred_fallthru
    _
  // Predicated region
  $region26: #{_lambda_.19} parent=0 // pred_check
    _
  $region27: #{_lambda_.19} parent=0 // pred_check_branch
    %205 = sbr.rel (0) target = $region29
  $region28: #{_lambda_.19} parent=0 // pred_region
    _
  $region29: #{_lambda_.19} parent=0 // pred_fallthru
    _

// kernel: _lambda_.24
$region0: #{_lambda_.24}
  #allocation0 [shape = 'u32[]', space=smem, size = 0x4, offset = 0x4, fixed_abs, tag = 'smem constant byte address 0x4 - core index']
  #allocation1 [shape = 'u32[144,128]{1,0:T(1,128)}', space=vmem, size = 0x12000, scoped, tag = 'internal scratch']
  %s0 = inlined_call_operand.vmem [shape: bf16[16,216], index: 0, kind: input, shape index: {}]
  %s1 = inlined_call_operand.vmem [shape: f32[16,1], index: 1, kind: input, shape index: {}]
  %s2 = inlined_call_operand.vmem [shape: f32[16,1], index: 2, kind: input, shape index: {}]
  %s3 = inlined_call_operand.vmem [shape: bf16[216,128], index: 3, kind: input, shape index: {}]
  %s4 = inlined_call_operand.vmem [shape: f32[16,128], index: 4, kind: output, shape index: {}]
  %s5 = sld [smem:[#allocation0]]
  $region26: #{_lambda_.24} parent=0
    _
  %s7 = ssub.s32 1, %s5
  %s8 = scalar_select 0, %s7, %s5
  // Predicated region
  $region2: #{_lambda_.24} parent=0 // pred_check
    _
  $region3: #{_lambda_.24} parent=0 // pred_check_branch
    %10 = sbr.rel (0) target = $region5
  $region4: #{_lambda_.24} parent=0 // pred_region
    _
  $region5: #{_lambda_.24} parent=0 // pred_fallthru
    _
  // Predicated region
  $region6: #{_lambda_.24} parent=0 // pred_check
    _
  $region7: #{_lambda_.24} parent=0 // pred_check_branch
    %12 = sbr.rel (0) target = $region9
  $region8: #{_lambda_.24} parent=0 // pred_region
    _
  $region9: #{_lambda_.24} parent=0 // pred_fallthru
    _
  // Predicated region
  $region10: #{_lambda_.24} parent=0 // pred_check
    _
  $region11: #{_lambda_.24} parent=0 // pred_check_branch
    %14 = sbr.rel (0) target = $region13
  $region12: #{_lambda_.24} parent=0 // pred_region
    _
  $region13: #{_lambda_.24} parent=0 // pred_fallthru
    _
  // Predicated region
  $region14: #{_lambda_.24} parent=0 // pred_check
    _
  $region15: #{_lambda_.24} parent=0 // pred_check_branch
    %16 = sbr.rel (0) target = $region17
  $region16: #{_lambda_.24} parent=0 // pred_region
    _
  $region17: #{_lambda_.24} parent=0 // pred_fallthru
    _
  %v18 = vld [vmem:[%s0] sm:$0xff]
  %v19 = vld [vmem:[%s0 + $0x8] sm:$0xff]
  %v20 = vld [vmem:[%s3] sm:$0xf]
  %v21 = vld [vmem:[%s3 + $0x4] sm:$0xf]
  %v22 = vld [vmem:[%s3 + $0x8] sm:$0xf]
  %v23 = vld [vmem:[%s3 + $0xc] sm:$0xf]
  %v24 = vld [vmem:[%s3 + $0x10] sm:$0xf]
  %v25 = vld [vmem:[%s3 + $0x14] sm:$0xf]
  %v26 = vld [vmem:[%s3 + $0x18] sm:$0xf]
  %v27 = vld [vmem:[%s3 + $0x1c] sm:$0xf]
  %v28 = vld [vmem:[%s3 + $0x20] sm:$0xf]
  %v29 = vld [vmem:[%s3 + $0x24] sm:$0xf]
  %v30 = vld [vmem:[%s3 + $0x28] sm:$0xf]
  %v31 = vld [vmem:[%s3 + $0x2c] sm:$0xf]
  %v32 = vld [vmem:[%s3 + $0x30] sm:$0xf]
  %v33 = vld [vmem:[%s3 + $0x34] sm:$0xf]
  %v34 = vld [vmem:[%s3 + $0x38] sm:$0xf]
  %v35 = vld [vmem:[%s3 + $0x3c] sm:$0xf]
  %v36 = vld [vmem:[%s3 + $0x40] sm:$0xf]
  %v37 = vld [vmem:[%s3 + $0x44] sm:$0xf]
  %v38 = vld [vmem:[%s3 + $0x48] sm:$0xf]
  %v39 = vld [vmem:[%s3 + $0x4c] sm:$0xf]
  %v40 = vld [vmem:[%s3 + $0x50] sm:$0xf]
  %v41 = vld [vmem:[%s3 + $0x54] sm:$0xf]
  %v42 = vld [vmem:[%s3 + $0x58] sm:$0xf]
  %v43 = vld [vmem:[%s3 + $0x5c] sm:$0xf]
  %v44 = vld [vmem:[%s3 + $0x60] sm:$0xf]
  %v45 = vld [vmem:[%s3 + $0x64] sm:$0xf]
  %v46 = vld [vmem:[%s3 + $0x68] sm:$0xf]
  %v49 = vunpack.c.l.b16 %v18
  %v50 = vunpack.c.h.b16 %v18
  %v51 = vunpack.c.l.b16 %v19
  %v52 = vunpack.c.h.b16 %v19
  %v53 = vpack.c.b16 %v51, %v49
  %v54 = vpack.c.b16 %v52, %v50
  %v83 = vunpack.c.l.b16 %v20
  %v84 = vunpack.c.l.b16 %v21
  %v85 = vunpack.c.l.b16 %v22
  %v86 = vunpack.c.l.b16 %v23
  %v87 = vunpack.c.l.b16 %v24
  %v88 = vunpack.c.l.b16 %v25
  %v89 = vunpack.c.l.b16 %v26
  %v90 = vunpack.c.l.b16 %v27
  %v91 = vunpack.c.l.b16 %v28
  %v92 = vunpack.c.l.b16 %v29
  %v93 = vunpack.c.l.b16 %v30
  %v94 = vunpack.c.l.b16 %v31
  %v95 = vunpack.c.l.b16 %v32
  %v96 = vunpack.c.l.b16 %v33
  %v97 = vunpack.c.l.b16 %v34
  %v98 = vunpack.c.l.b16 %v35
  %v99 = vunpack.c.l.b16 %v36
  %v100 = vunpack.c.l.b16 %v37
  %v101 = vunpack.c.l.b16 %v38
  %v102 = vunpack.c.l.b16 %v39
  %v103 = vunpack.c.l.b16 %v40
  %v104 = vunpack.c.l.b16 %v41
  %v105 = vunpack.c.l.b16 %v42
  %v106 = vunpack.c.l.b16 %v43
  %v107 = vunpack.c.l.b16 %v44
  %v108 = vunpack.c.l.b16 %v45
  %v109 = vunpack.c.l.b16 %v46
  %v110 = vpack.c.b16 %v84, %v83
  %v111 = vpack.c.b16 %v86, %v85
  %v112 = vpack.c.b16 %v88, %v87
  %v113 = vpack.c.b16 %v90, %v89
  %v114 = vpack.c.b16 %v92, %v91
  %v115 = vpack.c.b16 %v94, %v93
  %v116 = vpack.c.b16 %v96, %v95
  %v117 = vpack.c.b16 %v98, %v97
  %v118 = vpack.c.b16 %v100, %v99
  %v119 = vpack.c.b16 %v102, %v101
  %v120 = vpack.c.b16 %v104, %v103
  %v121 = vpack.c.b16 %v106, %v105
  %v122 = vpack.c.b16 %v108, %v107
  %v123 = vpack.c.b16 %v109, %v109
  %vm137 = vcmask 719872
  %v139 = vsel %vm137, %v54, 0
  %vm141 = vcmask 1043456
  %v143 = vsel %vm141, %v123, 0
  %145 = vmatprep.subr.bf16.mxu0 0
  %146 = vmatpush1.bf16.msra.mxu0 %v110
  %147 = vmatprep.subr.bf16.mxu0 0
  %148 = vmatpush1.bf16.msra.mxu0 %v111
  %149 = vmatprep.subr.bf16.mxu0 0
  %150 = vmatpush1.bf16.msra.mxu0 %v112
  %151 = vmatprep.subr.bf16.mxu0 0
  %152 = vmatpush1.bf16.msra.mxu0 %v113
  %153 = vmatprep.subr.bf16.mxu0 0
  %154 = vmatpush1.bf16.msra.mxu0 %v114
  %155 = vmatprep.subr.bf16.mxu0 0
  %156 = vmatpush1.bf16.msra.mxu0 %v115
  %157 = vmatprep.subr.bf16.mxu0 0
  %158 = vmatpush1.bf16.msra.mxu0 %v116
  %159 = vmatprep.subr.bf16.mxu0 0
  %160 = vmatpush1.bf16.msra.mxu0 %v117
  %161 = vmatprep.subr.bf16.mxu0 0
  %162 = vmatpush1.bf16.msra.mxu0 %v118
  %163 = vmatprep.subr.bf16.mxu0 0
  %164 = vmatpush1.bf16.msra.mxu0 %v119
  %165 = vmatprep.subr.bf16.mxu0 0
  %166 = vmatpush1.bf16.msra.mxu0 %v120
  %167 = vmatprep.subr.bf16.mxu0 0
  %168 = vmatpush1.bf16.msra.mxu0 %v121
  %169 = vmatprep.subr.bf16.mxu0 0
  %170 = vmatpush1.bf16.msra.mxu0 %v122
  %171 = vmatprep.subr.bf16.mxu0 0
  %172 = vmatpush1.bf16.msra.mxu0 %v143
  %173 = vmatprep.subr.bf16.mxu0 0
  %174 = vmatpush1.bf16.msra.mxu0 0
  %175 = vmatprep.subr.bf16.mxu0 0
  %176 = vmatpush1.bf16.msra.mxu0 0
  %177 = vmatprep.mubr.bf16.mxu0 %v139
  %178 = vmatmul.mubr.bf16.gmra.mrb[0].mxu0 %v53
  %v179 = vpop.f32.mrb[0].mxu0
  %v180 = vadd.f32 0.0, %v179
  %v181 = vpop.f32.mrb[0].mxu0
  %v182 = vpop.f32.mrb[0].mxu0
  %v183 = vadd.f32 0.0, %v182
  %v184 = vpop.f32.mrb[0].mxu0
  %185 = vdwg.mxu0
  %v186 = vld [vmem:[%s1] sm:$0xff]
  %v187 = vld [vmem:[%s1 + $0x8] sm:$0xff]
  %189 = vset.pattern.permute.xlu0 0
  %190 = vperm.xlu0 %189, %v186
  %v191 = vpop.permute.xlu0 %190
  %194 = vset.pattern.permute.xlu0 0
  %195 = vperm.xlu0 %194, %v187
  %v196 = vpop.permute.xlu0 %195
  %v198 = vmul.f32 %v180, %v191
  %v199 = vmul.f32 %v183, %v196
  %v200 = vld [vmem:[%s2] sm:$0xff]
  %v201 = vld [vmem:[%s2 + $0x8] sm:$0xff]
  %203 = vset.pattern.permute.xlu0 0
  %204 = vperm.xlu0 %203, %v200
  %v205 = vpop.permute.xlu0 %204
  %208 = vset.pattern.permute.xlu0 0
  %209 = vperm.xlu0 %208, %v201
  %v210 = vpop.permute.xlu0 %209
  %v212 = vadd.f32 %v198, %v205
  %v213 = vadd.f32 %v199, %v210
  %v214 = vmax.f32 %v212, 0.0
  %v215 = vmax.f32 %v213, 0.0
  %216 = vst [vmem:[%s4] sm:$0xff] %v214
  %217 = vst [vmem:[%s4 + $0x8] sm:$0xff] %v215
  // Predicated region
  $region18: #{_lambda_.24} parent=0 // pred_check
    _
  $region19: #{_lambda_.24} parent=0 // pred_check_branch
    %219 = sbr.rel (0) target = $region21
  $region20: #{_lambda_.24} parent=0 // pred_region
    _
  $region21: #{_lambda_.24} parent=0 // pred_fallthru
    _
  // Predicated region
  $region22: #{_lambda_.24} parent=0 // pred_check
    _
  $region23: #{_lambda_.24} parent=0 // pred_check_branch
    %221 = sbr.rel (0) target = $region25
  $region24: #{_lambda_.24} parent=0 // pred_region
    _
  $region25: #{_lambda_.24} parent=0 // pred_fallthru
    _

// kernel: _lambda_.25
$region0: #{_lambda_.25}
  #allocation0 [shape = 'u32[]', space=smem, size = 0x4, offset = 0x4, fixed_abs, tag = 'smem constant byte address 0x4 - core index']
  #allocation1 [shape = 'u32[144,128]{1,0:T(1,128)}', space=vmem, size = 0x12000, scoped, tag = 'internal scratch']
  %s0 = inlined_call_operand.vmem [shape: bf16[16,432], index: 0, kind: input, shape index: {}]
  %s1 = inlined_call_operand.vmem [shape: f32[16,1], index: 1, kind: input, shape index: {}]
  %s2 = inlined_call_operand.vmem [shape: f32[16,1], index: 2, kind: input, shape index: {}]
  %s3 = inlined_call_operand.vmem [shape: bf16[432,128], index: 3, kind: input, shape index: {}]
  %s4 = inlined_call_operand.vmem [shape: f32[16,128], index: 4, kind: input, shape index: {}]
  %s5 = inlined_call_operand.vmem [shape: f32[16,128], index: 5, kind: output, shape index: {}]
  %s6 = sld [smem:[#allocation0]]
  $region30: #{_lambda_.25} parent=0
    _
  %s8 = ssub.s32 1, %s6
  %s9 = scalar_select 0, %s8, %s6
  // Predicated region
  $region2: #{_lambda_.25} parent=0 // pred_check
    _
  $region3: #{_lambda_.25} parent=0 // pred_check_branch
    %11 = sbr.rel (0) target = $region5
  $region4: #{_lambda_.25} parent=0 // pred_region
    _
  $region5: #{_lambda_.25} parent=0 // pred_fallthru
    _
  // Predicated region
  $region6: #{_lambda_.25} parent=0 // pred_check
    _
  $region7: #{_lambda_.25} parent=0 // pred_check_branch
    %13 = sbr.rel (0) target = $region9
  $region8: #{_lambda_.25} parent=0 // pred_region
    _
  $region9: #{_lambda_.25} parent=0 // pred_fallthru
    _
  // Predicated region
  $region10: #{_lambda_.25} parent=0 // pred_check
    _
  $region11: #{_lambda_.25} parent=0 // pred_check_branch
    %15 = sbr.rel (0) target = $region13
  $region12: #{_lambda_.25} parent=0 // pred_region
    _
  $region13: #{_lambda_.25} parent=0 // pred_fallthru
    _
  // Predicated region
  $region14: #{_lambda_.25} parent=0 // pred_check
    _
  $region15: #{_lambda_.25} parent=0 // pred_check_branch
    %17 = sbr.rel (0) target = $region17
  $region16: #{_lambda_.25} parent=0 // pred_region
    _
  $region17: #{_lambda_.25} parent=0 // pred_fallthru
    _
  // Predicated region
  $region18: #{_lambda_.25} parent=0 // pred_check
    _
  $region19: #{_lambda_.25} parent=0 // pred_check_branch
    %19 = sbr.rel (0) target = $region21
  $region20: #{_lambda_.25} parent=0 // pred_region
    _
  $region21: #{_lambda_.25} parent=0 // pred_fallthru
    _
  %v21 = vld [vmem:[%s0] sm:$0xff]
  %v22 = vld [vmem:[%s0 + $0x8] sm:$0xff]
  %v23 = vld [vmem:[%s0 + $0x10] sm:$0xff]
  %v24 = vld [vmem:[%s0 + $0x18] sm:$0xff]
  %v25 = vld [vmem:[%s3] sm:$0xf]
  %v26 = vld [vmem:[%s3 + $0x4] sm:$0xf]
  %v27 = vld [vmem:[%s3 + $0x8] sm:$0xf]
  %v28 = vld [vmem:[%s3 + $0xc] sm:$0xf]
  %v29 = vld [vmem:[%s3 + $0x10] sm:$0xf]
  %v30 = vld [vmem:[%s3 + $0x14] sm:$0xf]
  %v31 = vld [vmem:[%s3 + $0x18] sm:$0xf]
  %v32 = vld [vmem:[%s3 + $0x1c] sm:$0xf]
  %v33 = vld [vmem:[%s3 + $0x20] sm:$0xf]
  %v34 = vld [vmem:[%s3 + $0x24] sm:$0xf]
  %v35 = vld [vmem:[%s3 + $0x28] sm:$0xf]
  %v36 = vld [vmem:[%s3 + $0x2c] sm:$0xf]
  %v37 = vld [vmem:[%s3 + $0x30] sm:$0xf]
  %v38 = vld [vmem:[%s3 + $0x34] sm:$0xf]
  %v39 = vld [vmem:[%s3 + $0x38] sm:$0xf]
  %v40 = vld [vmem:[%s3 + $0x3c] sm:$0xf]
  %v41 = vld [vmem:[%s3 + $0x40] sm:$0xf]
  %v42 = vld [vmem:[%s3 + $0x44] sm:$0xf]
  %v43 = vld [vmem:[%s3 + $0x48] sm:$0xf]
  %v44 = vld [vmem:[%s3 + $0x4c] sm:$0xf]
  %v45 = vld [vmem:[%s3 + $0x50] sm:$0xf]
  %v46 = vld [vmem:[%s3 + $0x54] sm:$0xf]
  %v47 = vld [vmem:[%s3 + $0x58] sm:$0xf]
  %v48 = vld [vmem:[%s3 + $0x5c] sm:$0xf]
  %v49 = vld [vmem:[%s3 + $0x60] sm:$0xf]
  %v50 = vld [vmem:[%s3 + $0x64] sm:$0xf]
  %v51 = vld [vmem:[%s3 + $0x68] sm:$0xf]
  %v52 = vld [vmem:[%s3 + $0x6c] sm:$0xf]
  %v53 = vld [vmem:[%s3 + $0x70] sm:$0xf]
  %v54 = vld [vmem:[%s3 + $0x74] sm:$0xf]
  %v55 = vld [vmem:[%s3 + $0x78] sm:$0xf]
  %v56 = vld [vmem:[%s3 + $0x7c] sm:$0xf]
  %v57 = vld [vmem:[%s3 + $0x80] sm:$0xf]
  %v58 = vld [vmem:[%s3 + $0x84] sm:$0xf]
  %v59 = vld [vmem:[%s3 + $0x88] sm:$0xf]
  %v60 = vld [vmem:[%s3 + $0x8c] sm:$0xf]
  %v61 = vld [vmem:[%s3 + $0x90] sm:$0xf]
  %v62 = vld [vmem:[%s3 + $0x94] sm:$0xf]
  %v63 = vld [vmem:[%s3 + $0x98] sm:$0xf]
  %v64 = vld [vmem:[%s3 + $0x9c] sm:$0xf]
  %v65 = vld [vmem:[%s3 + $0xa0] sm:$0xf]
  %v66 = vld [vmem:[%s3 + $0xa4] sm:$0xf]
  %v67 = vld [vmem:[%s3 + $0xa8] sm:$0xf]
  %v68 = vld [vmem:[%s3 + $0xac] sm:$0xf]
  %v69 = vld [vmem:[%s3 + $0xb0] sm:$0xf]
  %v70 = vld [vmem:[%s3 + $0xb4] sm:$0xf]
  %v71 = vld [vmem:[%s3 + $0xb8] sm:$0xf]
  %v72 = vld [vmem:[%s3 + $0xbc] sm:$0xf]
  %v73 = vld [vmem:[%s3 + $0xc0] sm:$0xf]
  %v74 = vld [vmem:[%s3 + $0xc4] sm:$0xf]
  %v75 = vld [vmem:[%s3 + $0xc8] sm:$0xf]
  %v76 = vld [vmem:[%s3 + $0xcc] sm:$0xf]
  %v77 = vld [vmem:[%s3 + $0xd0] sm:$0xf]
  %v78 = vld [vmem:[%s3 + $0xd4] sm:$0xf]
  %v83 = vunpack.c.l.b16 %v21
  %v84 = vunpack.c.h.b16 %v21
  %v85 = vunpack.c.l.b16 %v22
  %v86 = vunpack.c.h.b16 %v22
  %v87 = vunpack.c.l.b16 %v23
  %v88 = vunpack.c.h.b16 %v23
  %v89 = vunpack.c.l.b16 %v24
  %v90 = vunpack.c.h.b16 %v24
  %v91 = vpack.c.b16 %v87, %v83
  %v92 = vpack.c.b16 %v88, %v84
  %v93 = vpack.c.b16 %v89, %v85
  %v94 = vpack.c.b16 %v90, %v86
  %v152 = vunpack.c.l.b16 %v25
  %v153 = vunpack.c.l.b16 %v26
  %v154 = vunpack.c.l.b16 %v27
  %v155 = vunpack.c.l.b16 %v28
  %v156 = vunpack.c.l.b16 %v29
  %v157 = vunpack.c.l.b16 %v30
  %v158 = vunpack.c.l.b16 %v31
  %v159 = vunpack.c.l.b16 %v32
  %v160 = vunpack.c.l.b16 %v33
  %v161 = vunpack.c.l.b16 %v34
  %v162 = vunpack.c.l.b16 %v35
  %v163 = vunpack.c.l.b16 %v36
  %v164 = vunpack.c.l.b16 %v37
  %v165 = vunpack.c.l.b16 %v38
  %v166 = vunpack.c.l.b16 %v39
  %v167 = vunpack.c.l.b16 %v40
  %v168 = vunpack.c.l.b16 %v41
  %v169 = vunpack.c.l.b16 %v42
  %v170 = vunpack.c.l.b16 %v43
  %v171 = vunpack.c.l.b16 %v44
  %v172 = vunpack.c.l.b16 %v45
  %v173 = vunpack.c.l.b16 %v46
  %v174 = vunpack.c.l.b16 %v47
  %v175 = vunpack.c.l.b16 %v48
  %v176 = vunpack.c.l.b16 %v49
  %v177 = vunpack.c.l.b16 %v50
  %v178 = vunpack.c.l.b16 %v51
  %v179 = vunpack.c.l.b16 %v52
  %v180 = vunpack.c.l.b16 %v53
  %v181 = vunpack.c.l.b16 %v54
  %v182 = vunpack.c.l.b16 %v55
  %v183 = vunpack.c.l.b16 %v56
  %v184 = vunpack.c.l.b16 %v57
  %v185 = vunpack.c.l.b16 %v58
  %v186 = vunpack.c.l.b16 %v59
  %v187 = vunpack.c.l.b16 %v60
  %v188 = vunpack.c.l.b16 %v61
  %v189 = vunpack.c.l.b16 %v62
  %v190 = vunpack.c.l.b16 %v63
  %v191 = vunpack.c.l.b16 %v64
  %v192 = vunpack.c.l.b16 %v65
  %v193 = vunpack.c.l.b16 %v66
  %v194 = vunpack.c.l.b16 %v67
  %v195 = vunpack.c.l.b16 %v68
  %v196 = vunpack.c.l.b16 %v69
  %v197 = vunpack.c.l.b16 %v70
  %v198 = vunpack.c.l.b16 %v71
  %v199 = vunpack.c.l.b16 %v72
  %v200 = vunpack.c.l.b16 %v73
  %v201 = vunpack.c.l.b16 %v74
  %v202 = vunpack.c.l.b16 %v75
  %v203 = vunpack.c.l.b16 %v76
  %v204 = vunpack.c.l.b16 %v77
  %v205 = vunpack.c.l.b16 %v78
  %v206 = vpack.c.b16 %v153, %v152
  %v207 = vpack.c.b16 %v155, %v154
  %v208 = vpack.c.b16 %v157, %v156
  %v209 = vpack.c.b16 %v159, %v158
  %v210 = vpack.c.b16 %v161, %v160
  %v211 = vpack.c.b16 %v163, %v162
  %v212 = vpack.c.b16 %v165, %v164
  %v213 = vpack.c.b16 %v167, %v166
  %v214 = vpack.c.b16 %v169, %v168
  %v215 = vpack.c.b16 %v171, %v170
  %v216 = vpack.c.b16 %v173, %v172
  %v217 = vpack.c.b16 %v175, %v174
  %v218 = vpack.c.b16 %v177, %v176
  %v219 = vpack.c.b16 %v179, %v178
  %v220 = vpack.c.b16 %v181, %v180
  %v221 = vpack.c.b16 %v183, %v182
  %v222 = vpack.c.b16 %v185, %v184
  %v223 = vpack.c.b16 %v187, %v186
  %v224 = vpack.c.b16 %v189, %v188
  %v225 = vpack.c.b16 %v191, %v190
  %v226 = vpack.c.b16 %v193, %v192
  %v227 = vpack.c.b16 %v195, %v194
  %v228 = vpack.c.b16 %v197, %v196
  %v229 = vpack.c.b16 %v199, %v198
  %v230 = vpack.c.b16 %v201, %v200
  %v231 = vpack.c.b16 %v203, %v202
  %v232 = vpack.c.b16 %v205, %v204
  %vm260 = vcmask 392192
  %v262 = vsel %vm260, %v94, 0
  %264 = vmatprep.subr.bf16.mxu0 0
  %265 = vmatpush1.bf16.msra.mxu0 %v206
  %266 = vmatprep.subr.bf16.mxu0 0
  %267 = vmatpush1.bf16.msra.mxu0 %v207
  %268 = vmatprep.subr.bf16.mxu0 0
  %269 = vmatpush1.bf16.msra.mxu0 %v208
  %270 = vmatprep.subr.bf16.mxu0 0
  %271 = vmatpush1.bf16.msra.mxu0 %v209
  %272 = vmatprep.subr.bf16.mxu0 0
  %273 = vmatpush1.bf16.msra.mxu0 %v210
  %274 = vmatprep.subr.bf16.mxu0 0
  %275 = vmatpush1.bf16.msra.mxu0 %v211
  %276 = vmatprep.subr.bf16.mxu0 0
  %277 = vmatpush1.bf16.msra.mxu0 %v212
  %278 = vmatprep.subr.bf16.mxu0 0
  %279 = vmatpush1.bf16.msra.mxu0 %v213
  %280 = vmatprep.subr.bf16.mxu0 0
  %281 = vmatpush1.bf16.msra.mxu0 %v214
  %282 = vmatprep.subr.bf16.mxu0 0
  %283 = vmatpush1.bf16.msra.mxu0 %v215
  %284 = vmatprep.subr.bf16.mxu0 0
  %285 = vmatpush1.bf16.msra.mxu0 %v216
  %286 = vmatprep.subr.bf16.mxu0 0
  %287 = vmatpush1.bf16.msra.mxu0 %v217
  %288 = vmatprep.subr.bf16.mxu0 0
  %289 = vmatpush1.bf16.msra.mxu0 %v218
  %290 = vmatprep.subr.bf16.mxu0 0
  %291 = vmatpush1.bf16.msra.mxu0 %v219
  %292 = vmatprep.subr.bf16.mxu0 0
  %293 = vmatpush1.bf16.msra.mxu0 %v220
  %294 = vmatprep.subr.bf16.mxu0 0
  %295 = vmatpush1.bf16.msra.mxu0 %v221
  %296 = vmatprep.mubr.bf16.mxu0 %v92
  %297 = vmatmul.mubr.bf16.gmra.mrb[0].mxu0 %v91
  %v298 = vpop.f32.mrb[0].mxu0
  %v299 = vadd.f32 0.0, %v298
  %v300 = vpop.f32.mrb[0].mxu0
  %v301 = vpop.f32.mrb[0].mxu0
  %v302 = vadd.f32 0.0, %v301
  %v303 = vpop.f32.mrb[0].mxu0
  %304 = vdwg.mxu0
  %305 = vmatprep.subr.bf16.mxu0 0
  %306 = vmatpush1.bf16.msra.mxu0 %v222
  %307 = vmatprep.subr.bf16.mxu0 0
  %308 = vmatpush1.bf16.msra.mxu0 %v223
  %309 = vmatprep.subr.bf16.mxu0 0
  %310 = vmatpush1.bf16.msra.mxu0 %v224
  %311 = vmatprep.subr.bf16.mxu0 0
  %312 = vmatpush1.bf16.msra.mxu0 %v225
  %313 = vmatprep.subr.bf16.mxu0 0
  %314 = vmatpush1.bf16.msra.mxu0 %v226
  %315 = vmatprep.subr.bf16.mxu0 0
  %316 = vmatpush1.bf16.msra.mxu0 %v227
  %317 = vmatprep.subr.bf16.mxu0 0
  %318 = vmatpush1.bf16.msra.mxu0 %v228
  %319 = vmatprep.subr.bf16.mxu0 0
  %320 = vmatpush1.bf16.msra.mxu0 %v229
  %321 = vmatprep.subr.bf16.mxu0 0
  %322 = vmatpush1.bf16.msra.mxu0 %v230
  %323 = vmatprep.subr.bf16.mxu0 0
  %324 = vmatpush1.bf16.msra.mxu0 %v231
  %325 = vmatprep.subr.bf16.mxu0 0
  %326 = vmatpush1.bf16.msra.mxu0 %v232
  %327 = vmatprep.subr.bf16.mxu0 0
  %328 = vmatpush1.bf16.msra.mxu0 0
  %329 = vmatprep.subr.bf16.mxu0 0
  %330 = vmatpush1.bf16.msra.mxu0 0
  %331 = vmatprep.subr.bf16.mxu0 0
  %332 = vmatpush1.bf16.msra.mxu0 0
  %333 = vmatprep.subr.bf16.mxu0 0
  %334 = vmatpush1.bf16.msra.mxu0 0
  %335 = vmatprep.subr.bf16.mxu0 0
  %336 = vmatpush1.bf16.msra.mxu0 0
  %337 = vmatprep.mubr.bf16.mxu0 %v262
  %338 = vmatmul.mubr.bf16.gmra.mrb[0].mxu0 %v93
  %v339 = vpop.f32.mrb[0].mxu0
  %v340 = vadd.f32 %v299, %v339
  %v341 = vpop.f32.mrb[0].mxu0
  %v342 = vpop.f32.mrb[0].mxu0
  %v343 = vadd.f32 %v302, %v342
  %v344 = vpop.f32.mrb[0].mxu0
  %345 = vdwg.mxu0
  %v346 = vld [vmem:[%s1] sm:$0xff]
  %v347 = vld [vmem:[%s1 + $0x8] sm:$0xff]
  %349 = vset.pattern.permute.xlu0 0
  %350 = vperm.xlu0 %349, %v346
  %v351 = vpop.permute.xlu0 %350
  %354 = vset.pattern.permute.xlu0 0
  %355 = vperm.xlu0 %354, %v347
  %v356 = vpop.permute.xlu0 %355
  %v358 = vmul.f32 %v340, %v351
  %v359 = vmul.f32 %v343, %v356
  %v360 = vld [vmem:[%s2] sm:$0xff]
  %v361 = vld [vmem:[%s2 + $0x8] sm:$0xff]
  %363 = vset.pattern.permute.xlu0 0
  %364 = vperm.xlu0 %363, %v360
  %v365 = vpop.permute.xlu0 %364
  %368 = vset.pattern.permute.xlu0 0
  %369 = vperm.xlu0 %368, %v361
  %v370 = vpop.permute.xlu0 %369
  %v372 = vadd.f32 %v358, %v365
  %v373 = vadd.f32 %v359, %v370
  %v374 = vld [vmem:[%s4] sm:$0xff]
  %v375 = vld [vmem:[%s4 + $0x8] sm:$0xff]
  %v376 = vadd.f32 %v372, %v374
  %v377 = vadd.f32 %v373, %v375
  %v378 = vmax.f32 %v376, 0.0
  %v379 = vmax.f32 %v377, 0.0
  %380 = vst [vmem:[%s5] sm:$0xff] %v378
  %381 = vst [vmem:[%s5 + $0x8] sm:$0xff] %v379
  // Predicated region
  $region22: #{_lambda_.25} parent=0 // pred_check
    _
  $region23: #{_lambda_.25} parent=0 // pred_check_branch
    %383 = sbr.rel (0) target = $region25
  $region24: #{_lambda_.25} parent=0 // pred_region
    _
  $region25: #{_lambda_.25} parent=0 // pred_fallthru
    _
  // Predicated region
  $region26: #{_lambda_.25} parent=0 // pred_check
    _
  $region27: #{_lambda_.25} parent=0 // pred_check_branch
    %385 = sbr.rel (0) target = $region29
  $region28: #{_lambda_.25} parent=0 // pred_region
    _
  $region29: #{_lambda_.25} parent=0 // pred_fallthru
    _

// kernel: _lambda_.26
$region0: #{_lambda_.26}
  #allocation0 [shape = 'u32[]', space=smem, size = 0x4, offset = 0x4, fixed_abs, tag = 'smem constant byte address 0x4 - core index']
  #allocation1 [shape = 'u32[144,128]{1,0:T(1,128)}', space=vmem, size = 0x12000, scoped, tag = 'internal scratch']
  %s0 = inlined_call_operand.vmem [shape: bf16[16,432], index: 0, kind: input, shape index: {}]
  %s1 = inlined_call_operand.vmem [shape: f32[16,1], index: 1, kind: input, shape index: {}]
  %s2 = inlined_call_operand.vmem [shape: f32[16,1], index: 2, kind: input, shape index: {}]
  %s3 = inlined_call_operand.vmem [shape: bf16[432,128], index: 3, kind: input, shape index: {}]
  %s4 = inlined_call_operand.vmem [shape: f32[16,128], index: 4, kind: output, shape index: {}]
  %s5 = sld [smem:[#allocation0]]
  $region26: #{_lambda_.26} parent=0
    _
  %s7 = ssub.s32 1, %s5
  %s8 = scalar_select 0, %s7, %s5
  // Predicated region
  $region2: #{_lambda_.26} parent=0 // pred_check
    _
  $region3: #{_lambda_.26} parent=0 // pred_check_branch
    %10 = sbr.rel (0) target = $region5
  $region4: #{_lambda_.26} parent=0 // pred_region
    _
  $region5: #{_lambda_.26} parent=0 // pred_fallthru
    _
  // Predicated region
  $region6: #{_lambda_.26} parent=0 // pred_check
    _
  $region7: #{_lambda_.26} parent=0 // pred_check_branch
    %12 = sbr.rel (0) target = $region9
  $region8: #{_lambda_.26} parent=0 // pred_region
    _
  $region9: #{_lambda_.26} parent=0 // pred_fallthru
    _
  // Predicated region
  $region10: #{_lambda_.26} parent=0 // pred_check
    _
  $region11: #{_lambda_.26} parent=0 // pred_check_branch
    %14 = sbr.rel (0) target = $region13
  $region12: #{_lambda_.26} parent=0 // pred_region
    _
  $region13: #{_lambda_.26} parent=0 // pred_fallthru
    _
  // Predicated region
  $region14: #{_lambda_.26} parent=0 // pred_check
    _
  $region15: #{_lambda_.26} parent=0 // pred_check_branch
    %16 = sbr.rel (0) target = $region17
  $region16: #{_lambda_.26} parent=0 // pred_region
    _
  $region17: #{_lambda_.26} parent=0 // pred_fallthru
    _
  %v18 = vld [vmem:[%s0] sm:$0xff]
  %v19 = vld [vmem:[%s0 + $0x8] sm:$0xff]
  %v20 = vld [vmem:[%s0 + $0x10] sm:$0xff]
  %v21 = vld [vmem:[%s0 + $0x18] sm:$0xff]
  %v22 = vld [vmem:[%s3] sm:$0xf]
  %v23 = vld [vmem:[%s3 + $0x4] sm:$0xf]
  %v24 = vld [vmem:[%s3 + $0x8] sm:$0xf]
  %v25 = vld [vmem:[%s3 + $0xc] sm:$0xf]
  %v26 = vld [vmem:[%s3 + $0x10] sm:$0xf]
  %v27 = vld [vmem:[%s3 + $0x14] sm:$0xf]
  %v28 = vld [vmem:[%s3 + $0x18] sm:$0xf]
  %v29 = vld [vmem:[%s3 + $0x1c] sm:$0xf]
  %v30 = vld [vmem:[%s3 + $0x20] sm:$0xf]
  %v31 = vld [vmem:[%s3 + $0x24] sm:$0xf]
  %v32 = vld [vmem:[%s3 + $0x28] sm:$0xf]
  %v33 = vld [vmem:[%s3 + $0x2c] sm:$0xf]
  %v34 = vld [vmem:[%s3 + $0x30] sm:$0xf]
  %v35 = vld [vmem:[%s3 + $0x34] sm:$0xf]
  %v36 = vld [vmem:[%s3 + $0x38] sm:$0xf]
  %v37 = vld [vmem:[%s3 + $0x3c] sm:$0xf]
  %v38 = vld [vmem:[%s3 + $0x40] sm:$0xf]
  %v39 = vld [vmem:[%s3 + $0x44] sm:$0xf]
  %v40 = vld [vmem:[%s3 + $0x48] sm:$0xf]
  %v41 = vld [vmem:[%s3 + $0x4c] sm:$0xf]
  %v42 = vld [vmem:[%s3 + $0x50] sm:$0xf]
  %v43 = vld [vmem:[%s3 + $0x54] sm:$0xf]
  %v44 = vld [vmem:[%s3 + $0x58] sm:$0xf]
  %v45 = vld [vmem:[%s3 + $0x5c] sm:$0xf]
  %v46 = vld [vmem:[%s3 + $0x60] sm:$0xf]
  %v47 = vld [vmem:[%s3 + $0x64] sm:$0xf]
  %v48 = vld [vmem:[%s3 + $0x68] sm:$0xf]
  %v49 = vld [vmem:[%s3 + $0x6c] sm:$0xf]
  %v50 = vld [vmem:[%s3 + $0x70] sm:$0xf]
  %v51 = vld [vmem:[%s3 + $0x74] sm:$0xf]
  %v52 = vld [vmem:[%s3 + $0x78] sm:$0xf]
  %v53 = vld [vmem:[%s3 + $0x7c] sm:$0xf]
  %v54 = vld [vmem:[%s3 + $0x80] sm:$0xf]
  %v55 = vld [vmem:[%s3 + $0x84] sm:$0xf]
  %v56 = vld [vmem:[%s3 + $0x88] sm:$0xf]
  %v57 = vld [vmem:[%s3 + $0x8c] sm:$0xf]
  %v58 = vld [vmem:[%s3 + $0x90] sm:$0xf]
  %v59 = vld [vmem:[%s3 + $0x94] sm:$0xf]
  %v60 = vld [vmem:[%s3 + $0x98] sm:$0xf]
  %v61 = vld [vmem:[%s3 + $0x9c] sm:$0xf]
  %v62 = vld [vmem:[%s3 + $0xa0] sm:$0xf]
  %v63 = vld [vmem:[%s3 + $0xa4] sm:$0xf]
  %v64 = vld [vmem:[%s3 + $0xa8] sm:$0xf]
  %v65 = vld [vmem:[%s3 + $0xac] sm:$0xf]
  %v66 = vld [vmem:[%s3 + $0xb0] sm:$0xf]
  %v67 = vld [vmem:[%s3 + $0xb4] sm:$0xf]
  %v68 = vld [vmem:[%s3 + $0xb8] sm:$0xf]
  %v69 = vld [vmem:[%s3 + $0xbc] sm:$0xf]
  %v70 = vld [vmem:[%s3 + $0xc0] sm:$0xf]
  %v71 = vld [vmem:[%s3 + $0xc4] sm:$0xf]
  %v72 = vld [vmem:[%s3 + $0xc8] sm:$0xf]
  %v73 = vld [vmem:[%s3 + $0xcc] sm:$0xf]
  %v74 = vld [vmem:[%s3 + $0xd0] sm:$0xf]
  %v75 = vld [vmem:[%s3 + $0xd4] sm:$0xf]
  %v80 = vunpack.c.l.b16 %v18
  %v81 = vunpack.c.h.b16 %v18
  %v82 = vunpack.c.l.b16 %v19
  %v83 = vunpack.c.h.b16 %v19
  %v84 = vunpack.c.l.b16 %v20
  %v85 = vunpack.c.h.b16 %v20
  %v86 = vunpack.c.l.b16 %v21
  %v87 = vunpack.c.h.b16 %v21
  %v88 = vpack.c.b16 %v84, %v80
  %v89 = vpack.c.b16 %v85, %v81
  %v90 = vpack.c.b16 %v86, %v82
  %v91 = vpack.c.b16 %v87, %v83
  %v149 = vunpack.c.l.b16 %v22
  %v150 = vunpack.c.l.b16 %v23
  %v151 = vunpack.c.l.b16 %v24
  %v152 = vunpack.c.l.b16 %v25
  %v153 = vunpack.c.l.b16 %v26
  %v154 = vunpack.c.l.b16 %v27
  %v155 = vunpack.c.l.b16 %v28
  %v156 = vunpack.c.l.b16 %v29
  %v157 = vunpack.c.l.b16 %v30
  %v158 = vunpack.c.l.b16 %v31
  %v159 = vunpack.c.l.b16 %v32
  %v160 = vunpack.c.l.b16 %v33
  %v161 = vunpack.c.l.b16 %v34
  %v162 = vunpack.c.l.b16 %v35
  %v163 = vunpack.c.l.b16 %v36
  %v164 = vunpack.c.l.b16 %v37
  %v165 = vunpack.c.l.b16 %v38
  %v166 = vunpack.c.l.b16 %v39
  %v167 = vunpack.c.l.b16 %v40
  %v168 = vunpack.c.l.b16 %v41
  %v169 = vunpack.c.l.b16 %v42
  %v170 = vunpack.c.l.b16 %v43
  %v171 = vunpack.c.l.b16 %v44
  %v172 = vunpack.c.l.b16 %v45
  %v173 = vunpack.c.l.b16 %v46
  %v174 = vunpack.c.l.b16 %v47
  %v175 = vunpack.c.l.b16 %v48
  %v176 = vunpack.c.l.b16 %v49
  %v177 = vunpack.c.l.b16 %v50
  %v178 = vunpack.c.l.b16 %v51
  %v179 = vunpack.c.l.b16 %v52
  %v180 = vunpack.c.l.b16 %v53
  %v181 = vunpack.c.l.b16 %v54
  %v182 = vunpack.c.l.b16 %v55
  %v183 = vunpack.c.l.b16 %v56
  %v184 = vunpack.c.l.b16 %v57
  %v185 = vunpack.c.l.b16 %v58
  %v186 = vunpack.c.l.b16 %v59
  %v187 = vunpack.c.l.b16 %v60
  %v188 = vunpack.c.l.b16 %v61
  %v189 = vunpack.c.l.b16 %v62
  %v190 = vunpack.c.l.b16 %v63
  %v191 = vunpack.c.l.b16 %v64
  %v192 = vunpack.c.l.b16 %v65
  %v193 = vunpack.c.l.b16 %v66
  %v194 = vunpack.c.l.b16 %v67
  %v195 = vunpack.c.l.b16 %v68
  %v196 = vunpack.c.l.b16 %v69
  %v197 = vunpack.c.l.b16 %v70
  %v198 = vunpack.c.l.b16 %v71
  %v199 = vunpack.c.l.b16 %v72
  %v200 = vunpack.c.l.b16 %v73
  %v201 = vunpack.c.l.b16 %v74
  %v202 = vunpack.c.l.b16 %v75
  %v203 = vpack.c.b16 %v150, %v149
  %v204 = vpack.c.b16 %v152, %v151
  %v205 = vpack.c.b16 %v154, %v153
  %v206 = vpack.c.b16 %v156, %v155
  %v207 = vpack.c.b16 %v158, %v157
  %v208 = vpack.c.b16 %v160, %v159
  %v209 = vpack.c.b16 %v162, %v161
  %v210 = vpack.c.b16 %v164, %v163
  %v211 = vpack.c.b16 %v166, %v165
  %v212 = vpack.c.b16 %v168, %v167
  %v213 = vpack.c.b16 %v170, %v169
  %v214 = vpack.c.b16 %v172, %v171
  %v215 = vpack.c.b16 %v174, %v173
  %v216 = vpack.c.b16 %v176, %v175
  %v217 = vpack.c.b16 %v178, %v177
  %v218 = vpack.c.b16 %v180, %v179
  %v219 = vpack.c.b16 %v182, %v181
  %v220 = vpack.c.b16 %v184, %v183
  %v221 = vpack.c.b16 %v186, %v185
  %v222 = vpack.c.b16 %v188, %v187
  %v223 = vpack.c.b16 %v190, %v189
  %v224 = vpack.c.b16 %v192, %v191
  %v225 = vpack.c.b16 %v194, %v193
  %v226 = vpack.c.b16 %v196, %v195
  %v227 = vpack.c.b16 %v198, %v197
  %v228 = vpack.c.b16 %v200, %v199
  %v229 = vpack.c.b16 %v202, %v201
  %vm257 = vcmask 392192
  %v259 = vsel %vm257, %v91, 0
  %261 = vmatprep.subr.bf16.mxu0 0
  %262 = vmatpush1.bf16.msra.mxu0 %v203
  %263 = vmatprep.subr.bf16.mxu0 0
  %264 = vmatpush1.bf16.msra.mxu0 %v204
  %265 = vmatprep.subr.bf16.mxu0 0
  %266 = vmatpush1.bf16.msra.mxu0 %v205
  %267 = vmatprep.subr.bf16.mxu0 0
  %268 = vmatpush1.bf16.msra.mxu0 %v206
  %269 = vmatprep.subr.bf16.mxu0 0
  %270 = vmatpush1.bf16.msra.mxu0 %v207
  %271 = vmatprep.subr.bf16.mxu0 0
  %272 = vmatpush1.bf16.msra.mxu0 %v208
  %273 = vmatprep.subr.bf16.mxu0 0
  %274 = vmatpush1.bf16.msra.mxu0 %v209
  %275 = vmatprep.subr.bf16.mxu0 0
  %276 = vmatpush1.bf16.msra.mxu0 %v210
  %277 = vmatprep.subr.bf16.mxu0 0
  %278 = vmatpush1.bf16.msra.mxu0 %v211
  %279 = vmatprep.subr.bf16.mxu0 0
  %280 = vmatpush1.bf16.msra.mxu0 %v212
  %281 = vmatprep.subr.bf16.mxu0 0
  %282 = vmatpush1.bf16.msra.mxu0 %v213
  %283 = vmatprep.subr.bf16.mxu0 0
  %284 = vmatpush1.bf16.msra.mxu0 %v214
  %285 = vmatprep.subr.bf16.mxu0 0
  %286 = vmatpush1.bf16.msra.mxu0 %v215
  %287 = vmatprep.subr.bf16.mxu0 0
  %288 = vmatpush1.bf16.msra.mxu0 %v216
  %289 = vmatprep.subr.bf16.mxu0 0
  %290 = vmatpush1.bf16.msra.mxu0 %v217
  %291 = vmatprep.subr.bf16.mxu0 0
  %292 = vmatpush1.bf16.msra.mxu0 %v218
  %293 = vmatprep.mubr.bf16.mxu0 %v89
  %294 = vmatmul.mubr.bf16.gmra.mrb[0].mxu0 %v88
  %v295 = vpop.f32.mrb[0].mxu0
  %v296 = vadd.f32 0.0, %v295
  %v297 = vpop.f32.mrb[0].mxu0
  %v298 = vpop.f32.mrb[0].mxu0
  %v299 = vadd.f32 0.0, %v298
  %v300 = vpop.f32.mrb[0].mxu0
  %301 = vdwg.mxu0
  %302 = vmatprep.subr.bf16.mxu0 0
  %303 = vmatpush1.bf16.msra.mxu0 %v219
  %304 = vmatprep.subr.bf16.mxu0 0
  %305 = vmatpush1.bf16.msra.mxu0 %v220
  %306 = vmatprep.subr.bf16.mxu0 0
  %307 = vmatpush1.bf16.msra.mxu0 %v221
  %308 = vmatprep.subr.bf16.mxu0 0
  %309 = vmatpush1.bf16.msra.mxu0 %v222
  %310 = vmatprep.subr.bf16.mxu0 0
  %311 = vmatpush1.bf16.msra.mxu0 %v223
  %312 = vmatprep.subr.bf16.mxu0 0
  %313 = vmatpush1.bf16.msra.mxu0 %v224
  %314 = vmatprep.subr.bf16.mxu0 0
  %315 = vmatpush1.bf16.msra.mxu0 %v225
  %316 = vmatprep.subr.bf16.mxu0 0
  %317 = vmatpush1.bf16.msra.mxu0 %v226
  %318 = vmatprep.subr.bf16.mxu0 0
  %319 = vmatpush1.bf16.msra.mxu0 %v227
  %320 = vmatprep.subr.bf16.mxu0 0
  %321 = vmatpush1.bf16.msra.mxu0 %v228
  %322 = vmatprep.subr.bf16.mxu0 0
  %323 = vmatpush1.bf16.msra.mxu0 %v229
  %324 = vmatprep.subr.bf16.mxu0 0
  %325 = vmatpush1.bf16.msra.mxu0 0
  %326 = vmatprep.subr.bf16.mxu0 0
  %327 = vmatpush1.bf16.msra.mxu0 0
  %328 = vmatprep.subr.bf16.mxu0 0
  %329 = vmatpush1.bf16.msra.mxu0 0
  %330 = vmatprep.subr.bf16.mxu0 0
  %331 = vmatpush1.bf16.msra.mxu0 0
  %332 = vmatprep.subr.bf16.mxu0 0
  %333 = vmatpush1.bf16.msra.mxu0 0
  %334 = vmatprep.mubr.bf16.mxu0 %v259
  %335 = vmatmul.mubr.bf16.gmra.mrb[0].mxu0 %v90
  %v336 = vpop.f32.mrb[0].mxu0
  %v337 = vadd.f32 %v296, %v336
  %v338 = vpop.f32.mrb[0].mxu0
  %v339 = vpop.f32.mrb[0].mxu0
  %v340 = vadd.f32 %v299, %v339
  %v341 = vpop.f32.mrb[0].mxu0
  %342 = vdwg.mxu0
  %v343 = vld [vmem:[%s1] sm:$0xff]
  %v344 = vld [vmem:[%s1 + $0x8] sm:$0xff]
  %346 = vset.pattern.permute.xlu0 0
  %347 = vperm.xlu0 %346, %v343
  %v348 = vpop.permute.xlu0 %347
  %351 = vset.pattern.permute.xlu0 0
  %352 = vperm.xlu0 %351, %v344
  %v353 = vpop.permute.xlu0 %352
  %v355 = vmul.f32 %v337, %v348
  %v356 = vmul.f32 %v340, %v353
  %v357 = vld [vmem:[%s2] sm:$0xff]
  %v358 = vld [vmem:[%s2 + $0x8] sm:$0xff]
  %360 = vset.pattern.permute.xlu0 0
  %361 = vperm.xlu0 %360, %v357
  %v362 = vpop.permute.xlu0 %361
  %365 = vset.pattern.permute.xlu0 0
  %366 = vperm.xlu0 %365, %v358
  %v367 = vpop.permute.xlu0 %366
  %v369 = vadd.f32 %v355, %v362
  %v370 = vadd.f32 %v356, %v367
  %v371 = vmax.f32 %v369, 0.0
  %v372 = vmax.f32 %v370, 0.0
  %373 = vst [vmem:[%s4] sm:$0xff] %v371
  %374 = vst [vmem:[%s4 + $0x8] sm:$0xff] %v372
  // Predicated region
  $region18: #{_lambda_.26} parent=0 // pred_check
    _
  $region19: #{_lambda_.26} parent=0 // pred_check_branch
    %376 = sbr.rel (0) target = $region21
  $region20: #{_lambda_.26} parent=0 // pred_region
    _
  $region21: #{_lambda_.26} parent=0 // pred_fallthru
    _
  // Predicated region
  $region22: #{_lambda_.26} parent=0 // pred_check
    _
  $region23: #{_lambda_.26} parent=0 // pred_check_branch
    %378 = sbr.rel (0) target = $region25
  $region24: #{_lambda_.26} parent=0 // pred_region
    _
  $region25: #{_lambda_.26} parent=0 // pred_fallthru
    _

// kernel: _lambda_.28
$region0: #{_lambda_.28}
  #allocation0 [shape = 'u32[]', space=smem, size = 0x4, offset = 0x4, fixed_abs, tag = 'smem constant byte address 0x4 - core index']
  #allocation1 [shape = 'u32[144,128]{1,0:T(1,128)}', space=vmem, size = 0x12000, scoped, tag = 'internal scratch']
  %s0 = inlined_call_operand.vmem [shape: bf16[32,432], index: 0, kind: input, shape index: {}]
  %s1 = inlined_call_operand.vmem [shape: f32[32,1], index: 1, kind: input, shape index: {}]
  %s2 = inlined_call_operand.vmem [shape: f32[32,1], index: 2, kind: input, shape index: {}]
  %s3 = inlined_call_operand.vmem [shape: bf16[432,128], index: 3, kind: input, shape index: {}]
  %s4 = inlined_call_operand.vmem [shape: f32[32,128], index: 4, kind: output, shape index: {}]
  %s5 = sld [smem:[#allocation0]]
  $region26: #{_lambda_.28} parent=0
    _
  %s7 = ssub.s32 1, %s5
  %s8 = scalar_select 0, %s7, %s5
  // Predicated region
  $region2: #{_lambda_.28} parent=0 // pred_check
    _
  $region3: #{_lambda_.28} parent=0 // pred_check_branch
    %10 = sbr.rel (0) target = $region5
  $region4: #{_lambda_.28} parent=0 // pred_region
    _
  $region5: #{_lambda_.28} parent=0 // pred_fallthru
    _
  // Predicated region
  $region6: #{_lambda_.28} parent=0 // pred_check
    _
  $region7: #{_lambda_.28} parent=0 // pred_check_branch
    %12 = sbr.rel (0) target = $region9
  $region8: #{_lambda_.28} parent=0 // pred_region
    _
  $region9: #{_lambda_.28} parent=0 // pred_fallthru
    _
  // Predicated region
  $region10: #{_lambda_.28} parent=0 // pred_check
    _
  $region11: #{_lambda_.28} parent=0 // pred_check_branch
    %14 = sbr.rel (0) target = $region13
  $region12: #{_lambda_.28} parent=0 // pred_region
    _
  $region13: #{_lambda_.28} parent=0 // pred_fallthru
    _
  // Predicated region
  $region14: #{_lambda_.28} parent=0 // pred_check
    _
  $region15: #{_lambda_.28} parent=0 // pred_check_branch
    %16 = sbr.rel (0) target = $region17
  $region16: #{_lambda_.28} parent=0 // pred_region
    _
  $region17: #{_lambda_.28} parent=0 // pred_fallthru
    _
  %v18 = vld [vmem:[%s0] sm:$0xff]
  %v19 = vld [vmem:[%s0 + $0x8] sm:$0xff]
  %v20 = vld [vmem:[%s0 + $0x10] sm:$0xff]
  %v21 = vld [vmem:[%s0 + $0x18] sm:$0xff]
  %v22 = vld [vmem:[%s0 + $0x20] sm:$0xff]
  %v23 = vld [vmem:[%s0 + $0x28] sm:$0xff]
  %v24 = vld [vmem:[%s0 + $0x30] sm:$0xff]
  %v25 = vld [vmem:[%s0 + $0x38] sm:$0xff]
  %v26 = vld [vmem:[%s3] sm:$0xf]
  %v27 = vld [vmem:[%s3 + $0x4] sm:$0xf]
  %v28 = vld [vmem:[%s3 + $0x8] sm:$0xf]
  %v29 = vld [vmem:[%s3 + $0xc] sm:$0xf]
  %v30 = vld [vmem:[%s3 + $0x10] sm:$0xf]
  %v31 = vld [vmem:[%s3 + $0x14] sm:$0xf]
  %v32 = vld [vmem:[%s3 + $0x18] sm:$0xf]
  %v33 = vld [vmem:[%s3 + $0x1c] sm:$0xf]
  %v34 = vld [vmem:[%s3 + $0x20] sm:$0xf]
  %v35 = vld [vmem:[%s3 + $0x24] sm:$0xf]
  %v36 = vld [vmem:[%s3 + $0x28] sm:$0xf]
  %v37 = vld [vmem:[%s3 + $0x2c] sm:$0xf]
  %v38 = vld [vmem:[%s3 + $0x30] sm:$0xf]
  %v39 = vld [vmem:[%s3 + $0x34] sm:$0xf]
  %v40 = vld [vmem:[%s3 + $0x38] sm:$0xf]
  %v41 = vld [vmem:[%s3 + $0x3c] sm:$0xf]
  %v42 = vld [vmem:[%s3 + $0x40] sm:$0xf]
  %v43 = vld [vmem:[%s3 + $0x44] sm:$0xf]
  %v44 = vld [vmem:[%s3 + $0x48] sm:$0xf]
  %v45 = vld [vmem:[%s3 + $0x4c] sm:$0xf]
  %v46 = vld [vmem:[%s3 + $0x50] sm:$0xf]
  %v47 = vld [vmem:[%s3 + $0x54] sm:$0xf]
  %v48 = vld [vmem:[%s3 + $0x58] sm:$0xf]
  %v49 = vld [vmem:[%s3 + $0x5c] sm:$0xf]
  %v50 = vld [vmem:[%s3 + $0x60] sm:$0xf]
  %v51 = vld [vmem:[%s3 + $0x64] sm:$0xf]
  %v52 = vld [vmem:[%s3 + $0x68] sm:$0xf]
  %v53 = vld [vmem:[%s3 + $0x6c] sm:$0xf]
  %v54 = vld [vmem:[%s3 + $0x70] sm:$0xf]
  %v55 = vld [vmem:[%s3 + $0x74] sm:$0xf]
  %v56 = vld [vmem:[%s3 + $0x78] sm:$0xf]
  %v57 = vld [vmem:[%s3 + $0x7c] sm:$0xf]
  %v58 = vld [vmem:[%s3 + $0x80] sm:$0xf]
  %v59 = vld [vmem:[%s3 + $0x84] sm:$0xf]
  %v60 = vld [vmem:[%s3 + $0x88] sm:$0xf]
  %v61 = vld [vmem:[%s3 + $0x8c] sm:$0xf]
  %v62 = vld [vmem:[%s3 + $0x90] sm:$0xf]
  %v63 = vld [vmem:[%s3 + $0x94] sm:$0xf]
  %v64 = vld [vmem:[%s3 + $0x98] sm:$0xf]
  %v65 = vld [vmem:[%s3 + $0x9c] sm:$0xf]
  %v66 = vld [vmem:[%s3 + $0xa0] sm:$0xf]
  %v67 = vld [vmem:[%s3 + $0xa4] sm:$0xf]
  %v68 = vld [vmem:[%s3 + $0xa8] sm:$0xf]
  %v69 = vld [vmem:[%s3 + $0xac] sm:$0xf]
  %v70 = vld [vmem:[%s3 + $0xb0] sm:$0xf]
  %v71 = vld [vmem:[%s3 + $0xb4] sm:$0xf]
  %v72 = vld [vmem:[%s3 + $0xb8] sm:$0xf]
  %v73 = vld [vmem:[%s3 + $0xbc] sm:$0xf]
  %v74 = vld [vmem:[%s3 + $0xc0] sm:$0xf]
  %v75 = vld [vmem:[%s3 + $0xc4] sm:$0xf]
  %v76 = vld [vmem:[%s3 + $0xc8] sm:$0xf]
  %v77 = vld [vmem:[%s3 + $0xcc] sm:$0xf]
  %v78 = vld [vmem:[%s3 + $0xd0] sm:$0xf]
  %v79 = vld [vmem:[%s3 + $0xd4] sm:$0xf]
  %v88 = vunpack.c.l.b16 %v18
  %v89 = vunpack.c.h.b16 %v18
  %v90 = vunpack.c.l.b16 %v19
  %v91 = vunpack.c.h.b16 %v19
  %v92 = vunpack.c.l.b16 %v20
  %v93 = vunpack.c.h.b16 %v20
  %v94 = vunpack.c.l.b16 %v21
  %v95 = vunpack.c.h.b16 %v21
  %v96 = vunpack.c.l.b16 %v22
  %v97 = vunpack.c.h.b16 %v22
  %v98 = vunpack.c.l.b16 %v23
  %v99 = vunpack.c.h.b16 %v23
  %v100 = vunpack.c.l.b16 %v24
  %v101 = vunpack.c.h.b16 %v24
  %v102 = vunpack.c.l.b16 %v25
  %v103 = vunpack.c.h.b16 %v25
  %v104 = vpack.c.b16 %v92, %v88
  %v105 = vpack.c.b16 %v93, %v89
  %v106 = vpack.c.b16 %v94, %v90
  %v107 = vpack.c.b16 %v95, %v91
  %v108 = vpack.c.b16 %v100, %v96
  %v109 = vpack.c.b16 %v101, %v97
  %v110 = vpack.c.b16 %v102, %v98
  %v111 = vpack.c.b16 %v103, %v99
  %v172 = vunpack.c.l.b16 %v26
  %v173 = vunpack.c.l.b16 %v27
  %v174 = vunpack.c.l.b16 %v28
  %v175 = vunpack.c.l.b16 %v29
  %v176 = vunpack.c.l.b16 %v30
  %v177 = vunpack.c.l.b16 %v31
  %v178 = vunpack.c.l.b16 %v32
  %v179 = vunpack.c.l.b16 %v33
  %v180 = vunpack.c.l.b16 %v34
  %v181 = vunpack.c.l.b16 %v35
  %v182 = vunpack.c.l.b16 %v36
  %v183 = vunpack.c.l.b16 %v37
  %v184 = vunpack.c.l.b16 %v38
  %v185 = vunpack.c.l.b16 %v39
  %v186 = vunpack.c.l.b16 %v40
  %v187 = vunpack.c.l.b16 %v41
  %v188 = vunpack.c.l.b16 %v42
  %v189 = vunpack.c.l.b16 %v43
  %v190 = vunpack.c.l.b16 %v44
  %v191 = vunpack.c.l.b16 %v45
  %v192 = vunpack.c.l.b16 %v46
  %v193 = vunpack.c.l.b16 %v47
  %v194 = vunpack.c.l.b16 %v48
  %v195 = vunpack.c.l.b16 %v49
  %v196 = vunpack.c.l.b16 %v50
  %v197 = vunpack.c.l.b16 %v51
  %v198 = vunpack.c.l.b16 %v52
  %v199 = vunpack.c.l.b16 %v53
  %v200 = vunpack.c.l.b16 %v54
  %v201 = vunpack.c.l.b16 %v55
  %v202 = vunpack.c.l.b16 %v56
  %v203 = vunpack.c.l.b16 %v57
  %v204 = vunpack.c.l.b16 %v58
  %v205 = vunpack.c.l.b16 %v59
  %v206 = vunpack.c.l.b16 %v60
  %v207 = vunpack.c.l.b16 %v61
  %v208 = vunpack.c.l.b16 %v62
  %v209 = vunpack.c.l.b16 %v63
  %v210 = vunpack.c.l.b16 %v64
  %v211 = vunpack.c.l.b16 %v65
  %v212 = vunpack.c.l.b16 %v66
  %v213 = vunpack.c.l.b16 %v67
  %v214 = vunpack.c.l.b16 %v68
  %v215 = vunpack.c.l.b16 %v69
  %v216 = vunpack.c.l.b16 %v70
  %v217 = vunpack.c.l.b16 %v71
  %v218 = vunpack.c.l.b16 %v72
  %v219 = vunpack.c.l.b16 %v73
  %v220 = vunpack.c.l.b16 %v74
  %v221 = vunpack.c.l.b16 %v75
  %v222 = vunpack.c.l.b16 %v76
  %v223 = vunpack.c.l.b16 %v77
  %v224 = vunpack.c.l.b16 %v78
  %v225 = vunpack.c.l.b16 %v79
  %v226 = vpack.c.b16 %v173, %v172
  %v227 = vpack.c.b16 %v175, %v174
  %v228 = vpack.c.b16 %v177, %v176
  %v229 = vpack.c.b16 %v179, %v178
  %v230 = vpack.c.b16 %v181, %v180
  %v231 = vpack.c.b16 %v183, %v182
  %v232 = vpack.c.b16 %v185, %v184
  %v233 = vpack.c.b16 %v187, %v186
  %v234 = vpack.c.b16 %v189, %v188
  %v235 = vpack.c.b16 %v191, %v190
  %v236 = vpack.c.b16 %v193, %v192
  %v237 = vpack.c.b16 %v195, %v194
  %v238 = vpack.c.b16 %v197, %v196
  %v239 = vpack.c.b16 %v199, %v198
  %v240 = vpack.c.b16 %v201, %v200
  %v241 = vpack.c.b16 %v203, %v202
  %v242 = vpack.c.b16 %v205, %v204
  %v243 = vpack.c.b16 %v207, %v206
  %v244 = vpack.c.b16 %v209, %v208
  %v245 = vpack.c.b16 %v211, %v210
  %v246 = vpack.c.b16 %v213, %v212
  %v247 = vpack.c.b16 %v215, %v214
  %v248 = vpack.c.b16 %v217, %v216
  %v249 = vpack.c.b16 %v219, %v218
  %v250 = vpack.c.b16 %v221, %v220
  %v251 = vpack.c.b16 %v223, %v222
  %v252 = vpack.c.b16 %v225, %v224
  %vm280 = vcmask 392192
  %v282 = vsel %vm280, %v107, 0
  %v285 = vsel %vm280, %v111, 0
  %287 = vmatprep.subr.bf16.mxu0 0
  %288 = vmatpush1.bf16.msra.mxu0 %v226
  %289 = vmatprep.subr.bf16.mxu0 0
  %290 = vmatpush1.bf16.msra.mxu0 %v227
  %291 = vmatprep.subr.bf16.mxu0 0
  %292 = vmatpush1.bf16.msra.mxu0 %v228
  %293 = vmatprep.subr.bf16.mxu0 0
  %294 = vmatpush1.bf16.msra.mxu0 %v229
  %295 = vmatprep.subr.bf16.mxu0 0
  %296 = vmatpush1.bf16.msra.mxu0 %v230
  %297 = vmatprep.subr.bf16.mxu0 0
  %298 = vmatpush1.bf16.msra.mxu0 %v231
  %299 = vmatprep.subr.bf16.mxu0 0
  %300 = vmatpush1.bf16.msra.mxu0 %v232
  %301 = vmatprep.subr.bf16.mxu0 0
  %302 = vmatpush1.bf16.msra.mxu0 %v233
  %303 = vmatprep.subr.bf16.mxu0 0
  %304 = vmatpush1.bf16.msra.mxu0 %v234
  %305 = vmatprep.subr.bf16.mxu0 0
  %306 = vmatpush1.bf16.msra.mxu0 %v235
  %307 = vmatprep.subr.bf16.mxu0 0
  %308 = vmatpush1.bf16.msra.mxu0 %v236
  %309 = vmatprep.subr.bf16.mxu0 0
  %310 = vmatpush1.bf16.msra.mxu0 %v237
  %311 = vmatprep.subr.bf16.mxu0 0
  %312 = vmatpush1.bf16.msra.mxu0 %v238
  %313 = vmatprep.subr.bf16.mxu0 0
  %314 = vmatpush1.bf16.msra.mxu0 %v239
  %315 = vmatprep.subr.bf16.mxu0 0
  %316 = vmatpush1.bf16.msra.mxu0 %v240
  %317 = vmatprep.subr.bf16.mxu0 0
  %318 = vmatpush1.bf16.msra.mxu0 %v241
  %319 = vmatprep.mubr.bf16.mxu0 %v105
  %320 = vmatmul.mubr.bf16.gmra.mrb[0].mxu0 %v104
  %v321 = vpop.f32.mrb[0].mxu0
  %v322 = vadd.f32 0.0, %v321
  %v323 = vpop.f32.mrb[0].mxu0
  %v324 = vpop.f32.mrb[0].mxu0
  %v325 = vadd.f32 0.0, %v324
  %v326 = vpop.f32.mrb[0].mxu0
  %327 = vmatprep.mubr.bf16.mxu0 %v109
  %328 = vmatmul.mubr.bf16.gmra.mrb[0].mxu0 %v108
  %v329 = vpop.f32.mrb[0].mxu0
  %v330 = vadd.f32 0.0, %v329
  %v331 = vpop.f32.mrb[0].mxu0
  %v332 = vpop.f32.mrb[0].mxu0
  %v333 = vadd.f32 0.0, %v332
  %v334 = vpop.f32.mrb[0].mxu0
  %335 = vdwg.mxu0
  %336 = vmatprep.subr.bf16.mxu0 0
  %337 = vmatpush1.bf16.msra.mxu0 %v242
  %338 = vmatprep.subr.bf16.mxu0 0
  %339 = vmatpush1.bf16.msra.mxu0 %v243
  %340 = vmatprep.subr.bf16.mxu0 0
  %341 = vmatpush1.bf16.msra.mxu0 %v244
  %342 = vmatprep.subr.bf16.mxu0 0
  %343 = vmatpush1.bf16.msra.mxu0 %v245
  %344 = vmatprep.subr.bf16.mxu0 0
  %345 = vmatpush1.bf16.msra.mxu0 %v246
  %346 = vmatprep.subr.bf16.mxu0 0
  %347 = vmatpush1.bf16.msra.mxu0 %v247
  %348 = vmatprep.subr.bf16.mxu0 0
  %349 = vmatpush1.bf16.msra.mxu0 %v248
  %350 = vmatprep.subr.bf16.mxu0 0
  %351 = vmatpush1.bf16.msra.mxu0 %v249
  %352 = vmatprep.subr.bf16.mxu0 0
  %353 = vmatpush1.bf16.msra.mxu0 %v250
  %354 = vmatprep.subr.bf16.mxu0 0
  %355 = vmatpush1.bf16.msra.mxu0 %v251
  %356 = vmatprep.subr.bf16.mxu0 0
  %357 = vmatpush1.bf16.msra.mxu0 %v252
  %358 = vmatprep.subr.bf16.mxu0 0
  %359 = vmatpush1.bf16.msra.mxu0 0
  %360 = vmatprep.subr.bf16.mxu0 0
  %361 = vmatpush1.bf16.msra.mxu0 0
  %362 = vmatprep.subr.bf16.mxu0 0
  %363 = vmatpush1.bf16.msra.mxu0 0
  %364 = vmatprep.subr.bf16.mxu0 0
  %365 = vmatpush1.bf16.msra.mxu0 0
  %366 = vmatprep.subr.bf16.mxu0 0
  %367 = vmatpush1.bf16.msra.mxu0 0
  %368 = vmatprep.mubr.bf16.mxu0 %v282
  %369 = vmatmul.mubr.bf16.gmra.mrb[0].mxu0 %v106
  %v370 = vpop.f32.mrb[0].mxu0
  %v371 = vadd.f32 %v322, %v370
  %v372 = vpop.f32.mrb[0].mxu0
  %v373 = vpop.f32.mrb[0].mxu0
  %v374 = vadd.f32 %v325, %v373
  %v375 = vpop.f32.mrb[0].mxu0
  %376 = vmatprep.mubr.bf16.mxu0 %v285
  %377 = vmatmul.mubr.bf16.gmra.mrb[0].mxu0 %v110
  %v378 = vpop.f32.mrb[0].mxu0
  %v379 = vadd.f32 %v330, %v378
  %v380 = vpop.f32.mrb[0].mxu0
  %v381 = vpop.f32.mrb[0].mxu0
  %v382 = vadd.f32 %v333, %v381
  %v383 = vpop.f32.mrb[0].mxu0
  %384 = vdwg.mxu0
  %v385 = vld [vmem:[%s1] sm:$0xff]
  %v386 = vld [vmem:[%s1 + $0x8] sm:$0xff]
  %v387 = vld [vmem:[%s1 + $0x10] sm:$0xff]
  %v388 = vld [vmem:[%s1 + $0x18] sm:$0xff]
  %390 = vset.pattern.permute.xlu0 0
  %391 = vperm.xlu0 %390, %v385
  %v392 = vpop.permute.xlu0 %391
  %395 = vset.pattern.permute.xlu0 0
  %396 = vperm.xlu0 %395, %v386
  %v397 = vpop.permute.xlu0 %396
  %400 = vset.pattern.permute.xlu0 0
  %401 = vperm.xlu0 %400, %v387
  %v402 = vpop.permute.xlu0 %401
  %405 = vset.pattern.permute.xlu0 0
  %406 = vperm.xlu0 %405, %v388
  %v407 = vpop.permute.xlu0 %406
  %v409 = vmul.f32 %v371, %v392
  %v410 = vmul.f32 %v374, %v397
  %v411 = vmul.f32 %v379, %v402
  %v412 = vmul.f32 %v382, %v407
  %v413 = vld [vmem:[%s2] sm:$0xff]
  %v414 = vld [vmem:[%s2 + $0x8] sm:$0xff]
  %v415 = vld [vmem:[%s2 + $0x10] sm:$0xff]
  %v416 = vld [vmem:[%s2 + $0x18] sm:$0xff]
  %418 = vset.pattern.permute.xlu0 0
  %419 = vperm.xlu0 %418, %v413
  %v420 = vpop.permute.xlu0 %419
  %423 = vset.pattern.permute.xlu0 0
  %424 = vperm.xlu0 %423, %v414
  %v425 = vpop.permute.xlu0 %424
  %428 = vset.pattern.permute.xlu0 0
  %429 = vperm.xlu0 %428, %v415
  %v430 = vpop.permute.xlu0 %429
  %433 = vset.pattern.permute.xlu0 0
  %434 = vperm.xlu0 %433, %v416
  %v435 = vpop.permute.xlu0 %434
  %v437 = vadd.f32 %v409, %v420
  %v438 = vadd.f32 %v410, %v425
  %v439 = vadd.f32 %v411, %v430
  %v440 = vadd.f32 %v412, %v435
  %v441 = vmax.f32 %v437, 0.0
  %v442 = vmax.f32 %v438, 0.0
  %v443 = vmax.f32 %v439, 0.0
  %v444 = vmax.f32 %v440, 0.0
  %445 = vst [vmem:[%s4] sm:$0xff] %v441
  %446 = vst [vmem:[%s4 + $0x8] sm:$0xff] %v442
  %447 = vst [vmem:[%s4 + $0x10] sm:$0xff] %v443
  %448 = vst [vmem:[%s4 + $0x18] sm:$0xff] %v444
  // Predicated region
  $region18: #{_lambda_.28} parent=0 // pred_check
    _
  $region19: #{_lambda_.28} parent=0 // pred_check_branch
    %450 = sbr.rel (0) target = $region21
  $region20: #{_lambda_.28} parent=0 // pred_region
    _
  $region21: #{_lambda_.28} parent=0 // pred_fallthru
    _
  // Predicated region
  $region22: #{_lambda_.28} parent=0 // pred_check
    _
  $region23: #{_lambda_.28} parent=0 // pred_check_branch
    %452 = sbr.rel (0) target = $region25
  $region24: #{_lambda_.28} parent=0 // pred_region
    _
  $region25: #{_lambda_.28} parent=0 // pred_fallthru
    _

// kernel: _lambda_.29
$region0: #{_lambda_.29}
  #allocation0 [shape = 'u32[]', space=smem, size = 0x4, offset = 0x4, fixed_abs, tag = 'smem constant byte address 0x4 - core index']
  #allocation1 [shape = 'u32[144,128]{1,0:T(1,128)}', space=vmem, size = 0x12000, scoped, tag = 'internal scratch']
  %s0 = inlined_call_operand.vmem [shape: bf16[32,864], index: 0, kind: input, shape index: {}]
  %s1 = inlined_call_operand.vmem [shape: f32[32,1], index: 1, kind: input, shape index: {}]
  %s2 = inlined_call_operand.vmem [shape: f32[32,1], index: 2, kind: input, shape index: {}]
  %s3 = inlined_call_operand.vmem [shape: bf16[864,128], index: 3, kind: input, shape index: {}]
  %s4 = inlined_call_operand.vmem [shape: f32[32,128], index: 4, kind: input, shape index: {}]
  %s5 = inlined_call_operand.vmem [shape: f32[32,128], index: 5, kind: output, shape index: {}]
  %s6 = sld [smem:[#allocation0]]
  $region30: #{_lambda_.29} parent=0
    _
  %s8 = ssub.s32 1, %s6
  %s9 = scalar_select 0, %s8, %s6
  // Predicated region
  $region2: #{_lambda_.29} parent=0 // pred_check
    _
  $region3: #{_lambda_.29} parent=0 // pred_check_branch
    %11 = sbr.rel (0) target = $region5
  $region4: #{_lambda_.29} parent=0 // pred_region
    _
  $region5: #{_lambda_.29} parent=0 // pred_fallthru
    _
  // Predicated region
  $region6: #{_lambda_.29} parent=0 // pred_check
    _
  $region7: #{_lambda_.29} parent=0 // pred_check_branch
    %13 = sbr.rel (0) target = $region9
  $region8: #{_lambda_.29} parent=0 // pred_region
    _
  $region9: #{_lambda_.29} parent=0 // pred_fallthru
    _
  // Predicated region
  $region10: #{_lambda_.29} parent=0 // pred_check
    _
  $region11: #{_lambda_.29} parent=0 // pred_check_branch
    %15 = sbr.rel (0) target = $region13
  $region12: #{_lambda_.29} parent=0 // pred_region
    _
  $region13: #{_lambda_.29} parent=0 // pred_fallthru
    _
  // Predicated region
  $region14: #{_lambda_.29} parent=0 // pred_check
    _
  $region15: #{_lambda_.29} parent=0 // pred_check_branch
    %17 = sbr.rel (0) target = $region17
  $region16: #{_lambda_.29} parent=0 // pred_region
    _
  $region17: #{_lambda_.29} parent=0 // pred_fallthru
    _
  // Predicated region
  $region18: #{_lambda_.29} parent=0 // pred_check
    _
  $region19: #{_lambda_.29} parent=0 // pred_check_branch
    %19 = sbr.rel (0) target = $region21
  $region20: #{_lambda_.29} parent=0 // pred_region
    _
  $region21: #{_lambda_.29} parent=0 // pred_fallthru
    _
  %v21 = vld [vmem:[%s0] sm:$0xff]
  %v22 = vld [vmem:[%s0 + $0x8] sm:$0xff]
  %v23 = vld [vmem:[%s0 + $0x10] sm:$0xff]
  %v24 = vld [vmem:[%s0 + $0x18] sm:$0xf]
  %v25 = vld [vmem:[%s0 + $0x1c] sm:$0xff]
  %v26 = vld [vmem:[%s0 + $0x24] sm:$0xff]
  %v27 = vld [vmem:[%s0 + $0x2c] sm:$0xff]
  %v28 = vld [vmem:[%s0 + $0x34] sm:$0xf]
  %v29 = vld [vmem:[%s0 + $0x38] sm:$0xff]
  %v30 = vld [vmem:[%s0 + $0x40] sm:$0xff]
  %v31 = vld [vmem:[%s0 + $0x48] sm:$0xff]
  %v32 = vld [vmem:[%s0 + $0x50] sm:$0xf]
  %v33 = vld [vmem:[%s0 + $0x54] sm:$0xff]
  %v34 = vld [vmem:[%s0 + $0x5c] sm:$0xff]
  %v35 = vld [vmem:[%s0 + $0x64] sm:$0xff]
  %v36 = vld [vmem:[%s0 + $0x6c] sm:$0xf]
  %v37 = vld [vmem:[%s3] sm:$0xf]
  %v38 = vld [vmem:[%s3 + $0x4] sm:$0xf]
  %v39 = vld [vmem:[%s3 + $0x8] sm:$0xf]
  %v40 = vld [vmem:[%s3 + $0xc] sm:$0xf]
  %v41 = vld [vmem:[%s3 + $0x10] sm:$0xf]
  %v42 = vld [vmem:[%s3 + $0x14] sm:$0xf]
  %v43 = vld [vmem:[%s3 + $0x18] sm:$0xf]
  %v44 = vld [vmem:[%s3 + $0x1c] sm:$0xf]
  %v45 = vld [vmem:[%s3 + $0x20] sm:$0xf]
  %v46 = vld [vmem:[%s3 + $0x24] sm:$0xf]
  %v47 = vld [vmem:[%s3 + $0x28] sm:$0xf]
  %v48 = vld [vmem:[%s3 + $0x2c] sm:$0xf]
  %v49 = vld [vmem:[%s3 + $0x30] sm:$0xf]
  %v50 = vld [vmem:[%s3 + $0x34] sm:$0xf]
  %v51 = vld [vmem:[%s3 + $0x38] sm:$0xf]
  %v52 = vld [vmem:[%s3 + $0x3c] sm:$0xf]
  %v53 = vld [vmem:[%s3 + $0x40] sm:$0xf]
  %v54 = vld [vmem:[%s3 + $0x44] sm:$0xf]
  %v55 = vld [vmem:[%s3 + $0x48] sm:$0xf]
  %v56 = vld [vmem:[%s3 + $0x4c] sm:$0xf]
  %v57 = vld [vmem:[%s3 + $0x50] sm:$0xf]
  %v58 = vld [vmem:[%s3 + $0x54] sm:$0xf]
  %v59 = vld [vmem:[%s3 + $0x58] sm:$0xf]
  %v60 = vld [vmem:[%s3 + $0x5c] sm:$0xf]
  %v61 = vld [vmem:[%s3 + $0x60] sm:$0xf]
  %v62 = vld [vmem:[%s3 + $0x64] sm:$0xf]
  %v63 = vld [vmem:[%s3 + $0x68] sm:$0xf]
  %v64 = vld [vmem:[%s3 + $0x6c] sm:$0xf]
  %v65 = vld [vmem:[%s3 + $0x70] sm:$0xf]
  %v66 = vld [vmem:[%s3 + $0x74] sm:$0xf]
  %v67 = vld [vmem:[%s3 + $0x78] sm:$0xf]
  %v68 = vld [vmem:[%s3 + $0x7c] sm:$0xf]
  %v69 = vld [vmem:[%s3 + $0x80] sm:$0xf]
  %v70 = vld [vmem:[%s3 + $0x84] sm:$0xf]
  %v71 = vld [vmem:[%s3 + $0x88] sm:$0xf]
  %v72 = vld [vmem:[%s3 + $0x8c] sm:$0xf]
  %v73 = vld [vmem:[%s3 + $0x90] sm:$0xf]
  %v74 = vld [vmem:[%s3 + $0x94] sm:$0xf]
  %v75 = vld [vmem:[%s3 + $0x98] sm:$0xf]
  %v76 = vld [vmem:[%s3 + $0x9c] sm:$0xf]
  %v77 = vld [vmem:[%s3 + $0xa0] sm:$0xf]
  %v78 = vld [vmem:[%s3 + $0xa4] sm:$0xf]
  %v79 = vld [vmem:[%s3 + $0xa8] sm:$0xf]
  %v80 = vld [vmem:[%s3 + $0xac] sm:$0xf]
  %v81 = vld [vmem:[%s3 + $0xb0] sm:$0xf]
  %v82 = vld [vmem:[%s3 + $0xb4] sm:$0xf]
  %v83 = vld [vmem:[%s3 + $0xb8] sm:$0xf]
  %v84 = vld [vmem:[%s3 + $0xbc] sm:$0xf]
  %v85 = vld [vmem:[%s3 + $0xc0] sm:$0xf]
  %v86 = vld [vmem:[%s3 + $0xc4] sm:$0xf]
  %v87 = vld [vmem:[%s3 + $0xc8] sm:$0xf]
  %v88 = vld [vmem:[%s3 + $0xcc] sm:$0xf]
  %v89 = vld [vmem:[%s3 + $0xd0] sm:$0xf]
  %v90 = vld [vmem:[%s3 + $0xd4] sm:$0xf]
  %v91 = vld [vmem:[%s3 + $0xd8] sm:$0xf]
  %v92 = vld [vmem:[%s3 + $0xdc] sm:$0xf]
  %v93 = vld [vmem:[%s3 + $0xe0] sm:$0xf]
  %v94 = vld [vmem:[%s3 + $0xe4] sm:$0xf]
  %v95 = vld [vmem:[%s3 + $0xe8] sm:$0xf]
  %v96 = vld [vmem:[%s3 + $0xec] sm:$0xf]
  %v97 = vld [vmem:[%s3 + $0xf0] sm:$0xf]
  %v98 = vld [vmem:[%s3 + $0xf4] sm:$0xf]
  %v99 = vld [vmem:[%s3 + $0xf8] sm:$0xf]
  %v100 = vld [vmem:[%s3 + $0xfc] sm:$0xf]
  %v101 = vld [vmem:[%s3 + $0x100] sm:$0xf]
  %v102 = vld [vmem:[%s3 + $0x104] sm:$0xf]
  %v103 = vld [vmem:[%s3 + $0x108] sm:$0xf]
  %v104 = vld [vmem:[%s3 + $0x10c] sm:$0xf]
  %v105 = vld [vmem:[%s3 + $0x110] sm:$0xf]
  %v106 = vld [vmem:[%s3 + $0x114] sm:$0xf]
  %v107 = vld [vmem:[%s3 + $0x118] sm:$0xf]
  %v108 = vld [vmem:[%s3 + $0x11c] sm:$0xf]
  %v109 = vld [vmem:[%s3 + $0x120] sm:$0xf]
  %v110 = vld [vmem:[%s3 + $0x124] sm:$0xf]
  %v111 = vld [vmem:[%s3 + $0x128] sm:$0xf]
  %v112 = vld [vmem:[%s3 + $0x12c] sm:$0xf]
  %v113 = vld [vmem:[%s3 + $0x130] sm:$0xf]
  %v114 = vld [vmem:[%s3 + $0x134] sm:$0xf]
  %v115 = vld [vmem:[%s3 + $0x138] sm:$0xf]
  %v116 = vld [vmem:[%s3 + $0x13c] sm:$0xf]
  %v117 = vld [vmem:[%s3 + $0x140] sm:$0xf]
  %v118 = vld [vmem:[%s3 + $0x144] sm:$0xf]
  %v119 = vld [vmem:[%s3 + $0x148] sm:$0xf]
  %v120 = vld [vmem:[%s3 + $0x14c] sm:$0xf]
  %v121 = vld [vmem:[%s3 + $0x150] sm:$0xf]
  %v122 = vld [vmem:[%s3 + $0x154] sm:$0xf]
  %v123 = vld [vmem:[%s3 + $0x158] sm:$0xf]
  %v124 = vld [vmem:[%s3 + $0x15c] sm:$0xf]
  %v125 = vld [vmem:[%s3 + $0x160] sm:$0xf]
  %v126 = vld [vmem:[%s3 + $0x164] sm:$0xf]
  %v127 = vld [vmem:[%s3 + $0x168] sm:$0xf]
  %v128 = vld [vmem:[%s3 + $0x16c] sm:$0xf]
  %v129 = vld [vmem:[%s3 + $0x170] sm:$0xf]
  %v130 = vld [vmem:[%s3 + $0x174] sm:$0xf]
  %v131 = vld [vmem:[%s3 + $0x178] sm:$0xf]
  %v132 = vld [vmem:[%s3 + $0x17c] sm:$0xf]
  %v133 = vld [vmem:[%s3 + $0x180] sm:$0xf]
  %v134 = vld [vmem:[%s3 + $0x184] sm:$0xf]
  %v135 = vld [vmem:[%s3 + $0x188] sm:$0xf]
  %v136 = vld [vmem:[%s3 + $0x18c] sm:$0xf]
  %v137 = vld [vmem:[%s3 + $0x190] sm:$0xf]
  %v138 = vld [vmem:[%s3 + $0x194] sm:$0xf]
  %v139 = vld [vmem:[%s3 + $0x198] sm:$0xf]
  %v140 = vld [vmem:[%s3 + $0x19c] sm:$0xf]
  %v141 = vld [vmem:[%s3 + $0x1a0] sm:$0xf]
  %v142 = vld [vmem:[%s3 + $0x1a4] sm:$0xf]
  %v143 = vld [vmem:[%s3 + $0x1a8] sm:$0xf]
  %v144 = vld [vmem:[%s3 + $0x1ac] sm:$0xf]
  %v161 = vunpack.c.l.b16 %v21
  %v162 = vunpack.c.h.b16 %v21
  %v163 = vunpack.c.l.b16 %v22
  %v164 = vunpack.c.h.b16 %v22
  %v165 = vunpack.c.l.b16 %v23
  %v166 = vunpack.c.h.b16 %v23
  %v167 = vunpack.c.l.b16 %v24
  %v168 = vunpack.c.l.b16 %v25
  %v169 = vunpack.c.h.b16 %v25
  %v170 = vunpack.c.l.b16 %v26
  %v171 = vunpack.c.h.b16 %v26
  %v172 = vunpack.c.l.b16 %v27
  %v173 = vunpack.c.h.b16 %v27
  %v174 = vunpack.c.l.b16 %v28
  %v175 = vunpack.c.l.b16 %v29
  %v176 = vunpack.c.h.b16 %v29
  %v177 = vunpack.c.l.b16 %v30
  %v178 = vunpack.c.h.b16 %v30
  %v179 = vunpack.c.l.b16 %v31
  %v180 = vunpack.c.h.b16 %v31
  %v181 = vunpack.c.l.b16 %v32
  %v182 = vunpack.c.l.b16 %v33
  %v183 = vunpack.c.h.b16 %v33
  %v184 = vunpack.c.l.b16 %v34
  %v185 = vunpack.c.h.b16 %v34
  %v186 = vunpack.c.l.b16 %v35
  %v187 = vunpack.c.h.b16 %v35
  %v188 = vunpack.c.l.b16 %v36
  %v189 = vpack.c.b16 %v168, %v161
  %v190 = vpack.c.b16 %v169, %v162
  %v191 = vpack.c.b16 %v170, %v163
  %v192 = vpack.c.b16 %v171, %v164
  %v193 = vpack.c.b16 %v172, %v165
  %v194 = vpack.c.b16 %v173, %v166
  %v195 = vpack.c.b16 %v174, %v167
  %v196 = vpack.c.b16 %v182, %v175
  %v197 = vpack.c.b16 %v183, %v176
  %v198 = vpack.c.b16 %v184, %v177
  %v199 = vpack.c.b16 %v185, %v178
  %v200 = vpack.c.b16 %v186, %v179
  %v201 = vpack.c.b16 %v187, %v180
  %v202 = vpack.c.b16 %v188, %v181
  %v323 = vunpack.c.l.b16 %v37
  %v324 = vunpack.c.l.b16 %v38
  %v325 = vunpack.c.l.b16 %v39
  %v326 = vunpack.c.l.b16 %v40
  %v327 = vunpack.c.l.b16 %v41
  %v328 = vunpack.c.l.b16 %v42
  %v329 = vunpack.c.l.b16 %v43
  %v330 = vunpack.c.l.b16 %v44
  %v331 = vunpack.c.l.b16 %v45
  %v332 = vunpack.c.l.b16 %v46
  %v333 = vunpack.c.l.b16 %v47
  %v334 = vunpack.c.l.b16 %v48
  %v335 = vunpack.c.l.b16 %v49
  %v336 = vunpack.c.l.b16 %v50
  %v337 = vunpack.c.l.b16 %v51
  %v338 = vunpack.c.l.b16 %v52
  %v339 = vunpack.c.l.b16 %v53
  %v340 = vunpack.c.l.b16 %v54
  %v341 = vunpack.c.l.b16 %v55
  %v342 = vunpack.c.l.b16 %v56
  %v343 = vunpack.c.l.b16 %v57
  %v344 = vunpack.c.l.b16 %v58
  %v345 = vunpack.c.l.b16 %v59
  %v346 = vunpack.c.l.b16 %v60
  %v347 = vunpack.c.l.b16 %v61
  %v348 = vunpack.c.l.b16 %v62
  %v349 = vunpack.c.l.b16 %v63
  %v350 = vunpack.c.l.b16 %v64
  %v351 = vunpack.c.l.b16 %v65
  %v352 = vunpack.c.l.b16 %v66
  %v353 = vunpack.c.l.b16 %v67
  %v354 = vunpack.c.l.b16 %v68
  %v355 = vunpack.c.l.b16 %v69
  %v356 = vunpack.c.l.b16 %v70
  %v357 = vunpack.c.l.b16 %v71
  %v358 = vunpack.c.l.b16 %v72
  %v359 = vunpack.c.l.b16 %v73
  %v360 = vunpack.c.l.b16 %v74
  %v361 = vunpack.c.l.b16 %v75
  %v362 = vunpack.c.l.b16 %v76
  %v363 = vunpack.c.l.b16 %v77
  %v364 = vunpack.c.l.b16 %v78
  %v365 = vunpack.c.l.b16 %v79
  %v366 = vunpack.c.l.b16 %v80
  %v367 = vunpack.c.l.b16 %v81
  %v368 = vunpack.c.l.b16 %v82
  %v369 = vunpack.c.l.b16 %v83
  %v370 = vunpack.c.l.b16 %v84
  %v371 = vunpack.c.l.b16 %v85
  %v372 = vunpack.c.l.b16 %v86
  %v373 = vunpack.c.l.b16 %v87
  %v374 = vunpack.c.l.b16 %v88
  %v375 = vunpack.c.l.b16 %v89
  %v376 = vunpack.c.l.b16 %v90
  %v377 = vunpack.c.l.b16 %v91
  %v378 = vunpack.c.l.b16 %v92
  %v379 = vunpack.c.l.b16 %v93
  %v380 = vunpack.c.l.b16 %v94
  %v381 = vunpack.c.l.b16 %v95
  %v382 = vunpack.c.l.b16 %v96
  %v383 = vunpack.c.l.b16 %v97
  %v384 = vunpack.c.l.b16 %v98
  %v385 = vunpack.c.l.b16 %v99
  %v386 = vunpack.c.l.b16 %v100
  %v387 = vunpack.c.l.b16 %v101
  %v388 = vunpack.c.l.b16 %v102
  %v389 = vunpack.c.l.b16 %v103
  %v390 = vunpack.c.l.b16 %v104
  %v391 = vunpack.c.l.b16 %v105
  %v392 = vunpack.c.l.b16 %v106
  %v393 = vunpack.c.l.b16 %v107
  %v394 = vunpack.c.l.b16 %v108
  %v395 = vunpack.c.l.b16 %v109
  %v396 = vunpack.c.l.b16 %v110
  %v397 = vunpack.c.l.b16 %v111
  %v398 = vunpack.c.l.b16 %v112
  %v399 = vunpack.c.l.b16 %v113
  %v400 = vunpack.c.l.b16 %v114
  %v401 = vunpack.c.l.b16 %v115
  %v402 = vunpack.c.l.b16 %v116
  %v403 = vunpack.c.l.b16 %v117
  %v404 = vunpack.c.l.b16 %v118
  %v405 = vunpack.c.l.b16 %v119
  %v406 = vunpack.c.l.b16 %v120
  %v407 = vunpack.c.l.b16 %v121
  %v408 = vunpack.c.l.b16 %v122
  %v409 = vunpack.c.l.b16 %v123
  %v410 = vunpack.c.l.b16 %v124
  %v411 = vunpack.c.l.b16 %v125
  %v412 = vunpack.c.l.b16 %v126
  %v413 = vunpack.c.l.b16 %v127
  %v414 = vunpack.c.l.b16 %v128
  %v415 = vunpack.c.l.b16 %v129
  %v416 = vunpack.c.l.b16 %v130
  %v417 = vunpack.c.l.b16 %v131
  %v418 = vunpack.c.l.b16 %v132
  %v419 = vunpack.c.l.b16 %v133
  %v420 = vunpack.c.l.b16 %v134
  %v421 = vunpack.c.l.b16 %v135
  %v422 = vunpack.c.l.b16 %v136
  %v423 = vunpack.c.l.b16 %v137
  %v424 = vunpack.c.l.b16 %v138
  %v425 = vunpack.c.l.b16 %v139
  %v426 = vunpack.c.l.b16 %v140
  %v427 = vunpack.c.l.b16 %v141
  %v428 = vunpack.c.l.b16 %v142
  %v429 = vunpack.c.l.b16 %v143
  %v430 = vunpack.c.l.b16 %v144
  %v431 = vpack.c.b16 %v324, %v323
  %v432 = vpack.c.b16 %v326, %v325
  %v433 = vpack.c.b16 %v328, %v327
  %v434 = vpack.c.b16 %v330, %v329
  %v435 = vpack.c.b16 %v332, %v331
  %v436 = vpack.c.b16 %v334, %v333
  %v437 = vpack.c.b16 %v336, %v335
  %v438 = vpack.c.b16 %v338, %v337
  %v439 = vpack.c.b16 %v340, %v339
  %v440 = vpack.c.b16 %v342, %v341
  %v441 = vpack.c.b16 %v344, %v343
  %v442 = vpack.c.b16 %v346, %v345
  %v443 = vpack.c.b16 %v348, %v347
  %v444 = vpack.c.b16 %v350, %v349
  %v445 = vpack.c.b16 %v352, %v351
  %v446 = vpack.c.b16 %v354, %v353
  %v447 = vpack.c.b16 %v356, %v355
  %v448 = vpack.c.b16 %v358, %v357
  %v449 = vpack.c.b16 %v360, %v359
  %v450 = vpack.c.b16 %v362, %v361
  %v451 = vpack.c.b16 %v364, %v363
  %v452 = vpack.c.b16 %v366, %v365
  %v453 = vpack.c.b16 %v368, %v367
  %v454 = vpack.c.b16 %v370, %v369
  %v455 = vpack.c.b16 %v372, %v371
  %v456 = vpack.c.b16 %v374, %v373
  %v457 = vpack.c.b16 %v376, %v375
  %v458 = vpack.c.b16 %v378, %v377
  %v459 = vpack.c.b16 %v380, %v379
  %v460 = vpack.c.b16 %v382, %v381
  %v461 = vpack.c.b16 %v384, %v383
  %v462 = vpack.c.b16 %v386, %v385
  %v463 = vpack.c.b16 %v388, %v387
  %v464 = vpack.c.b16 %v390, %v389
  %v465 = vpack.c.b16 %v392, %v391
  %v466 = vpack.c.b16 %v394, %v393
  %v467 = vpack.c.b16 %v396, %v395
  %v468 = vpack.c.b16 %v398, %v397
  %v469 = vpack.c.b16 %v400, %v399
  %v470 = vpack.c.b16 %v402, %v401
  %v471 = vpack.c.b16 %v404, %v403
  %v472 = vpack.c.b16 %v406, %v405
  %v473 = vpack.c.b16 %v408, %v407
  %v474 = vpack.c.b16 %v410, %v409
  %v475 = vpack.c.b16 %v412, %v411
  %v476 = vpack.c.b16 %v414, %v413
  %v477 = vpack.c.b16 %v416, %v415
  %v478 = vpack.c.b16 %v418, %v417
  %v479 = vpack.c.b16 %v420, %v419
  %v480 = vpack.c.b16 %v422, %v421
  %v481 = vpack.c.b16 %v424, %v423
  %v482 = vpack.c.b16 %v426, %v425
  %v483 = vpack.c.b16 %v428, %v427
  %v484 = vpack.c.b16 %v430, %v429
  %vm539 = vcmask 785408
  %v541 = vsel %vm539, %v195, 0
  %v544 = vsel %vm539, %v202, 0
  %546 = vmatprep.subr.bf16.mxu0 0
  %547 = vmatpush1.bf16.msra.mxu0 %v431
  %548 = vmatprep.subr.bf16.mxu0 0
  %549 = vmatpush1.bf16.msra.mxu0 %v432
  %550 = vmatprep.subr.bf16.mxu0 0
  %551 = vmatpush1.bf16.msra.mxu0 %v433
  %552 = vmatprep.subr.bf16.mxu0 0
  %553 = vmatpush1.bf16.msra.mxu0 %v434
  %554 = vmatprep.subr.bf16.mxu0 0
  %555 = vmatpush1.bf16.msra.mxu0 %v435
  %556 = vmatprep.subr.bf16.mxu0 0
  %557 = vmatpush1.bf16.msra.mxu0 %v436
  %558 = vmatprep.subr.bf16.mxu0 0
  %559 = vmatpush1.bf16.msra.mxu0 %v437
  %560 = vmatprep.subr.bf16.mxu0 0
  %561 = vmatpush1.bf16.msra.mxu0 %v438
  %562 = vmatprep.subr.bf16.mxu0 0
  %563 = vmatpush1.bf16.msra.mxu0 %v439
  %564 = vmatprep.subr.bf16.mxu0 0
  %565 = vmatpush1.bf16.msra.mxu0 %v440
  %566 = vmatprep.subr.bf16.mxu0 0
  %567 = vmatpush1.bf16.msra.mxu0 %v441
  %568 = vmatprep.subr.bf16.mxu0 0
  %569 = vmatpush1.bf16.msra.mxu0 %v442
  %570 = vmatprep.subr.bf16.mxu0 0
  %571 = vmatpush1.bf16.msra.mxu0 %v443
  %572 = vmatprep.subr.bf16.mxu0 0
  %573 = vmatpush1.bf16.msra.mxu0 %v444
  %574 = vmatprep.subr.bf16.mxu0 0
  %575 = vmatpush1.bf16.msra.mxu0 %v445
  %576 = vmatprep.subr.bf16.mxu0 0
  %577 = vmatpush1.bf16.msra.mxu0 %v446
  %578 = vmatprep.mubr.bf16.mxu0 %v190
  %579 = vmatmul.mubr.bf16.gmra.mrb[0].mxu0 %v189
  %v580 = vpop.f32.mrb[0].mxu0
  %v581 = vadd.f32 0.0, %v580
  %v582 = vpop.f32.mrb[0].mxu0
  %v583 = vpop.f32.mrb[0].mxu0
  %v584 = vadd.f32 0.0, %v583
  %v585 = vpop.f32.mrb[0].mxu0
  %586 = vmatprep.mubr.bf16.mxu0 %v197
  %587 = vmatmul.mubr.bf16.gmra.mrb[0].mxu0 %v196
  %v588 = vpop.f32.mrb[0].mxu0
  %v589 = vadd.f32 0.0, %v588
  %v590 = vpop.f32.mrb[0].mxu0
  %v591 = vpop.f32.mrb[0].mxu0
  %v592 = vadd.f32 0.0, %v591
  %v593 = vpop.f32.mrb[0].mxu0
  %594 = vdwg.mxu0
  %595 = vmatprep.subr.bf16.mxu0 0
  %596 = vmatpush1.bf16.msra.mxu0 %v447
  %597 = vmatprep.subr.bf16.mxu0 0
  %598 = vmatpush1.bf16.msra.mxu0 %v448
  %599 = vmatprep.subr.bf16.mxu0 0
  %600 = vmatpush1.bf16.msra.mxu0 %v449
  %601 = vmatprep.subr.bf16.mxu0 0
  %602 = vmatpush1.bf16.msra.mxu0 %v450
  %603 = vmatprep.subr.bf16.mxu0 0
  %604 = vmatpush1.bf16.msra.mxu0 %v451
  %605 = vmatprep.subr.bf16.mxu0 0
  %606 = vmatpush1.bf16.msra.mxu0 %v452
  %607 = vmatprep.subr.bf16.mxu0 0
  %608 = vmatpush1.bf16.msra.mxu0 %v453
  %609 = vmatprep.subr.bf16.mxu0 0
  %610 = vmatpush1.bf16.msra.mxu0 %v454
  %611 = vmatprep.subr.bf16.mxu0 0
  %612 = vmatpush1.bf16.msra.mxu0 %v455
  %613 = vmatprep.subr.bf16.mxu0 0
  %614 = vmatpush1.bf16.msra.mxu0 %v456
  %615 = vmatprep.subr.bf16.mxu0 0
  %616 = vmatpush1.bf16.msra.mxu0 %v457
  %617 = vmatprep.subr.bf16.mxu0 0
  %618 = vmatpush1.bf16.msra.mxu0 %v458
  %619 = vmatprep.subr.bf16.mxu0 0
  %620 = vmatpush1.bf16.msra.mxu0 %v459
  %621 = vmatprep.subr.bf16.mxu0 0
  %622 = vmatpush1.bf16.msra.mxu0 %v460
  %623 = vmatprep.subr.bf16.mxu0 0
  %624 = vmatpush1.bf16.msra.mxu0 %v461
  %625 = vmatprep.subr.bf16.mxu0 0
  %626 = vmatpush1.bf16.msra.mxu0 %v462
  %627 = vmatprep.mubr.bf16.mxu0 %v192
  %628 = vmatmul.mubr.bf16.gmra.mrb[0].mxu0 %v191
  %v629 = vpop.f32.mrb[0].mxu0
  %v630 = vadd.f32 %v581, %v629
  %v631 = vpop.f32.mrb[0].mxu0
  %v632 = vpop.f32.mrb[0].mxu0
  %v633 = vadd.f32 %v584, %v632
  %v634 = vpop.f32.mrb[0].mxu0
  %635 = vmatprep.mubr.bf16.mxu0 %v199
  %636 = vmatmul.mubr.bf16.gmra.mrb[0].mxu0 %v198
  %v637 = vpop.f32.mrb[0].mxu0
  %v638 = vadd.f32 %v589, %v637
  %v639 = vpop.f32.mrb[0].mxu0
  %v640 = vpop.f32.mrb[0].mxu0
  %v641 = vadd.f32 %v592, %v640
  %v642 = vpop.f32.mrb[0].mxu0
  %643 = vdwg.mxu0
  %644 = vmatprep.subr.bf16.mxu0 0
  %645 = vmatpush1.bf16.msra.mxu0 %v463
  %646 = vmatprep.subr.bf16.mxu0 0
  %647 = vmatpush1.bf16.msra.mxu0 %v464
  %648 = vmatprep.subr.bf16.mxu0 0
  %649 = vmatpush1.bf16.msra.mxu0 %v465
  %650 = vmatprep.subr.bf16.mxu0 0
  %651 = vmatpush1.bf16.msra.mxu0 %v466
  %652 = vmatprep.subr.bf16.mxu0 0
  %653 = vmatpush1.bf16.msra.mxu0 %v467
  %654 = vmatprep.subr.bf16.mxu0 0
  %655 = vmatpush1.bf16.msra.mxu0 %v468
  %656 = vmatprep.subr.bf16.mxu0 0
  %657 = vmatpush1.bf16.msra.mxu0 %v469
  %658 = vmatprep.subr.bf16.mxu0 0
  %659 = vmatpush1.bf16.msra.mxu0 %v470
  %660 = vmatprep.subr.bf16.mxu0 0
  %661 = vmatpush1.bf16.msra.mxu0 %v471
  %662 = vmatprep.subr.bf16.mxu0 0
  %663 = vmatpush1.bf16.msra.mxu0 %v472
  %664 = vmatprep.subr.bf16.mxu0 0
  %665 = vmatpush1.bf16.msra.mxu0 %v473
  %666 = vmatprep.subr.bf16.mxu0 0
  %667 = vmatpush1.bf16.msra.mxu0 %v474
  %668 = vmatprep.subr.bf16.mxu0 0
  %669 = vmatpush1.bf16.msra.mxu0 %v475
  %670 = vmatprep.subr.bf16.mxu0 0
  %671 = vmatpush1.bf16.msra.mxu0 %v476
  %672 = vmatprep.subr.bf16.mxu0 0
  %673 = vmatpush1.bf16.msra.mxu0 %v477
  %674 = vmatprep.subr.bf16.mxu0 0
  %675 = vmatpush1.bf16.msra.mxu0 %v478
  %676 = vmatprep.mubr.bf16.mxu0 %v194
  %677 = vmatmul.mubr.bf16.gmra.mrb[0].mxu0 %v193
  %v678 = vpop.f32.mrb[0].mxu0
  %v679 = vadd.f32 %v630, %v678
  %v680 = vpop.f32.mrb[0].mxu0
  %v681 = vpop.f32.mrb[0].mxu0
  %v682 = vadd.f32 %v633, %v681
  %v683 = vpop.f32.mrb[0].mxu0
  %684 = vmatprep.mubr.bf16.mxu0 %v201
  %685 = vmatmul.mubr.bf16.gmra.mrb[0].mxu0 %v200
  %v686 = vpop.f32.mrb[0].mxu0
  %v687 = vadd.f32 %v638, %v686
  %v688 = vpop.f32.mrb[0].mxu0
  %v689 = vpop.f32.mrb[0].mxu0
  %v690 = vadd.f32 %v641, %v689
  %v691 = vpop.f32.mrb[0].mxu0
  %692 = vdwg.mxu0
  %693 = vmatprep.subr.bf16.mxu0 0
  %694 = vmatpush1.bf16.msra.mxu0 %v479
  %695 = vmatprep.subr.bf16.mxu0 0
  %696 = vmatpush1.bf16.msra.mxu0 %v480
  %697 = vmatprep.subr.bf16.mxu0 0
  %698 = vmatpush1.bf16.msra.mxu0 %v481
  %699 = vmatprep.subr.bf16.mxu0 0
  %700 = vmatpush1.bf16.msra.mxu0 %v482
  %701 = vmatprep.subr.bf16.mxu0 0
  %702 = vmatpush1.bf16.msra.mxu0 %v483
  %703 = vmatprep.subr.bf16.mxu0 0
  %704 = vmatpush1.bf16.msra.mxu0 %v484
  %705 = vmatprep.subr.bf16.mxu0 0
  %706 = vmatpush1.bf16.msra.mxu0 0
  %707 = vmatprep.subr.bf16.mxu0 0
  %708 = vmatpush1.bf16.msra.mxu0 0
  %709 = vmatprep.subr.bf16.mxu0 0
  %710 = vmatpush1.bf16.msra.mxu0 0
  %711 = vmatprep.subr.bf16.mxu0 0
  %712 = vmatpush1.bf16.msra.mxu0 0
  %713 = vmatprep.subr.bf16.mxu0 0
  %714 = vmatpush1.bf16.msra.mxu0 0
  %715 = vmatprep.subr.bf16.mxu0 0
  %716 = vmatpush1.bf16.msra.mxu0 0
  %717 = vmatprep.subr.bf16.mxu0 0
  %718 = vmatpush1.bf16.msra.mxu0 0
  %719 = vmatprep.subr.bf16.mxu0 0
  %720 = vmatpush1.bf16.msra.mxu0 0
  %721 = vmatprep.subr.bf16.mxu0 0
  %722 = vmatpush1.bf16.msra.mxu0 0
  %723 = vmatprep.subr.bf16.mxu0 0
  %724 = vmatpush1.bf16.msra.mxu0 0
  %725 = vmatprep.mubr.bf16.mxu0 0
  %726 = vmatmul.mubr.bf16.gmra.mrb[0].mxu0 %v541
  %v727 = vpop.f32.mrb[0].mxu0
  %v728 = vadd.f32 %v679, %v727
  %v729 = vpop.f32.mrb[0].mxu0
  %v730 = vpop.f32.mrb[0].mxu0
  %v731 = vadd.f32 %v682, %v730
  %v732 = vpop.f32.mrb[0].mxu0
  %733 = vmatprep.mubr.bf16.mxu0 0
  %734 = vmatmul.mubr.bf16.gmra.mrb[0].mxu0 %v544
  %v735 = vpop.f32.mrb[0].mxu0
  %v736 = vadd.f32 %v687, %v735
  %v737 = vpop.f32.mrb[0].mxu0
  %v738 = vpop.f32.mrb[0].mxu0
  %v739 = vadd.f32 %v690, %v738
  %v740 = vpop.f32.mrb[0].mxu0
  %741 = vdwg.mxu0
  %v742 = vld [vmem:[%s1] sm:$0xff]
  %v743 = vld [vmem:[%s1 + $0x8] sm:$0xff]
  %v744 = vld [vmem:[%s1 + $0x10] sm:$0xff]
  %v745 = vld [vmem:[%s1 + $0x18] sm:$0xff]
  %747 = vset.pattern.permute.xlu0 0
  %748 = vperm.xlu0 %747, %v742
  %v749 = vpop.permute.xlu0 %748
  %752 = vset.pattern.permute.xlu0 0
  %753 = vperm.xlu0 %752, %v743
  %v754 = vpop.permute.xlu0 %753
  %757 = vset.pattern.permute.xlu0 0
  %758 = vperm.xlu0 %757, %v744
  %v759 = vpop.permute.xlu0 %758
  %762 = vset.pattern.permute.xlu0 0
  %763 = vperm.xlu0 %762, %v745
  %v764 = vpop.permute.xlu0 %763
  %v766 = vmul.f32 %v728, %v749
  %v767 = vmul.f32 %v731, %v754
  %v768 = vmul.f32 %v736, %v759
  %v769 = vmul.f32 %v739, %v764
  %v770 = vld [vmem:[%s2] sm:$0xff]
  %v771 = vld [vmem:[%s2 + $0x8] sm:$0xff]
  %v772 = vld [vmem:[%s2 + $0x10] sm:$0xff]
  %v773 = vld [vmem:[%s2 + $0x18] sm:$0xff]
  %775 = vset.pattern.permute.xlu0 0
  %776 = vperm.xlu0 %775, %v770
  %v777 = vpop.permute.xlu0 %776
  %780 = vset.pattern.permute.xlu0 0
  %781 = vperm.xlu0 %780, %v771
  %v782 = vpop.permute.xlu0 %781
  %785 = vset.pattern.permute.xlu0 0
  %786 = vperm.xlu0 %785, %v772
  %v787 = vpop.permute.xlu0 %786
  %790 = vset.pattern.permute.xlu0 0
  %791 = vperm.xlu0 %790, %v773
  %v792 = vpop.permute.xlu0 %791
  %v794 = vadd.f32 %v766, %v777
  %v795 = vadd.f32 %v767, %v782
  %v796 = vadd.f32 %v768, %v787
  %v797 = vadd.f32 %v769, %v792
  %v798 = vld [vmem:[%s4] sm:$0xff]
  %v799 = vld [vmem:[%s4 + $0x8] sm:$0xff]
  %v800 = vld [vmem:[%s4 + $0x10] sm:$0xff]
  %v801 = vld [vmem:[%s4 + $0x18] sm:$0xff]
  %v802 = vadd.f32 %v794, %v798
  %v803 = vadd.f32 %v795, %v799
  %v804 = vadd.f32 %v796, %v800
  %v805 = vadd.f32 %v797, %v801
  %v806 = vmax.f32 %v802, 0.0
  %v807 = vmax.f32 %v803, 0.0
  %v808 = vmax.f32 %v804, 0.0
  %v809 = vmax.f32 %v805, 0.0
  %810 = vst [vmem:[%s5] sm:$0xff] %v806
  %811 = vst [vmem:[%s5 + $0x8] sm:$0xff] %v807
  %812 = vst [vmem:[%s5 + $0x10] sm:$0xff] %v808
  %813 = vst [vmem:[%s5 + $0x18] sm:$0xff] %v809
  // Predicated region
  $region22: #{_lambda_.29} parent=0 // pred_check
    _
  $region23: #{_lambda_.29} parent=0 // pred_check_branch
    %815 = sbr.rel (0) target = $region25
  $region24: #{_lambda_.29} parent=0 // pred_region
    _
  $region25: #{_lambda_.29} parent=0 // pred_fallthru
    _
  // Predicated region
  $region26: #{_lambda_.29} parent=0 // pred_check
    _
  $region27: #{_lambda_.29} parent=0 // pred_check_branch
    %817 = sbr.rel (0) target = $region29
  $region28: #{_lambda_.29} parent=0 // pred_region
    _
  $region29: #{_lambda_.29} parent=0 // pred_fallthru
    _

// kernel: _lambda_.30
$region0: #{_lambda_.30}
  #allocation0 [shape = 'u32[]', space=smem, size = 0x4, offset = 0x4, fixed_abs, tag = 'smem constant byte address 0x4 - core index']
  #allocation1 [shape = 'u32[144,128]{1,0:T(1,128)}', space=vmem, size = 0x12000, scoped, tag = 'internal scratch']
  %s0 = inlined_call_operand.vmem [shape: bf16[32,864], index: 0, kind: input, shape index: {}]
  %s1 = inlined_call_operand.vmem [shape: f32[32,1], index: 1, kind: input, shape index: {}]
  %s2 = inlined_call_operand.vmem [shape: f32[32,1], index: 2, kind: input, shape index: {}]
  %s3 = inlined_call_operand.vmem [shape: bf16[864,128], index: 3, kind: input, shape index: {}]
  %s4 = inlined_call_operand.vmem [shape: f32[32,128], index: 4, kind: output, shape index: {}]
  %s5 = sld [smem:[#allocation0]]
  $region26: #{_lambda_.30} parent=0
    _
  %s7 = ssub.s32 1, %s5
  %s8 = scalar_select 0, %s7, %s5
  // Predicated region
  $region2: #{_lambda_.30} parent=0 // pred_check
    _
  $region3: #{_lambda_.30} parent=0 // pred_check_branch
    %10 = sbr.rel (0) target = $region5
  $region4: #{_lambda_.30} parent=0 // pred_region
    _
  $region5: #{_lambda_.30} parent=0 // pred_fallthru
    _
  // Predicated region
  $region6: #{_lambda_.30} parent=0 // pred_check
    _
  $region7: #{_lambda_.30} parent=0 // pred_check_branch
    %12 = sbr.rel (0) target = $region9
  $region8: #{_lambda_.30} parent=0 // pred_region
    _
  $region9: #{_lambda_.30} parent=0 // pred_fallthru
    _
  // Predicated region
  $region10: #{_lambda_.30} parent=0 // pred_check
    _
  $region11: #{_lambda_.30} parent=0 // pred_check_branch
    %14 = sbr.rel (0) target = $region13
  $region12: #{_lambda_.30} parent=0 // pred_region
    _
  $region13: #{_lambda_.30} parent=0 // pred_fallthru
    _
  // Predicated region
  $region14: #{_lambda_.30} parent=0 // pred_check
    _
  $region15: #{_lambda_.30} parent=0 // pred_check_branch
    %16 = sbr.rel (0) target = $region17
  $region16: #{_lambda_.30} parent=0 // pred_region
    _
  $region17: #{_lambda_.30} parent=0 // pred_fallthru
    _
  %v18 = vld [vmem:[%s0] sm:$0xff]
  %v19 = vld [vmem:[%s0 + $0x8] sm:$0xff]
  %v20 = vld [vmem:[%s0 + $0x10] sm:$0xff]
  %v21 = vld [vmem:[%s0 + $0x18] sm:$0xf]
  %v22 = vld [vmem:[%s0 + $0x1c] sm:$0xff]
  %v23 = vld [vmem:[%s0 + $0x24] sm:$0xff]
  %v24 = vld [vmem:[%s0 + $0x2c] sm:$0xff]
  %v25 = vld [vmem:[%s0 + $0x34] sm:$0xf]
  %v26 = vld [vmem:[%s0 + $0x38] sm:$0xff]
  %v27 = vld [vmem:[%s0 + $0x40] sm:$0xff]
  %v28 = vld [vmem:[%s0 + $0x48] sm:$0xff]
  %v29 = vld [vmem:[%s0 + $0x50] sm:$0xf]
  %v30 = vld [vmem:[%s0 + $0x54] sm:$0xff]
  %v31 = vld [vmem:[%s0 + $0x5c] sm:$0xff]
  %v32 = vld [vmem:[%s0 + $0x64] sm:$0xff]
  %v33 = vld [vmem:[%s0 + $0x6c] sm:$0xf]
  %v34 = vld [vmem:[%s3] sm:$0xf]
  %v35 = vld [vmem:[%s3 + $0x4] sm:$0xf]
  %v36 = vld [vmem:[%s3 + $0x8] sm:$0xf]
  %v37 = vld [vmem:[%s3 + $0xc] sm:$0xf]
  %v38 = vld [vmem:[%s3 + $0x10] sm:$0xf]
  %v39 = vld [vmem:[%s3 + $0x14] sm:$0xf]
  %v40 = vld [vmem:[%s3 + $0x18] sm:$0xf]
  %v41 = vld [vmem:[%s3 + $0x1c] sm:$0xf]
  %v42 = vld [vmem:[%s3 + $0x20] sm:$0xf]
  %v43 = vld [vmem:[%s3 + $0x24] sm:$0xf]
  %v44 = vld [vmem:[%s3 + $0x28] sm:$0xf]
  %v45 = vld [vmem:[%s3 + $0x2c] sm:$0xf]
  %v46 = vld [vmem:[%s3 + $0x30] sm:$0xf]
  %v47 = vld [vmem:[%s3 + $0x34] sm:$0xf]
  %v48 = vld [vmem:[%s3 + $0x38] sm:$0xf]
  %v49 = vld [vmem:[%s3 + $0x3c] sm:$0xf]
  %v50 = vld [vmem:[%s3 + $0x40] sm:$0xf]
  %v51 = vld [vmem:[%s3 + $0x44] sm:$0xf]
  %v52 = vld [vmem:[%s3 + $0x48] sm:$0xf]
  %v53 = vld [vmem:[%s3 + $0x4c] sm:$0xf]
  %v54 = vld [vmem:[%s3 + $0x50] sm:$0xf]
  %v55 = vld [vmem:[%s3 + $0x54] sm:$0xf]
  %v56 = vld [vmem:[%s3 + $0x58] sm:$0xf]
  %v57 = vld [vmem:[%s3 + $0x5c] sm:$0xf]
  %v58 = vld [vmem:[%s3 + $0x60] sm:$0xf]
  %v59 = vld [vmem:[%s3 + $0x64] sm:$0xf]
  %v60 = vld [vmem:[%s3 + $0x68] sm:$0xf]
  %v61 = vld [vmem:[%s3 + $0x6c] sm:$0xf]
  %v62 = vld [vmem:[%s3 + $0x70] sm:$0xf]
  %v63 = vld [vmem:[%s3 + $0x74] sm:$0xf]
  %v64 = vld [vmem:[%s3 + $0x78] sm:$0xf]
  %v65 = vld [vmem:[%s3 + $0x7c] sm:$0xf]
  %v66 = vld [vmem:[%s3 + $0x80] sm:$0xf]
  %v67 = vld [vmem:[%s3 + $0x84] sm:$0xf]
  %v68 = vld [vmem:[%s3 + $0x88] sm:$0xf]
  %v69 = vld [vmem:[%s3 + $0x8c] sm:$0xf]
  %v70 = vld [vmem:[%s3 + $0x90] sm:$0xf]
  %v71 = vld [vmem:[%s3 + $0x94] sm:$0xf]
  %v72 = vld [vmem:[%s3 + $0x98] sm:$0xf]
  %v73 = vld [vmem:[%s3 + $0x9c] sm:$0xf]
  %v74 = vld [vmem:[%s3 + $0xa0] sm:$0xf]
  %v75 = vld [vmem:[%s3 + $0xa4] sm:$0xf]
  %v76 = vld [vmem:[%s3 + $0xa8] sm:$0xf]
  %v77 = vld [vmem:[%s3 + $0xac] sm:$0xf]
  %v78 = vld [vmem:[%s3 + $0xb0] sm:$0xf]
  %v79 = vld [vmem:[%s3 + $0xb4] sm:$0xf]
  %v80 = vld [vmem:[%s3 + $0xb8] sm:$0xf]
  %v81 = vld [vmem:[%s3 + $0xbc] sm:$0xf]
  %v82 = vld [vmem:[%s3 + $0xc0] sm:$0xf]
  %v83 = vld [vmem:[%s3 + $0xc4] sm:$0xf]
  %v84 = vld [vmem:[%s3 + $0xc8] sm:$0xf]
  %v85 = vld [vmem:[%s3 + $0xcc] sm:$0xf]
  %v86 = vld [vmem:[%s3 + $0xd0] sm:$0xf]
  %v87 = vld [vmem:[%s3 + $0xd4] sm:$0xf]
  %v88 = vld [vmem:[%s3 + $0xd8] sm:$0xf]
  %v89 = vld [vmem:[%s3 + $0xdc] sm:$0xf]
  %v90 = vld [vmem:[%s3 + $0xe0] sm:$0xf]
  %v91 = vld [vmem:[%s3 + $0xe4] sm:$0xf]
  %v92 = vld [vmem:[%s3 + $0xe8] sm:$0xf]
  %v93 = vld [vmem:[%s3 + $0xec] sm:$0xf]
  %v94 = vld [vmem:[%s3 + $0xf0] sm:$0xf]
  %v95 = vld [vmem:[%s3 + $0xf4] sm:$0xf]
  %v96 = vld [vmem:[%s3 + $0xf8] sm:$0xf]
  %v97 = vld [vmem:[%s3 + $0xfc] sm:$0xf]
  %v98 = vld [vmem:[%s3 + $0x100] sm:$0xf]
  %v99 = vld [vmem:[%s3 + $0x104] sm:$0xf]
  %v100 = vld [vmem:[%s3 + $0x108] sm:$0xf]
  %v101 = vld [vmem:[%s3 + $0x10c] sm:$0xf]
  %v102 = vld [vmem:[%s3 + $0x110] sm:$0xf]
  %v103 = vld [vmem:[%s3 + $0x114] sm:$0xf]
  %v104 = vld [vmem:[%s3 + $0x118] sm:$0xf]
  %v105 = vld [vmem:[%s3 + $0x11c] sm:$0xf]
  %v106 = vld [vmem:[%s3 + $0x120] sm:$0xf]
  %v107 = vld [vmem:[%s3 + $0x124] sm:$0xf]
  %v108 = vld [vmem:[%s3 + $0x128] sm:$0xf]
  %v109 = vld [vmem:[%s3 + $0x12c] sm:$0xf]
  %v110 = vld [vmem:[%s3 + $0x130] sm:$0xf]
  %v111 = vld [vmem:[%s3 + $0x134] sm:$0xf]
  %v112 = vld [vmem:[%s3 + $0x138] sm:$0xf]
  %v113 = vld [vmem:[%s3 + $0x13c] sm:$0xf]
  %v114 = vld [vmem:[%s3 + $0x140] sm:$0xf]
  %v115 = vld [vmem:[%s3 + $0x144] sm:$0xf]
  %v116 = vld [vmem:[%s3 + $0x148] sm:$0xf]
  %v117 = vld [vmem:[%s3 + $0x14c] sm:$0xf]
  %v118 = vld [vmem:[%s3 + $0x150] sm:$0xf]
  %v119 = vld [vmem:[%s3 + $0x154] sm:$0xf]
  %v120 = vld [vmem:[%s3 + $0x158] sm:$0xf]
  %v121 = vld [vmem:[%s3 + $0x15c] sm:$0xf]
  %v122 = vld [vmem:[%s3 + $0x160] sm:$0xf]
  %v123 = vld [vmem:[%s3 + $0x164] sm:$0xf]
  %v124 = vld [vmem:[%s3 + $0x168] sm:$0xf]
  %v125 = vld [vmem:[%s3 + $0x16c] sm:$0xf]
  %v126 = vld [vmem:[%s3 + $0x170] sm:$0xf]
  %v127 = vld [vmem:[%s3 + $0x174] sm:$0xf]
  %v128 = vld [vmem:[%s3 + $0x178] sm:$0xf]
  %v129 = vld [vmem:[%s3 + $0x17c] sm:$0xf]
  %v130 = vld [vmem:[%s3 + $0x180] sm:$0xf]
  %v131 = vld [vmem:[%s3 + $0x184] sm:$0xf]
  %v132 = vld [vmem:[%s3 + $0x188] sm:$0xf]
  %v133 = vld [vmem:[%s3 + $0x18c] sm:$0xf]
  %v134 = vld [vmem:[%s3 + $0x190] sm:$0xf]
  %v135 = vld [vmem:[%s3 + $0x194] sm:$0xf]
  %v136 = vld [vmem:[%s3 + $0x198] sm:$0xf]
  %v137 = vld [vmem:[%s3 + $0x19c] sm:$0xf]
  %v138 = vld [vmem:[%s3 + $0x1a0] sm:$0xf]
  %v139 = vld [vmem:[%s3 + $0x1a4] sm:$0xf]
  %v140 = vld [vmem:[%s3 + $0x1a8] sm:$0xf]
  %v141 = vld [vmem:[%s3 + $0x1ac] sm:$0xf]
  %v158 = vunpack.c.l.b16 %v18
  %v159 = vunpack.c.h.b16 %v18
  %v160 = vunpack.c.l.b16 %v19
  %v161 = vunpack.c.h.b16 %v19
  %v162 = vunpack.c.l.b16 %v20
  %v163 = vunpack.c.h.b16 %v20
  %v164 = vunpack.c.l.b16 %v21
  %v165 = vunpack.c.l.b16 %v22
  %v166 = vunpack.c.h.b16 %v22
  %v167 = vunpack.c.l.b16 %v23
  %v168 = vunpack.c.h.b16 %v23
  %v169 = vunpack.c.l.b16 %v24
  %v170 = vunpack.c.h.b16 %v24
  %v171 = vunpack.c.l.b16 %v25
  %v172 = vunpack.c.l.b16 %v26
  %v173 = vunpack.c.h.b16 %v26
  %v174 = vunpack.c.l.b16 %v27
  %v175 = vunpack.c.h.b16 %v27
  %v176 = vunpack.c.l.b16 %v28
  %v177 = vunpack.c.h.b16 %v28
  %v178 = vunpack.c.l.b16 %v29
  %v179 = vunpack.c.l.b16 %v30
  %v180 = vunpack.c.h.b16 %v30
  %v181 = vunpack.c.l.b16 %v31
  %v182 = vunpack.c.h.b16 %v31
  %v183 = vunpack.c.l.b16 %v32
  %v184 = vunpack.c.h.b16 %v32
  %v185 = vunpack.c.l.b16 %v33
  %v186 = vpack.c.b16 %v165, %v158
  %v187 = vpack.c.b16 %v166, %v159
  %v188 = vpack.c.b16 %v167, %v160
  %v189 = vpack.c.b16 %v168, %v161
  %v190 = vpack.c.b16 %v169, %v162
  %v191 = vpack.c.b16 %v170, %v163
  %v192 = vpack.c.b16 %v171, %v164
  %v193 = vpack.c.b16 %v179, %v172
  %v194 = vpack.c.b16 %v180, %v173
  %v195 = vpack.c.b16 %v181, %v174
  %v196 = vpack.c.b16 %v182, %v175
  %v197 = vpack.c.b16 %v183, %v176
  %v198 = vpack.c.b16 %v184, %v177
  %v199 = vpack.c.b16 %v185, %v178
  %v320 = vunpack.c.l.b16 %v34
  %v321 = vunpack.c.l.b16 %v35
  %v322 = vunpack.c.l.b16 %v36
  %v323 = vunpack.c.l.b16 %v37
  %v324 = vunpack.c.l.b16 %v38
  %v325 = vunpack.c.l.b16 %v39
  %v326 = vunpack.c.l.b16 %v40
  %v327 = vunpack.c.l.b16 %v41
  %v328 = vunpack.c.l.b16 %v42
  %v329 = vunpack.c.l.b16 %v43
  %v330 = vunpack.c.l.b16 %v44
  %v331 = vunpack.c.l.b16 %v45
  %v332 = vunpack.c.l.b16 %v46
  %v333 = vunpack.c.l.b16 %v47
  %v334 = vunpack.c.l.b16 %v48
  %v335 = vunpack.c.l.b16 %v49
  %v336 = vunpack.c.l.b16 %v50
  %v337 = vunpack.c.l.b16 %v51
  %v338 = vunpack.c.l.b16 %v52
  %v339 = vunpack.c.l.b16 %v53
  %v340 = vunpack.c.l.b16 %v54
  %v341 = vunpack.c.l.b16 %v55
  %v342 = vunpack.c.l.b16 %v56
  %v343 = vunpack.c.l.b16 %v57
  %v344 = vunpack.c.l.b16 %v58
  %v345 = vunpack.c.l.b16 %v59
  %v346 = vunpack.c.l.b16 %v60
  %v347 = vunpack.c.l.b16 %v61
  %v348 = vunpack.c.l.b16 %v62
  %v349 = vunpack.c.l.b16 %v63
  %v350 = vunpack.c.l.b16 %v64
  %v351 = vunpack.c.l.b16 %v65
  %v352 = vunpack.c.l.b16 %v66
  %v353 = vunpack.c.l.b16 %v67
  %v354 = vunpack.c.l.b16 %v68
  %v355 = vunpack.c.l.b16 %v69
  %v356 = vunpack.c.l.b16 %v70
  %v357 = vunpack.c.l.b16 %v71
  %v358 = vunpack.c.l.b16 %v72
  %v359 = vunpack.c.l.b16 %v73
  %v360 = vunpack.c.l.b16 %v74
  %v361 = vunpack.c.l.b16 %v75
  %v362 = vunpack.c.l.b16 %v76
  %v363 = vunpack.c.l.b16 %v77
  %v364 = vunpack.c.l.b16 %v78
  %v365 = vunpack.c.l.b16 %v79
  %v366 = vunpack.c.l.b16 %v80
  %v367 = vunpack.c.l.b16 %v81
  %v368 = vunpack.c.l.b16 %v82
  %v369 = vunpack.c.l.b16 %v83
  %v370 = vunpack.c.l.b16 %v84
  %v371 = vunpack.c.l.b16 %v85
  %v372 = vunpack.c.l.b16 %v86
  %v373 = vunpack.c.l.b16 %v87
  %v374 = vunpack.c.l.b16 %v88
  %v375 = vunpack.c.l.b16 %v89
  %v376 = vunpack.c.l.b16 %v90
  %v377 = vunpack.c.l.b16 %v91
  %v378 = vunpack.c.l.b16 %v92
  %v379 = vunpack.c.l.b16 %v93
  %v380 = vunpack.c.l.b16 %v94
  %v381 = vunpack.c.l.b16 %v95
  %v382 = vunpack.c.l.b16 %v96
  %v383 = vunpack.c.l.b16 %v97
  %v384 = vunpack.c.l.b16 %v98
  %v385 = vunpack.c.l.b16 %v99
  %v386 = vunpack.c.l.b16 %v100
  %v387 = vunpack.c.l.b16 %v101
  %v388 = vunpack.c.l.b16 %v102
  %v389 = vunpack.c.l.b16 %v103
  %v390 = vunpack.c.l.b16 %v104
  %v391 = vunpack.c.l.b16 %v105
  %v392 = vunpack.c.l.b16 %v106
  %v393 = vunpack.c.l.b16 %v107
  %v394 = vunpack.c.l.b16 %v108
  %v395 = vunpack.c.l.b16 %v109
  %v396 = vunpack.c.l.b16 %v110
  %v397 = vunpack.c.l.b16 %v111
  %v398 = vunpack.c.l.b16 %v112
  %v399 = vunpack.c.l.b16 %v113
  %v400 = vunpack.c.l.b16 %v114
  %v401 = vunpack.c.l.b16 %v115
  %v402 = vunpack.c.l.b16 %v116
  %v403 = vunpack.c.l.b16 %v117
  %v404 = vunpack.c.l.b16 %v118
  %v405 = vunpack.c.l.b16 %v119
  %v406 = vunpack.c.l.b16 %v120
  %v407 = vunpack.c.l.b16 %v121
  %v408 = vunpack.c.l.b16 %v122
  %v409 = vunpack.c.l.b16 %v123
  %v410 = vunpack.c.l.b16 %v124
  %v411 = vunpack.c.l.b16 %v125
  %v412 = vunpack.c.l.b16 %v126
  %v413 = vunpack.c.l.b16 %v127
  %v414 = vunpack.c.l.b16 %v128
  %v415 = vunpack.c.l.b16 %v129
  %v416 = vunpack.c.l.b16 %v130
  %v417 = vunpack.c.l.b16 %v131
  %v418 = vunpack.c.l.b16 %v132
  %v419 = vunpack.c.l.b16 %v133
  %v420 = vunpack.c.l.b16 %v134
  %v421 = vunpack.c.l.b16 %v135
  %v422 = vunpack.c.l.b16 %v136
  %v423 = vunpack.c.l.b16 %v137
  %v424 = vunpack.c.l.b16 %v138
  %v425 = vunpack.c.l.b16 %v139
  %v426 = vunpack.c.l.b16 %v140
  %v427 = vunpack.c.l.b16 %v141
  %v428 = vpack.c.b16 %v321, %v320
  %v429 = vpack.c.b16 %v323, %v322
  %v430 = vpack.c.b16 %v325, %v324
  %v431 = vpack.c.b16 %v327, %v326
  %v432 = vpack.c.b16 %v329, %v328
  %v433 = vpack.c.b16 %v331, %v330
  %v434 = vpack.c.b16 %v333, %v332
  %v435 = vpack.c.b16 %v335, %v334
  %v436 = vpack.c.b16 %v337, %v336
  %v437 = vpack.c.b16 %v339, %v338
  %v438 = vpack.c.b16 %v341, %v340
  %v439 = vpack.c.b16 %v343, %v342
  %v440 = vpack.c.b16 %v345, %v344
  %v441 = vpack.c.b16 %v347, %v346
  %v442 = vpack.c.b16 %v349, %v348
  %v443 = vpack.c.b16 %v351, %v350
  %v444 = vpack.c.b16 %v353, %v352
  %v445 = vpack.c.b16 %v355, %v354
  %v446 = vpack.c.b16 %v357, %v356
  %v447 = vpack.c.b16 %v359, %v358
  %v448 = vpack.c.b16 %v361, %v360
  %v449 = vpack.c.b16 %v363, %v362
  %v450 = vpack.c.b16 %v365, %v364
  %v451 = vpack.c.b16 %v367, %v366
  %v452 = vpack.c.b16 %v369, %v368
  %v453 = vpack.c.b16 %v371, %v370
  %v454 = vpack.c.b16 %v373, %v372
  %v455 = vpack.c.b16 %v375, %v374
  %v456 = vpack.c.b16 %v377, %v376
  %v457 = vpack.c.b16 %v379, %v378
  %v458 = vpack.c.b16 %v381, %v380
  %v459 = vpack.c.b16 %v383, %v382
  %v460 = vpack.c.b16 %v385, %v384
  %v461 = vpack.c.b16 %v387, %v386
  %v462 = vpack.c.b16 %v389, %v388
  %v463 = vpack.c.b16 %v391, %v390
  %v464 = vpack.c.b16 %v393, %v392
  %v465 = vpack.c.b16 %v395, %v394
  %v466 = vpack.c.b16 %v397, %v396
  %v467 = vpack.c.b16 %v399, %v398
  %v468 = vpack.c.b16 %v401, %v400
  %v469 = vpack.c.b16 %v403, %v402
  %v470 = vpack.c.b16 %v405, %v404
  %v471 = vpack.c.b16 %v407, %v406
  %v472 = vpack.c.b16 %v409, %v408
  %v473 = vpack.c.b16 %v411, %v410
  %v474 = vpack.c.b16 %v413, %v412
  %v475 = vpack.c.b16 %v415, %v414
  %v476 = vpack.c.b16 %v417, %v416
  %v477 = vpack.c.b16 %v419, %v418
  %v478 = vpack.c.b16 %v421, %v420
  %v479 = vpack.c.b16 %v423, %v422
  %v480 = vpack.c.b16 %v425, %v424
  %v481 = vpack.c.b16 %v427, %v426
  %vm536 = vcmask 785408
  %v538 = vsel %vm536, %v192, 0
  %v541 = vsel %vm536, %v199, 0
  %543 = vmatprep.subr.bf16.mxu0 0
  %544 = vmatpush1.bf16.msra.mxu0 %v428
  %545 = vmatprep.subr.bf16.mxu0 0
  %546 = vmatpush1.bf16.msra.mxu0 %v429
  %547 = vmatprep.subr.bf16.mxu0 0
  %548 = vmatpush1.bf16.msra.mxu0 %v430
  %549 = vmatprep.subr.bf16.mxu0 0
  %550 = vmatpush1.bf16.msra.mxu0 %v431
  %551 = vmatprep.subr.bf16.mxu0 0
  %552 = vmatpush1.bf16.msra.mxu0 %v432
  %553 = vmatprep.subr.bf16.mxu0 0
  %554 = vmatpush1.bf16.msra.mxu0 %v433
  %555 = vmatprep.subr.bf16.mxu0 0
  %556 = vmatpush1.bf16.msra.mxu0 %v434
  %557 = vmatprep.subr.bf16.mxu0 0
  %558 = vmatpush1.bf16.msra.mxu0 %v435
  %559 = vmatprep.subr.bf16.mxu0 0
  %560 = vmatpush1.bf16.msra.mxu0 %v436
  %561 = vmatprep.subr.bf16.mxu0 0
  %562 = vmatpush1.bf16.msra.mxu0 %v437
  %563 = vmatprep.subr.bf16.mxu0 0
  %564 = vmatpush1.bf16.msra.mxu0 %v438
  %565 = vmatprep.subr.bf16.mxu0 0
  %566 = vmatpush1.bf16.msra.mxu0 %v439
  %567 = vmatprep.subr.bf16.mxu0 0
  %568 = vmatpush1.bf16.msra.mxu0 %v440
  %569 = vmatprep.subr.bf16.mxu0 0
  %570 = vmatpush1.bf16.msra.mxu0 %v441
  %571 = vmatprep.subr.bf16.mxu0 0
  %572 = vmatpush1.bf16.msra.mxu0 %v442
  %573 = vmatprep.subr.bf16.mxu0 0
  %574 = vmatpush1.bf16.msra.mxu0 %v443
  %575 = vmatprep.mubr.bf16.mxu0 %v187
  %576 = vmatmul.mubr.bf16.gmra.mrb[0].mxu0 %v186
  %v577 = vpop.f32.mrb[0].mxu0
  %v578 = vadd.f32 0.0, %v577
  %v579 = vpop.f32.mrb[0].mxu0
  %v580 = vpop.f32.mrb[0].mxu0
  %v581 = vadd.f32 0.0, %v580
  %v582 = vpop.f32.mrb[0].mxu0
  %583 = vmatprep.mubr.bf16.mxu0 %v194
  %584 = vmatmul.mubr.bf16.gmra.mrb[0].mxu0 %v193
  %v585 = vpop.f32.mrb[0].mxu0
  %v586 = vadd.f32 0.0, %v585
  %v587 = vpop.f32.mrb[0].mxu0
  %v588 = vpop.f32.mrb[0].mxu0
  %v589 = vadd.f32 0.0, %v588
  %v590 = vpop.f32.mrb[0].mxu0
  %591 = vdwg.mxu0
  %592 = vmatprep.subr.bf16.mxu0 0
  %593 = vmatpush1.bf16.msra.mxu0 %v444
  %594 = vmatprep.subr.bf16.mxu0 0
  %595 = vmatpush1.bf16.msra.mxu0 %v445
  %596 = vmatprep.subr.bf16.mxu0 0
  %597 = vmatpush1.bf16.msra.mxu0 %v446
  %598 = vmatprep.subr.bf16.mxu0 0
  %599 = vmatpush1.bf16.msra.mxu0 %v447
  %600 = vmatprep.subr.bf16.mxu0 0
  %601 = vmatpush1.bf16.msra.mxu0 %v448
  %602 = vmatprep.subr.bf16.mxu0 0
  %603 = vmatpush1.bf16.msra.mxu0 %v449
  %604 = vmatprep.subr.bf16.mxu0 0
  %605 = vmatpush1.bf16.msra.mxu0 %v450
  %606 = vmatprep.subr.bf16.mxu0 0
  %607 = vmatpush1.bf16.msra.mxu0 %v451
  %608 = vmatprep.subr.bf16.mxu0 0
  %609 = vmatpush1.bf16.msra.mxu0 %v452
  %610 = vmatprep.subr.bf16.mxu0 0
  %611 = vmatpush1.bf16.msra.mxu0 %v453
  %612 = vmatprep.subr.bf16.mxu0 0
  %613 = vmatpush1.bf16.msra.mxu0 %v454
  %614 = vmatprep.subr.bf16.mxu0 0
  %615 = vmatpush1.bf16.msra.mxu0 %v455
  %616 = vmatprep.subr.bf16.mxu0 0
  %617 = vmatpush1.bf16.msra.mxu0 %v456
  %618 = vmatprep.subr.bf16.mxu0 0
  %619 = vmatpush1.bf16.msra.mxu0 %v457
  %620 = vmatprep.subr.bf16.mxu0 0
  %621 = vmatpush1.bf16.msra.mxu0 %v458
  %622 = vmatprep.subr.bf16.mxu0 0
  %623 = vmatpush1.bf16.msra.mxu0 %v459
  %624 = vmatprep.mubr.bf16.mxu0 %v189
  %625 = vmatmul.mubr.bf16.gmra.mrb[0].mxu0 %v188
  %v626 = vpop.f32.mrb[0].mxu0
  %v627 = vadd.f32 %v578, %v626
  %v628 = vpop.f32.mrb[0].mxu0
  %v629 = vpop.f32.mrb[0].mxu0
  %v630 = vadd.f32 %v581, %v629
  %v631 = vpop.f32.mrb[0].mxu0
  %632 = vmatprep.mubr.bf16.mxu0 %v196
  %633 = vmatmul.mubr.bf16.gmra.mrb[0].mxu0 %v195
  %v634 = vpop.f32.mrb[0].mxu0
  %v635 = vadd.f32 %v586, %v634
  %v636 = vpop.f32.mrb[0].mxu0
  %v637 = vpop.f32.mrb[0].mxu0
  %v638 = vadd.f32 %v589, %v637
  %v639 = vpop.f32.mrb[0].mxu0
  %640 = vdwg.mxu0
  %641 = vmatprep.subr.bf16.mxu0 0
  %642 = vmatpush1.bf16.msra.mxu0 %v460
  %643 = vmatprep.subr.bf16.mxu0 0
  %644 = vmatpush1.bf16.msra.mxu0 %v461
  %645 = vmatprep.subr.bf16.mxu0 0
  %646 = vmatpush1.bf16.msra.mxu0 %v462
  %647 = vmatprep.subr.bf16.mxu0 0
  %648 = vmatpush1.bf16.msra.mxu0 %v463
  %649 = vmatprep.subr.bf16.mxu0 0
  %650 = vmatpush1.bf16.msra.mxu0 %v464
  %651 = vmatprep.subr.bf16.mxu0 0
  %652 = vmatpush1.bf16.msra.mxu0 %v465
  %653 = vmatprep.subr.bf16.mxu0 0
  %654 = vmatpush1.bf16.msra.mxu0 %v466
  %655 = vmatprep.subr.bf16.mxu0 0
  %656 = vmatpush1.bf16.msra.mxu0 %v467
  %657 = vmatprep.subr.bf16.mxu0 0
  %658 = vmatpush1.bf16.msra.mxu0 %v468
  %659 = vmatprep.subr.bf16.mxu0 0
  %660 = vmatpush1.bf16.msra.mxu0 %v469
  %661 = vmatprep.subr.bf16.mxu0 0
  %662 = vmatpush1.bf16.msra.mxu0 %v470
  %663 = vmatprep.subr.bf16.mxu0 0
  %664 = vmatpush1.bf16.msra.mxu0 %v471
  %665 = vmatprep.subr.bf16.mxu0 0
  %666 = vmatpush1.bf16.msra.mxu0 %v472
  %667 = vmatprep.subr.bf16.mxu0 0
  %668 = vmatpush1.bf16.msra.mxu0 %v473
  %669 = vmatprep.subr.bf16.mxu0 0
  %670 = vmatpush1.bf16.msra.mxu0 %v474
  %671 = vmatprep.subr.bf16.mxu0 0
  %672 = vmatpush1.bf16.msra.mxu0 %v475
  %673 = vmatprep.mubr.bf16.mxu0 %v191
  %674 = vmatmul.mubr.bf16.gmra.mrb[0].mxu0 %v190
  %v675 = vpop.f32.mrb[0].mxu0
  %v676 = vadd.f32 %v627, %v675
  %v677 = vpop.f32.mrb[0].mxu0
  %v678 = vpop.f32.mrb[0].mxu0
  %v679 = vadd.f32 %v630, %v678
  %v680 = vpop.f32.mrb[0].mxu0
  %681 = vmatprep.mubr.bf16.mxu0 %v198
  %682 = vmatmul.mubr.bf16.gmra.mrb[0].mxu0 %v197
  %v683 = vpop.f32.mrb[0].mxu0
  %v684 = vadd.f32 %v635, %v683
  %v685 = vpop.f32.mrb[0].mxu0
  %v686 = vpop.f32.mrb[0].mxu0
  %v687 = vadd.f32 %v638, %v686
  %v688 = vpop.f32.mrb[0].mxu0
  %689 = vdwg.mxu0
  %690 = vmatprep.subr.bf16.mxu0 0
  %691 = vmatpush1.bf16.msra.mxu0 %v476
  %692 = vmatprep.subr.bf16.mxu0 0
  %693 = vmatpush1.bf16.msra.mxu0 %v477
  %694 = vmatprep.subr.bf16.mxu0 0
  %695 = vmatpush1.bf16.msra.mxu0 %v478
  %696 = vmatprep.subr.bf16.mxu0 0
  %697 = vmatpush1.bf16.msra.mxu0 %v479
  %698 = vmatprep.subr.bf16.mxu0 0
  %699 = vmatpush1.bf16.msra.mxu0 %v480
  %700 = vmatprep.subr.bf16.mxu0 0
  %701 = vmatpush1.bf16.msra.mxu0 %v481
  %702 = vmatprep.subr.bf16.mxu0 0
  %703 = vmatpush1.bf16.msra.mxu0 0
  %704 = vmatprep.subr.bf16.mxu0 0
  %705 = vmatpush1.bf16.msra.mxu0 0
  %706 = vmatprep.subr.bf16.mxu0 0
  %707 = vmatpush1.bf16.msra.mxu0 0
  %708 = vmatprep.subr.bf16.mxu0 0
  %709 = vmatpush1.bf16.msra.mxu0 0
  %710 = vmatprep.subr.bf16.mxu0 0
  %711 = vmatpush1.bf16.msra.mxu0 0
  %712 = vmatprep.subr.bf16.mxu0 0
  %713 = vmatpush1.bf16.msra.mxu0 0
  %714 = vmatprep.subr.bf16.mxu0 0
  %715 = vmatpush1.bf16.msra.mxu0 0
  %716 = vmatprep.subr.bf16.mxu0 0
  %717 = vmatpush1.bf16.msra.mxu0 0
  %718 = vmatprep.subr.bf16.mxu0 0
  %719 = vmatpush1.bf16.msra.mxu0 0
  %720 = vmatprep.subr.bf16.mxu0 0
  %721 = vmatpush1.bf16.msra.mxu0 0
  %722 = vmatprep.mubr.bf16.mxu0 0
  %723 = vmatmul.mubr.bf16.gmra.mrb[0].mxu0 %v538
  %v724 = vpop.f32.mrb[0].mxu0
  %v725 = vadd.f32 %v676, %v724
  %v726 = vpop.f32.mrb[0].mxu0
  %v727 = vpop.f32.mrb[0].mxu0
  %v728 = vadd.f32 %v679, %v727
  %v729 = vpop.f32.mrb[0].mxu0
  %730 = vmatprep.mubr.bf16.mxu0 0
  %731 = vmatmul.mubr.bf16.gmra.mrb[0].mxu0 %v541
  %v732 = vpop.f32.mrb[0].mxu0
  %v733 = vadd.f32 %v684, %v732
  %v734 = vpop.f32.mrb[0].mxu0
  %v735 = vpop.f32.mrb[0].mxu0
  %v736 = vadd.f32 %v687, %v735
  %v737 = vpop.f32.mrb[0].mxu0
  %738 = vdwg.mxu0
  %v739 = vld [vmem:[%s1] sm:$0xff]
  %v740 = vld [vmem:[%s1 + $0x8] sm:$0xff]
  %v741 = vld [vmem:[%s1 + $0x10] sm:$0xff]
  %v742 = vld [vmem:[%s1 + $0x18] sm:$0xff]
  %744 = vset.pattern.permute.xlu0 0
  %745 = vperm.xlu0 %744, %v739
  %v746 = vpop.permute.xlu0 %745
  %749 = vset.pattern.permute.xlu0 0
  %750 = vperm.xlu0 %749, %v740
  %v751 = vpop.permute.xlu0 %750
  %754 = vset.pattern.permute.xlu0 0
  %755 = vperm.xlu0 %754, %v741
  %v756 = vpop.permute.xlu0 %755
  %759 = vset.pattern.permute.xlu0 0
  %760 = vperm.xlu0 %759, %v742
  %v761 = vpop.permute.xlu0 %760
  %v763 = vmul.f32 %v725, %v746
  %v764 = vmul.f32 %v728, %v751
  %v765 = vmul.f32 %v733, %v756
  %v766 = vmul.f32 %v736, %v761
  %v767 = vld [vmem:[%s2] sm:$0xff]
  %v768 = vld [vmem:[%s2 + $0x8] sm:$0xff]
  %v769 = vld [vmem:[%s2 + $0x10] sm:$0xff]
  %v770 = vld [vmem:[%s2 + $0x18] sm:$0xff]
  %772 = vset.pattern.permute.xlu0 0
  %773 = vperm.xlu0 %772, %v767
  %v774 = vpop.permute.xlu0 %773
  %777 = vset.pattern.permute.xlu0 0
  %778 = vperm.xlu0 %777, %v768
  %v779 = vpop.permute.xlu0 %778
  %782 = vset.pattern.permute.xlu0 0
  %783 = vperm.xlu0 %782, %v769
  %v784 = vpop.permute.xlu0 %783
  %787 = vset.pattern.permute.xlu0 0
  %788 = vperm.xlu0 %787, %v770
  %v789 = vpop.permute.xlu0 %788
  %v791 = vadd.f32 %v763, %v774
  %v792 = vadd.f32 %v764, %v779
  %v793 = vadd.f32 %v765, %v784
  %v794 = vadd.f32 %v766, %v789
  %v795 = vmax.f32 %v791, 0.0
  %v796 = vmax.f32 %v792, 0.0
  %v797 = vmax.f32 %v793, 0.0
  %v798 = vmax.f32 %v794, 0.0
  %799 = vst [vmem:[%s4] sm:$0xff] %v795
  %800 = vst [vmem:[%s4 + $0x8] sm:$0xff] %v796
  %801 = vst [vmem:[%s4 + $0x10] sm:$0xff] %v797
  %802 = vst [vmem:[%s4 + $0x18] sm:$0xff] %v798
  // Predicated region
  $region18: #{_lambda_.30} parent=0 // pred_check
    _
  $region19: #{_lambda_.30} parent=0 // pred_check_branch
    %804 = sbr.rel (0) target = $region21
  $region20: #{_lambda_.30} parent=0 // pred_region
    _
  $region21: #{_lambda_.30} parent=0 // pred_fallthru
    _
  // Predicated region
  $region22: #{_lambda_.30} parent=0 // pred_check
    _
  $region23: #{_lambda_.30} parent=0 // pred_check_branch
    %806 = sbr.rel (0) target = $region25
  $region24: #{_lambda_.30} parent=0 // pred_region
    _
  $region25: #{_lambda_.30} parent=0 // pred_fallthru
    _

</llo_original>
